<compile_context>
chip_gen: v7x
topology: tpu7x:2x2x1
jax: 0.10.0
libtpu: 0.0.40
codegen_flags: <defaults>
</compile_context>

<pallas_src>
import functools

import jax
import jax.numpy as jnp
from jax.experimental import pallas as pl
from jax.experimental.pallas import tpu as pltpu


# ----------------------------------------------------------------------------
# Pallas kernel: the forward hot path (one batch tile, (feature, batch) layout)
# ----------------------------------------------------------------------------
def _ren_forward_kernel(
    u_ref, x0_ref,
    c1g_ref, d12g_ref, g_ref,
    fp_ref, b1p_ref, b2p_ref,
    c2_ref, d21_ref, d22_ref,
    y_ref, xnew_ref,
    *, dim_nl,
):
    f32 = jnp.float32
    u = u_ref[...]        # (dim_in,       Bt)  batch on lanes
    x = x0_ref[...]       # (dim_internal, Bt)
    G = g_ref[...]        # (2*dim_nl, dim_nl) = [D11/Lambda ; I], strictly lower in top block

    # vw = [v ; w] with v = (C1 x + D12 u) / Lambda (w contribution added below),
    # built directly by two matmuls against zero-padded weights (no in-kernel concat).
    vw = (jnp.dot(c1g_ref[...], x, preferred_element_type=f32)
          + jnp.dot(d12g_ref[...], u, preferred_element_type=f32))   # (2*dim_nl, Bt)

    # Forward substitution through the strictly-lower-triangular nonlinear block:
    #   w_i = tanh(v_i);   vw += G[:, i] * w_i
    # (rows <= i of G's top block are zero, so already-consumed v rows are untouched;
    #  the identity bottom block writes w_i into row dim_nl + i).
    # Serial chain per step is: row-slice -> tanh (EUP) -> rank-1 FMA (VPU).
    # TODO(synk): for large dim_nl, block this substitution (diagonal blocks serial,
    #             off-diagonal D11 blocks as MXU matmuls) instead of full static unroll.
    for i in range(dim_nl):
        t_i = jnp.tanh(vw[i:i + 1, :])          # (1, Bt), lane-dense
        vw = vw + G[:, i:i + 1] * t_i           # rank-1 update, pure VALU

    w = vw[dim_nl:, :]                          # (dim_nl, Bt), aligned sublane slice

    # State update with E^{-1} pre-folded:  x+ = (E^{-1}F) x + (E^{-1}B1) w + (E^{-1}B2) u
    x_new = (jnp.dot(fp_ref[...], x, preferred_element_type=f32)
             + jnp.dot(b1p_ref[...], w, preferred_element_type=f32)
             + jnp.dot(b2p_ref[...], u, preferred_element_type=f32))  # (dim_internal, Bt)

    # Output:  y = C2 x+ + D21 w + D22 u
    y = (jnp.dot(c2_ref[...], x_new, preferred_element_type=f32)
         + jnp.dot(d21_ref[...], w, preferred_element_type=f32)
         + jnp.dot(d22_ref[...], u, preferred_element_type=f32))      # (dim_out, Bt)

    y_ref[...] = y.astype(y_ref.dtype)
    xnew_ref[...] = x_new.astype(xnew_ref.dtype)


def ren_forward_pallas(u2d, x0, model, dims, *, batch_block=128):
    """u2d: (B, dim_in) f32, x0: (dim_internal,) f32 (shared initial state)."""
    dim_in, dim_out, dim_internal, dim_nl = dims
    B = u2d.shape[0]

    # Batch tile: multiple of 128 (v5e MXU width); 256 is preferable on v6e/v7x
    # when the batch is large.  Per-tile VMEM footprint here is a few KiB, far
    # below even v7x's 64 MiB budget.
    bt = batch_block
    n_tiles = -(-B // bt)
    Bpad = n_tiles * bt

    # (feature, batch) layout: batch maps to the lane axis.
    u_t = jnp.zeros((dim_in, Bpad), jnp.float32).at[:, :B].set(u2d.T)
    # Initial state is shared across the batch -> broadcast once to one tile and
    # keep it resident (constant index map) instead of re-DMAing per grid step.
    x0_t = jnp.broadcast_to(x0.reshape(dim_internal, 1),
                            (dim_internal, bt)).astype(jnp.float32)

    weights = (model["C1g"], model["D12g"], model["G"],
               model["Fp"], model["B1p"], model["B2p"],
               model["C2"], model["D21"], model["D22"])

    def resident(shape):
        nd = len(shape)
        return pl.BlockSpec(shape, lambda i, _nd=nd: (0,) * _nd)

    in_specs = [pl.BlockSpec((dim_in, bt), lambda i: (0, i)),   # u tile
                resident((dim_internal, bt))]                   # x0 (resident)
    in_specs += [resident(w.shape) for w in weights]            # weights (resident)

    out_specs = (pl.BlockSpec((dim_out, bt), lambda i: (0, i)),
                 pl.BlockSpec((dim_internal, bt), lambda i: (0, i)))
    out_shape = (jax.ShapeDtypeStruct((dim_out, Bpad), jnp.float32),
                 jax.ShapeDtypeStruct((dim_internal, Bpad), jnp.float32))

    kernel = functools.partial(_ren_forward_kernel, dim_nl=dim_nl)
    y_t, xnew_t = pl.pallas_call(
        kernel,
        grid=(n_tiles,),
        in_specs=in_specs,
        out_specs=out_specs,
        out_shape=out_shape,
        compiler_params=pltpu.CompilerParams(
            dimension_semantics=("parallel",)),   # batch tiles independent -> megacore
    )(u_t, x0_t, *weights)

    # Back to (batch, feature) and drop batch padding.
    return y_t[:, :B].T, xnew_t[:, :B].T


# ----------------------------------------------------------------------------
# Parameter setup (plain JAX glue, mirrors REN.__init__ / _update_model_param)
# ----------------------------------------------------------------------------
def init_trainable_params(key, dim_in, dim_out, dim_internal, dim_nl,
                          initialization_std=0.5):
    shapes = {
        "X":   (2 * dim_internal + dim_nl, 2 * dim_internal + dim_nl),
        "Y":   (dim_internal, dim_internal),
        "B2":  (dim_internal, dim_in),
        "C2":  (dim_out, dim_internal),
        "Z3":  (abs(dim_out - dim_in), min(dim_out, dim_in)),
        "X3":  (min(dim_out, dim_in), min(dim_out, dim_in)),
        "Y3":  (min(dim_out, dim_in), min(dim_out, dim_in)),
        "D12": (dim_nl, dim_in),
        "D21": (dim_out, dim_nl),
        "gamma": (1, 1),
    }
    params = {}
    keys = jax.random.split(key, len(shapes))
    for k, (name, shp) in zip(keys, shapes.items()):
        std = 3.0 if name == "gamma" else initialization_std
        params[name] = std * jax.random.normal(k, shp, dtype=jnp.float32)
    return params


def update_model_param(params, dim_in, dim_out, dim_internal, dim_nl,
                       epsilon=1e-3):
    """Replicates REN._update_model_param (mode='l2stable') and prepares the
    algebraically-folded weights consumed by the Pallas kernel."""
    f32 = jnp.float32
    gamma = jnp.abs(params["gamma"])                      # (1, 1)

    I_out = jnp.eye(dim_out, dtype=f32)
    I_in = jnp.eye(dim_in, dtype=f32)
    I_min = jnp.eye(min(dim_in, dim_out), dtype=f32)

    # _set_mode('l2stable')
    Q = -(1.0 / gamma) * I_out
    R = gamma * I_in
    S = jnp.zeros((dim_in, dim_out), f32)

    X3, Y3, Z3 = params["X3"], params["Y3"], params["Z3"]
    M = X3.T @ X3 + Y3 - Y3.T + Z3.T @ Z3 + epsilon * I_min

    if dim_out >= dim_in:
        inv_IM = jnp.linalg.inv(I_in + M)
        N = jnp.concatenate(((I_in - M) @ inv_IM, -2.0 * Z3 @ inv_IM), axis=0)
    else:
        inv_IM = jnp.linalg.inv(I_out + M)
        N = jnp.concatenate((inv_IM @ (I_out - M), -2.0 * inv_IM @ Z3.T), axis=1)

    Lq = jnp.linalg.cholesky(-Q).T
    Lr = jnp.linalg.cholesky(R - S @ jnp.linalg.inv(Q) @ S.T).T
    D22 = -jnp.linalg.inv(Q) @ S.T + jnp.linalg.inv(Lq) @ N @ Lr

    C2, D21, D12, B2, X, Y = (params["C2"], params["D21"], params["D12"],
                              params["B2"], params["X"], params["Y"])

    SD22 = S @ D22
    R_cal = R + SD22 + SD22.T + D22.T @ Q @ D22
    R_cal_inv = jnp.linalg.inv(R_cal)
    C2_cal = (D22.T @ Q + S) @ C2
    D21_cal = (D22.T @ Q + S) @ D21 - D12.T

    vec_r = jnp.concatenate((C2_cal.T, D21_cal.T, B2), axis=0)
    psi_r = vec_r @ R_cal_inv @ vec_r.T
    vec_q = jnp.concatenate((C2.T, D21.T,
                             jnp.zeros((dim_internal, dim_out), f32)), axis=0)
    psi_q = vec_q @ Q @ vec_q.T

    nH = 2 * dim_internal + dim_nl
    H = X.T @ X + epsilon * jnp.eye(nH, dtype=f32) + psi_r - psi_q

    di, dn = dim_internal, dim_nl
    H11 = H[:di, :di]
    H21 = H[di:di + dn, :di]
    H22 = H[di:di + dn, di:di + dn]
    H31 = H[di + dn:, :di]
    H32 = H[di + dn:, di:di + dn]
    H33 = H[di + dn:, di + dn:]

    P_cal = H33
    Fm = H31
    B1 = H32
    E = 0.5 * (H11 + P_cal + Y - Y.T)
    Lambda = 0.5 * jnp.diag(H22)                 # (dim_nl,)
    D11 = -jnp.tril(H22, k=-1)                   # strictly lower triangular
    C1 = -H21
    Einv = jnp.linalg.inv(E)

    # Raw (unfolded) parameters — used by the pure-JAX reference forward.
    raw = {"F": Fm, "B1": B1, "B2": B2, "Einv": Einv,
           "C1": C1, "D11": D11, "D12": D12, "Lambda": Lambda,
           "C2": C2, "D21": D21, "D22": D22}

    # Algebraic folds for the kernel:
    #   * 1/Lambda into C1/D11/D12 rows   -> no per-step divide in the kernel.
    #   * E^{-1}  into F/B1/B2            -> no E^{-T} matmul in the kernel.
    #   * zero-pad C1/Lambda, D12/Lambda and stack [D11/Lambda ; I] so the kernel
    #     maintains vw = [v ; w] with a single rank-1 update per step.
    lam_inv = (1.0 / Lambda).reshape(dim_nl, 1)
    C1s = lam_inv * C1
    D11s = lam_inv * D11
    D12s = lam_inv * D12
    model = {
        "C1g":  jnp.concatenate([C1s, jnp.zeros((dim_nl, dim_internal), f32)], axis=0),
        "D12g": jnp.concatenate([D12s, jnp.zeros((dim_nl, dim_in), f32)], axis=0),
        "G":    jnp.concatenate([D11s, jnp.eye(dim_nl, dtype=f32)], axis=0),
        "Fp":   Einv @ Fm,
        "B1p":  Einv @ B1,
        "B2p":  Einv @ B2,
        "C2":   C2, "D21": D21, "D22": D22,
    }
    # TODO(synk): optional bf16 cast of the matmul weights for v6e/v7x (keep the
    #             tanh chain in f32); kept f32 here for bit-closeness to the reference.
    return model, raw


def ren_forward(u, x_state, params, dims, batch_block=128):
    """u: (B, 1, dim_in), x_state: (1, 1, dim_internal).  Returns (y, x_new)."""
    dim_in, dim_out, dim_internal, dim_nl = dims
    model, _ = update_model_param(params, dim_in, dim_out, dim_internal, dim_nl)
    B = u.shape[0]
    u2d = u.reshape(B, dim_in).astype(jnp.float32)
    x0 = x_state.reshape(dim_internal).astype(jnp.float32)
    y2d, xnew2d = ren_forward_pallas(u2d, x0, model, dims,
                                     batch_block=batch_block)
    return y2d.reshape(B, 1, dim_out), xnew2d.reshape(B, 1, dim_internal)


# ----------------------------------------------------------------------------
# Pure-JAX reference (mirrors the PyTorch forward exactly, incl. /Lambda, E^{-1})
# ----------------------------------------------------------------------------
def ren_forward_reference(u2d, x0, raw):
    B = u2d.shape[0]
    dim_nl = raw["C1"].shape[0]
    dim_internal = raw["F"].shape[0]
    x = jnp.broadcast_to(x0.reshape(1, dim_internal), (B, dim_internal))
    w = jnp.zeros((B, dim_nl), jnp.float32)
    for i in range(dim_nl):
        v = x @ raw["C1"][i, :] + w @ raw["D11"][i, :] + u2d @ raw["D12"][i, :]
        w = w.at[:, i].set(jnp.tanh(v / raw["Lambda"][i]))
    x_new = (x @ raw["F"].T + w @ raw["B1"].T + u2d @ raw["B2"].T) @ raw["Einv"].T
    y = x_new @ raw["C2"].T + w @ raw["D21"].T + u2d @ raw["D22"].T
    return y, x_new


# ----------------------------------------------------------------------------
if __name__ == "__main__":
    jax.config.update("jax_default_matmul_precision", "highest")

    # Small shapes consistent with the module; batch chosen so the batch-tiled
    # grid has 2 parallel steps (exercises pipelining / v7x megacore).
    dim_in, dim_out, dim_internal, dim_nl = 4, 6, 8, 8
    batch = 256
    dims = (dim_in, dim_out, dim_internal, dim_nl)

    key = jax.random.PRNGKey(0)
    k_params, k_u = jax.random.split(key)
    params = init_trainable_params(k_params, dim_in, dim_out, dim_internal,
                                   dim_nl, initialization_std=0.5)

    u = jax.random.normal(k_u, (batch, 1, dim_in), dtype=jnp.float32)
    x_state = jnp.zeros((1, 1, dim_internal), dtype=jnp.float32)  # init_x

    y, x_new = ren_forward(u, x_state, params, dims, batch_block=128)
    y = jax.block_until_ready(y)
    x_new = jax.block_until_ready(x_new)

    assert y.shape == (batch, 1, dim_out)
    assert x_new.shape == (batch, 1, dim_internal)
    assert bool(jnp.all(jnp.isfinite(y))) and bool(jnp.all(jnp.isfinite(x_new)))

    # Validate the folded Pallas kernel against the unfolded pure-JAX reference.
    _, raw = update_model_param(params, *dims)
    y_ref, x_ref = ren_forward_reference(u.reshape(batch, dim_in),
                                         x_state.reshape(dim_internal), raw)
    assert bool(jnp.allclose(y.reshape(batch, dim_out), y_ref,
                             rtol=3e-3, atol=3e-3)), "y mismatch vs reference"
    assert bool(jnp.allclose(x_new.reshape(batch, dim_internal), x_ref,
                             rtol=3e-3, atol=3e-3)), "x_new mismatch vs reference"

    print("KERNEL_OK")
</pallas_src>

<mosaic_0001>
module attributes {stable_mosaic.version = 11 : i64} {
  func.func @_ren_forward_kernel(%arg0: i32, %arg1: memref<4x128xf32, #tpu.memory_space<vmem>>, %arg2: memref<8x128xf32, #tpu.memory_space<vmem>>, %arg3: memref<16x8xf32, #tpu.memory_space<vmem>>, %arg4: memref<16x4xf32, #tpu.memory_space<vmem>>, %arg5: memref<16x8xf32, #tpu.memory_space<vmem>>, %arg6: memref<8x8xf32, #tpu.memory_space<vmem>>, %arg7: memref<8x8xf32, #tpu.memory_space<vmem>>, %arg8: memref<8x4xf32, #tpu.memory_space<vmem>>, %arg9: memref<6x8xf32, #tpu.memory_space<vmem>>, %arg10: memref<6x8xf32, #tpu.memory_space<vmem>>, %arg11: memref<6x4xf32, #tpu.memory_space<vmem>>, %arg12: memref<6x128xf32, #tpu.memory_space<vmem>>, %arg13: memref<8x128xf32, #tpu.memory_space<vmem>>) attributes {dimension_semantics = [#tpu.dimension_semantics<parallel>], iteration_bounds = array<i64: 2>, scalar_prefetch = 0 : i64, scratch_operands = 0 : i64, tpu.core_type = #tpu.core_type<tc>, window_params = [{transform_indices = @transform_0, window_bounds = array<i64: 4, 128>}, {pipeline_mode = #tpu.pipeline_mode<synchronous>, transform_indices = @transform_1, window_bounds = array<i64: 8, 128>}, {pipeline_mode = #tpu.pipeline_mode<synchronous>, transform_indices = @transform_2, window_bounds = array<i64: 16, 8>}, {pipeline_mode = #tpu.pipeline_mode<synchronous>, transform_indices = @transform_3, window_bounds = array<i64: 16, 4>}, {pipeline_mode = #tpu.pipeline_mode<synchronous>, transform_indices = @transform_4, window_bounds = array<i64: 16, 8>}, {pipeline_mode = #tpu.pipeline_mode<synchronous>, transform_indices = @transform_5, window_bounds = array<i64: 8, 8>}, {pipeline_mode = #tpu.pipeline_mode<synchronous>, transform_indices = @transform_6, window_bounds = array<i64: 8, 8>}, {pipeline_mode = #tpu.pipeline_mode<synchronous>, transform_indices = @transform_7, window_bounds = array<i64: 8, 4>}, {pipeline_mode = #tpu.pipeline_mode<synchronous>, transform_indices = @transform_8, window_bounds = array<i64: 6, 8>}, {pipeline_mode = #tpu.pipeline_mode<synchronous>, transform_indices = @transform_9, window_bounds = array<i64: 6, 8>}, {pipeline_mode = #tpu.pipeline_mode<synchronous>, transform_indices = @transform_10, window_bounds = array<i64: 6, 4>}, {transform_indices = @transform_11, window_bounds = array<i64: 6, 128>}, {transform_indices = @transform_12, window_bounds = array<i64: 8, 128>}]} {
    %c0 = arith.constant 0 : index
    %c0_0 = arith.constant 0 : index
    %0 = vector.load %arg1[%c0, %c0_0] : memref<4x128xf32, #tpu.memory_space<vmem>>, vector<4x128xf32>
    %c0_1 = arith.constant 0 : index
    %c0_2 = arith.constant 0 : index
    %1 = vector.load %arg2[%c0_1, %c0_2] : memref<8x128xf32, #tpu.memory_space<vmem>>, vector<8x128xf32>
    %c0_3 = arith.constant 0 : index
    %c0_4 = arith.constant 0 : index
    %2 = vector.load %arg5[%c0_3, %c0_4] : memref<16x8xf32, #tpu.memory_space<vmem>>, vector<16x8xf32>
    %c0_5 = arith.constant 0 : index
    %c0_6 = arith.constant 0 : index
    %3 = vector.load %arg3[%c0_5, %c0_6] : memref<16x8xf32, #tpu.memory_space<vmem>>, vector<16x8xf32>
    %cst = arith.constant dense<0.000000e+00> : vector<16x128xf32>
    %4 = tpu.matmul %3, %1, %cst {dimension_numbers = #tpu.dot_dimension_numbers<[1], [0], [0], [1], [0, 0, 1, 1], [], []>, precision = #tpu.contract_precision<fp32>} : vector<16x8xf32>, vector<8x128xf32>, vector<16x128xf32> -> vector<16x128xf32>
    %c0_7 = arith.constant 0 : index
    %c0_8 = arith.constant 0 : index
    %5 = vector.load %arg4[%c0_7, %c0_8] : memref<16x4xf32, #tpu.memory_space<vmem>>, vector<16x4xf32>
    %cst_9 = arith.constant dense<0.000000e+00> : vector<16x128xf32>
    %6 = tpu.matmul %5, %0, %cst_9 {dimension_numbers = #tpu.dot_dimension_numbers<[1], [0], [0], [1], [0, 0, 1, 1], [], []>, precision = #tpu.contract_precision<fp32>} : vector<16x4xf32>, vector<4x128xf32>, vector<16x128xf32> -> vector<16x128xf32>
    %7 = arith.addf %4, %6 : vector<16x128xf32>
    %8 = vector.extract_strided_slice %7 {offsets = [0, 0], sizes = [1, 128], strides = [1, 1]} : vector<16x128xf32> to vector<1x128xf32>
    %9 = math.tanh %8 : vector<1x128xf32>
    %10 = vector.extract_strided_slice %2 {offsets = [0, 0], sizes = [16, 1], strides = [1, 1]} : vector<16x8xf32> to vector<16x1xf32>
    %11 = vector.broadcast %10 : vector<16x1xf32> to vector<16x128xf32>
    %12 = vector.broadcast %9 : vector<1x128xf32> to vector<16x128xf32>
    %13 = arith.mulf %11, %12 : vector<16x128xf32>
    %14 = arith.addf %7, %13 : vector<16x128xf32>
    %15 = vector.extract_strided_slice %14 {offsets = [1, 0], sizes = [1, 128], strides = [1, 1]} : vector<16x128xf32> to vector<1x128xf32>
    %16 = math.tanh %15 : vector<1x128xf32>
    %17 = vector.extract_strided_slice %2 {offsets = [0, 1], sizes = [16, 1], strides = [1, 1]} : vector<16x8xf32> to vector<16x1xf32>
    %18 = vector.broadcast %17 : vector<16x1xf32> to vector<16x128xf32>
    %19 = vector.broadcast %16 : vector<1x128xf32> to vector<16x128xf32>
    %20 = arith.mulf %18, %19 : vector<16x128xf32>
    %21 = arith.addf %14, %20 : vector<16x128xf32>
    %22 = vector.extract_strided_slice %21 {offsets = [2, 0], sizes = [1, 128], strides = [1, 1]} : vector<16x128xf32> to vector<1x128xf32>
    %23 = math.tanh %22 : vector<1x128xf32>
    %24 = vector.extract_strided_slice %2 {offsets = [0, 2], sizes = [16, 1], strides = [1, 1]} : vector<16x8xf32> to vector<16x1xf32>
    %25 = vector.broadcast %24 : vector<16x1xf32> to vector<16x128xf32>
    %26 = vector.broadcast %23 : vector<1x128xf32> to vector<16x128xf32>
    %27 = arith.mulf %25, %26 : vector<16x128xf32>
    %28 = arith.addf %21, %27 : vector<16x128xf32>
    %29 = vector.extract_strided_slice %28 {offsets = [3, 0], sizes = [1, 128], strides = [1, 1]} : vector<16x128xf32> to vector<1x128xf32>
    %30 = math.tanh %29 : vector<1x128xf32>
    %31 = vector.extract_strided_slice %2 {offsets = [0, 3], sizes = [16, 1], strides = [1, 1]} : vector<16x8xf32> to vector<16x1xf32>
    %32 = vector.broadcast %31 : vector<16x1xf32> to vector<16x128xf32>
    %33 = vector.broadcast %30 : vector<1x128xf32> to vector<16x128xf32>
    %34 = arith.mulf %32, %33 : vector<16x128xf32>
    %35 = arith.addf %28, %34 : vector<16x128xf32>
    %36 = vector.extract_strided_slice %35 {offsets = [4, 0], sizes = [1, 128], strides = [1, 1]} : vector<16x128xf32> to vector<1x128xf32>
    %37 = math.tanh %36 : vector<1x128xf32>
    %38 = vector.extract_strided_slice %2 {offsets = [0, 4], sizes = [16, 1], strides = [1, 1]} : vector<16x8xf32> to vector<16x1xf32>
    %39 = vector.broadcast %38 : vector<16x1xf32> to vector<16x128xf32>
    %40 = vector.broadcast %37 : vector<1x128xf32> to vector<16x128xf32>
    %41 = arith.mulf %39, %40 : vector<16x128xf32>
    %42 = arith.addf %35, %41 : vector<16x128xf32>
    %43 = vector.extract_strided_slice %42 {offsets = [5, 0], sizes = [1, 128], strides = [1, 1]} : vector<16x128xf32> to vector<1x128xf32>
    %44 = math.tanh %43 : vector<1x128xf32>
    %45 = vector.extract_strided_slice %2 {offsets = [0, 5], sizes = [16, 1], strides = [1, 1]} : vector<16x8xf32> to vector<16x1xf32>
    %46 = vector.broadcast %45 : vector<16x1xf32> to vector<16x128xf32>
    %47 = vector.broadcast %44 : vector<1x128xf32> to vector<16x128xf32>
    %48 = arith.mulf %46, %47 : vector<16x128xf32>
    %49 = arith.addf %42, %48 : vector<16x128xf32>
    %50 = vector.extract_strided_slice %49 {offsets = [6, 0], sizes = [1, 128], strides = [1, 1]} : vector<16x128xf32> to vector<1x128xf32>
    %51 = math.tanh %50 : vector<1x128xf32>
    %52 = vector.extract_strided_slice %2 {offsets = [0, 6], sizes = [16, 1], strides = [1, 1]} : vector<16x8xf32> to vector<16x1xf32>
    %53 = vector.broadcast %52 : vector<16x1xf32> to vector<16x128xf32>
    %54 = vector.broadcast %51 : vector<1x128xf32> to vector<16x128xf32>
    %55 = arith.mulf %53, %54 : vector<16x128xf32>
    %56 = arith.addf %49, %55 : vector<16x128xf32>
    %57 = vector.extract_strided_slice %56 {offsets = [7, 0], sizes = [1, 128], strides = [1, 1]} : vector<16x128xf32> to vector<1x128xf32>
    %58 = math.tanh %57 : vector<1x128xf32>
    %59 = vector.extract_strided_slice %2 {offsets = [0, 7], sizes = [16, 1], strides = [1, 1]} : vector<16x8xf32> to vector<16x1xf32>
    %60 = vector.broadcast %59 : vector<16x1xf32> to vector<16x128xf32>
    %61 = vector.broadcast %58 : vector<1x128xf32> to vector<16x128xf32>
    %62 = arith.mulf %60, %61 : vector<16x128xf32>
    %63 = arith.addf %56, %62 : vector<16x128xf32>
    %64 = vector.extract_strided_slice %63 {offsets = [8, 0], sizes = [8, 128], strides = [1, 1]} : vector<16x128xf32> to vector<8x128xf32>
    %c0_10 = arith.constant 0 : index
    %c0_11 = arith.constant 0 : index
    %65 = vector.load %arg6[%c0_10, %c0_11] : memref<8x8xf32, #tpu.memory_space<vmem>>, vector<8x8xf32>
    %cst_12 = arith.constant dense<0.000000e+00> : vector<8x128xf32>
    %66 = tpu.matmul %65, %1, %cst_12 {dimension_numbers = #tpu.dot_dimension_numbers<[1], [0], [0], [1], [0, 0, 1, 1], [], []>, precision = #tpu.contract_precision<fp32>} : vector<8x8xf32>, vector<8x128xf32>, vector<8x128xf32> -> vector<8x128xf32>
    %c0_13 = arith.constant 0 : index
    %c0_14 = arith.constant 0 : index
    %67 = vector.load %arg7[%c0_13, %c0_14] : memref<8x8xf32, #tpu.memory_space<vmem>>, vector<8x8xf32>
    %cst_15 = arith.constant dense<0.000000e+00> : vector<8x128xf32>
    %68 = tpu.matmul %67, %64, %cst_15 {dimension_numbers = #tpu.dot_dimension_numbers<[1], [0], [0], [1], [0, 0, 1, 1], [], []>, precision = #tpu.contract_precision<fp32>} : vector<8x8xf32>, vector<8x128xf32>, vector<8x128xf32> -> vector<8x128xf32>
    %69 = arith.addf %66, %68 : vector<8x128xf32>
    %c0_16 = arith.constant 0 : index
    %c0_17 = arith.constant 0 : index
    %70 = vector.load %arg8[%c0_16, %c0_17] : memref<8x4xf32, #tpu.memory_space<vmem>>, vector<8x4xf32>
    %cst_18 = arith.constant dense<0.000000e+00> : vector<8x128xf32>
    %71 = tpu.matmul %70, %0, %cst_18 {dimension_numbers = #tpu.dot_dimension_numbers<[1], [0], [0], [1], [0, 0, 1, 1], [], []>, precision = #tpu.contract_precision<fp32>} : vector<8x4xf32>, vector<4x128xf32>, vector<8x128xf32> -> vector<8x128xf32>
    %72 = arith.addf %69, %71 : vector<8x128xf32>
    %c0_19 = arith.constant 0 : index
    %c0_20 = arith.constant 0 : index
    %73 = vector.load %arg9[%c0_19, %c0_20] : memref<6x8xf32, #tpu.memory_space<vmem>>, vector<6x8xf32>
    %cst_21 = arith.constant dense<0.000000e+00> : vector<6x128xf32>
    %74 = tpu.matmul %73, %72, %cst_21 {dimension_numbers = #tpu.dot_dimension_numbers<[1], [0], [0], [1], [0, 0, 1, 1], [], []>, precision = #tpu.contract_precision<fp32>} : vector<6x8xf32>, vector<8x128xf32>, vector<6x128xf32> -> vector<6x128xf32>
    %c0_22 = arith.constant 0 : index
    %c0_23 = arith.constant 0 : index
    %75 = vector.load %arg10[%c0_22, %c0_23] : memref<6x8xf32, #tpu.memory_space<vmem>>, vector<6x8xf32>
    %cst_24 = arith.constant dense<0.000000e+00> : vector<6x128xf32>
    %76 = tpu.matmul %75, %64, %cst_24 {dimension_numbers = #tpu.dot_dimension_numbers<[1], [0], [0], [1], [0, 0, 1, 1], [], []>, precision = #tpu.contract_precision<fp32>} : vector<6x8xf32>, vector<8x128xf32>, vector<6x128xf32> -> vector<6x128xf32>
    %77 = arith.addf %74, %76 : vector<6x128xf32>
    %c0_25 = arith.constant 0 : index
    %c0_26 = arith.constant 0 : index
    %78 = vector.load %arg11[%c0_25, %c0_26] : memref<6x4xf32, #tpu.memory_space<vmem>>, vector<6x4xf32>
    %cst_27 = arith.constant dense<0.000000e+00> : vector<6x128xf32>
    %79 = tpu.matmul %78, %0, %cst_27 {dimension_numbers = #tpu.dot_dimension_numbers<[1], [0], [0], [1], [0, 0, 1, 1], [], []>, precision = #tpu.contract_precision<fp32>} : vector<6x4xf32>, vector<4x128xf32>, vector<6x128xf32> -> vector<6x128xf32>
    %80 = arith.addf %77, %79 : vector<6x128xf32>
    %c0_28 = arith.constant 0 : index
    %c0_29 = arith.constant 0 : index
    %81 = vector.load %arg12[%c0_28, %c0_29] : memref<6x128xf32, #tpu.memory_space<vmem>>, vector<6x128xf32>
    tpu.vector_store %arg12[%c0_28, %c0_29], %80 {strides = array<i32>} : memref<6x128xf32, #tpu.memory_space<vmem>>, vector<6x128xf32>,
    %c0_30 = arith.constant 0 : index
    %c0_31 = arith.constant 0 : index
    %82 = vector.load %arg13[%c0_30, %c0_31] : memref<8x128xf32, #tpu.memory_space<vmem>>, vector<8x128xf32>
    tpu.vector_store %arg13[%c0_30, %c0_31], %72 {strides = array<i32>} : memref<8x128xf32, #tpu.memory_space<vmem>>, vector<8x128xf32>,
    return
  }
  func.func @transform_0(%arg0: i32) -> (i32, i32) {
    %c0_i32 = arith.constant 0 : i32
    %c0_i32_0 = arith.constant 0 : i32
    return %c0_i32, %arg0 : i32, i32
  }
  func.func @transform_1(%arg0: i32) -> (i32, i32) {
    %c0_i32 = arith.constant 0 : i32
    %c0_i32_0 = arith.constant 0 : i32
    %c0_i32_1 = arith.constant 0 : i32
    return %c0_i32, %c0_i32_0 : i32, i32
  }
  func.func @transform_2(%arg0: i32) -> (i32, i32) {
    %c0_i32 = arith.constant 0 : i32
    %c0_i32_0 = arith.constant 0 : i32
    %c0_i32_1 = arith.constant 0 : i32
    return %c0_i32, %c0_i32_0 : i32, i32
  }
  func.func @transform_3(%arg0: i32) -> (i32, i32) {
    %c0_i32 = arith.constant 0 : i32
    %c0_i32_0 = arith.constant 0 : i32
    %c0_i32_1 = arith.constant 0 : i32
    return %c0_i32, %c0_i32_0 : i32, i32
  }
  func.func @transform_4(%arg0: i32) -> (i32, i32) {
    %c0_i32 = arith.constant 0 : i32
    %c0_i32_0 = arith.constant 0 : i32
    %c0_i32_1 = arith.constant 0 : i32
    return %c0_i32, %c0_i32_0 : i32, i32
  }
  func.func @transform_5(%arg0: i32) -> (i32, i32) {
    %c0_i32 = arith.constant 0 : i32
    %c0_i32_0 = arith.constant 0 : i32
    %c0_i32_1 = arith.constant 0 : i32
    return %c0_i32, %c0_i32_0 : i32, i32
  }
  func.func @transform_6(%arg0: i32) -> (i32, i32) {
    %c0_i32 = arith.constant 0 : i32
    %c0_i32_0 = arith.constant 0 : i32
    %c0_i32_1 = arith.constant 0 : i32
    return %c0_i32, %c0_i32_0 : i32, i32
  }
  func.func @transform_7(%arg0: i32) -> (i32, i32) {
    %c0_i32 = arith.constant 0 : i32
    %c0_i32_0 = arith.constant 0 : i32
    %c0_i32_1 = arith.constant 0 : i32
    return %c0_i32, %c0_i32_0 : i32, i32
  }
  func.func @transform_8(%arg0: i32) -> (i32, i32) {
    %c0_i32 = arith.constant 0 : i32
    %c0_i32_0 = arith.constant 0 : i32
    %c0_i32_1 = arith.constant 0 : i32
    return %c0_i32, %c0_i32_0 : i32, i32
  }
  func.func @transform_9(%arg0: i32) -> (i32, i32) {
    %c0_i32 = arith.constant 0 : i32
    %c0_i32_0 = arith.constant 0 : i32
    %c0_i32_1 = arith.constant 0 : i32
    return %c0_i32, %c0_i32_0 : i32, i32
  }
  func.func @transform_10(%arg0: i32) -> (i32, i32) {
    %c0_i32 = arith.constant 0 : i32
    %c0_i32_0 = arith.constant 0 : i32
    %c0_i32_1 = arith.constant 0 : i32
    return %c0_i32, %c0_i32_0 : i32, i32
  }
  func.func @transform_11(%arg0: i32) -> (i32, i32) {
    %c0_i32 = arith.constant 0 : i32
    %c0_i32_0 = arith.constant 0 : i32
    return %c0_i32, %arg0 : i32, i32
  }
  func.func @transform_12(%arg0: i32) -> (i32, i32) {
    %c0_i32 = arith.constant 0 : i32
    %c0_i32_0 = arith.constant 0 : i32
    return %c0_i32, %arg0 : i32, i32
  }
}

</mosaic_0001>

<llo_original>
// kernel: tpu_custom_call.1
$region0: #{tpu_custom_call.1}
  #allocation0 [shape = 'u32[]', space=smem, size = 0x4, offset = 0x4, fixed_abs, tag = 'smem constant byte address 0x4 - core index']
  #allocation1 [shape = 'u32[144,128]{1,0:T(1,128)}', space=vmem, size = 0x12000, scoped, tag = 'internal scratch']
  %s0 = inlined_call_operand.vmem [shape: f32[4,256], index: 0, kind: input, shape index: {}]
  %s1 = inlined_call_operand.vmem [shape: f32[8,128], index: 1, kind: input, shape index: {}]
  %s2 = inlined_call_operand.vmem [shape: f32[16,8], index: 2, kind: input, shape index: {}]
  %s3 = inlined_call_operand.vmem [shape: f32[16,4], index: 3, kind: input, shape index: {}]
  %s4 = inlined_call_operand.vmem [shape: f32[16,8], index: 4, kind: input, shape index: {}]
  %s5 = inlined_call_operand.vmem [shape: f32[8,8], index: 5, kind: input, shape index: {}]
  %s6 = inlined_call_operand.vmem [shape: f32[8,8], index: 6, kind: input, shape index: {}]
  %s7 = inlined_call_operand.vmem [shape: f32[8,4], index: 7, kind: input, shape index: {}]
  %s8 = inlined_call_operand.vmem [shape: f32[6,8], index: 8, kind: input, shape index: {}]
  %s9 = inlined_call_operand.vmem [shape: f32[6,8], index: 9, kind: input, shape index: {}]
  %s10 = inlined_call_operand.vmem [shape: f32[6,4], index: 10, kind: input, shape index: {}]
  %s11 = inlined_call_operand.hbm [shape: f32[6,256], index: 11, kind: output, shape index: {0}]
  %s12 = inlined_call_operand.hbm [shape: f32[8,256], index: 12, kind: output, shape index: {1}]
  %13 = xla_tuple %s11, %s12
  %s14 = sld [smem:[#allocation0]]
  $region85: #{tpu_custom_call.1} parent=0
    _
  %s16 = ssub.s32 1, %s14
  %s17 = scalar_select 0, %s16, %s14
  $region1: #{tpu_custom_call.1} parent=0
    #allocation2 [shape = 'u8[8192]{0}', space=vmem, size = 0x2000, scoped, tag = 'output window, operand 0']
    #allocation3 [shape = 's32[2]{0}', space=sflag, size = 0x8, scoped, tag = 'scoped memory for tpu_custom_call.1']
    #allocation4 [shape = 'u8[8192]{0}', space=vmem, size = 0x2000, scoped, tag = 'output window, operand 1']
    #allocation5 [shape = 's32[2]{0}', space=sflag, size = 0x8, scoped, tag = 'scoped memory for tpu_custom_call.1']
    %18 = vsyncpa [#allocation3], 0
    %s19 = scalar_lea.sflag [#allocation3], 1
    %20 = vsyncpa %s19, 0
    %21 = vsyncpa [#allocation5], 0
    %s22 = scalar_lea.sflag [#allocation5], 1
    %23 = vsyncpa %s22, 0
    loop: start=0, step=1, limit=4
    $region2: #{tpu_custom_call.1} parent=1 // loop_pre_header
      _
    $region3: #{tpu_custom_call.1} parent=1 // loop_header
      %s25 = sphi 0, %s29
      %p26 = scmp.ge.s32.totalorder %s25, 4
      %s35 = sphi 0, %s37
      %s38 = sphi 0, %s35
      %s39 = sphi 0, %s38
      %s55 = sphi 0, %s39
      %s59 = sphi 0, %s59
      %s61 = sphi 0, %s59
      %s62 = sphi 0, %s61
      %s76 = sphi 0, %s62
      %s80 = sphi 0, %s80
      %s82 = sphi 0, %s80
      %s83 = sphi 0, %s82
      %s97 = sphi 0, %s83
      %s101 = sphi 0, %s101
      %s103 = sphi 0, %s101
      %s104 = sphi 0, %s103
      %s118 = sphi 0, %s104
      %s122 = sphi 0, %s122
      %s124 = sphi 0, %s122
      %s125 = sphi 0, %s124
      %s139 = sphi 0, %s125
      %s143 = sphi 0, %s143
      %s145 = sphi 0, %s143
      %s146 = sphi 0, %s145
      %s160 = sphi 0, %s146
      %s164 = sphi 0, %s164
      %s166 = sphi 0, %s164
      %s167 = sphi 0, %s166
      %s181 = sphi 0, %s167
      %s185 = sphi 0, %s185
      %s187 = sphi 0, %s185
      %s188 = sphi 0, %s187
      %s202 = sphi 0, %s188
      %s206 = sphi 0, %s206
      %s208 = sphi 0, %s206
      %s209 = sphi 0, %s208
      %s223 = sphi 0, %s209
      %s227 = sphi 0, %s227
      %s229 = sphi 0, %s227
      %s230 = sphi 0, %s229
      %s244 = sphi 0, %s230
      %s248 = sphi 0, %s248
      %s250 = sphi 0, %s248
      %s251 = sphi 0, %s250
      %s265 = sphi 0, %s251
      %s271 = sphi 0, %s273
      %s274 = sphi 0, %s271
      %s275 = sphi 0, %s274
      %s291 = sphi 0, %s275
      %s297 = sphi 0, %s299
      %s300 = sphi 0, %s297
      %s301 = sphi 0, %s300
      %s317 = sphi 0, %s301
    $region4: #{tpu_custom_call.1} parent=1 // loop_header_branch
      %28 = sbr.rel (%p26) target = $region8
    $region5: #{tpu_custom_call.1} parent=1 // loop_body
      %s30 = ssub.s32 %s25, 1
      %s31 = ssub.s32 %s25, 2
      %s32 = sadd.s32 %s25, 1
      %s33 = ssub.s32 %s25, %s32
      %p34 = scmp.eq.s32.totalorder %s33, 0
      %s36 = sadd.s32 %s35, 1
      %s37 = scalar_select %p34, %s35, %s36
      %p40 = pneg %p34
      %p41 = scmp.eq.s32.totalorder %s25, 1
      %p42 = por %p40, %p41
      %p43 = scmp.ne.s32.totalorder %s35, %s38
      %p44 = scmp.eq.s32.totalorder %s25, 0
      %p45 = por %p43, %p44
      %p46 = scmp.ne.s32.totalorder %s35, %s38
      %p47 = scmp.eq.s32.totalorder %s30, 1
      %p48 = por %p46, %p47
      %p49 = scmp.ne.s32.totalorder %s38, %s39
      %p50 = scmp.eq.s32.totalorder %s30, 0
      %p51 = por %p49, %p50
      %p52 = scmp.ne.s32.totalorder %s38, %s39
      %p53 = scmp.eq.s32.totalorder %s31, 1
      %p54 = por %p52, %p53
      %p56 = scmp.ne.s32.totalorder %s39, %s55
      %p57 = scmp.eq.s32.totalorder %s31, 0
      %p58 = por %p56, %p57
      %s60 = sadd.s32 %s59, 1
      %p63 = scmp.eq.s32.totalorder %s25, 1
      %p64 = scmp.ne.s32.totalorder %s59, %s61
      %p65 = scmp.eq.s32.totalorder %s25, 0
      %p66 = por %p64, %p65
      %p67 = scmp.ne.s32.totalorder %s59, %s61
      %p68 = scmp.eq.s32.totalorder %s30, 1
      %p69 = por %p67, %p68
      %p70 = scmp.ne.s32.totalorder %s61, %s62
      %p71 = scmp.eq.s32.totalorder %s30, 0
      %p72 = por %p70, %p71
      %p73 = scmp.ne.s32.totalorder %s61, %s62
      %p74 = scmp.eq.s32.totalorder %s31, 1
      %p75 = por %p73, %p74
      %p77 = scmp.ne.s32.totalorder %s62, %s76
      %p78 = scmp.eq.s32.totalorder %s31, 0
      %p79 = por %p77, %p78
      %s81 = sadd.s32 %s80, 1
      %p84 = scmp.eq.s32.totalorder %s25, 1
      %p85 = scmp.ne.s32.totalorder %s80, %s82
      %p86 = scmp.eq.s32.totalorder %s25, 0
      %p87 = por %p85, %p86
      %p88 = scmp.ne.s32.totalorder %s80, %s82
      %p89 = scmp.eq.s32.totalorder %s30, 1
      %p90 = por %p88, %p89
      %p91 = scmp.ne.s32.totalorder %s82, %s83
      %p92 = scmp.eq.s32.totalorder %s30, 0
      %p93 = por %p91, %p92
      %p94 = scmp.ne.s32.totalorder %s82, %s83
      %p95 = scmp.eq.s32.totalorder %s31, 1
      %p96 = por %p94, %p95
      %p98 = scmp.ne.s32.totalorder %s83, %s97
      %p99 = scmp.eq.s32.totalorder %s31, 0
      %p100 = por %p98, %p99
      %s102 = sadd.s32 %s101, 1
      %p105 = scmp.eq.s32.totalorder %s25, 1
      %p106 = scmp.ne.s32.totalorder %s101, %s103
      %p107 = scmp.eq.s32.totalorder %s25, 0
      %p108 = por %p106, %p107
      %p109 = scmp.ne.s32.totalorder %s101, %s103
      %p110 = scmp.eq.s32.totalorder %s30, 1
      %p111 = por %p109, %p110
      %p112 = scmp.ne.s32.totalorder %s103, %s104
      %p113 = scmp.eq.s32.totalorder %s30, 0
      %p114 = por %p112, %p113
      %p115 = scmp.ne.s32.totalorder %s103, %s104
      %p116 = scmp.eq.s32.totalorder %s31, 1
      %p117 = por %p115, %p116
      %p119 = scmp.ne.s32.totalorder %s104, %s118
      %p120 = scmp.eq.s32.totalorder %s31, 0
      %p121 = por %p119, %p120
      %s123 = sadd.s32 %s122, 1
      %p126 = scmp.eq.s32.totalorder %s25, 1
      %p127 = scmp.ne.s32.totalorder %s122, %s124
      %p128 = scmp.eq.s32.totalorder %s25, 0
      %p129 = por %p127, %p128
      %p130 = scmp.ne.s32.totalorder %s122, %s124
      %p131 = scmp.eq.s32.totalorder %s30, 1
      %p132 = por %p130, %p131
      %p133 = scmp.ne.s32.totalorder %s124, %s125
      %p134 = scmp.eq.s32.totalorder %s30, 0
      %p135 = por %p133, %p134
      %p136 = scmp.ne.s32.totalorder %s124, %s125
      %p137 = scmp.eq.s32.totalorder %s31, 1
      %p138 = por %p136, %p137
      %p140 = scmp.ne.s32.totalorder %s125, %s139
      %p141 = scmp.eq.s32.totalorder %s31, 0
      %p142 = por %p140, %p141
      %s144 = sadd.s32 %s143, 1
      %p147 = scmp.eq.s32.totalorder %s25, 1
      %p148 = scmp.ne.s32.totalorder %s143, %s145
      %p149 = scmp.eq.s32.totalorder %s25, 0
      %p150 = por %p148, %p149
      %p151 = scmp.ne.s32.totalorder %s143, %s145
      %p152 = scmp.eq.s32.totalorder %s30, 1
      %p153 = por %p151, %p152
      %p154 = scmp.ne.s32.totalorder %s145, %s146
      %p155 = scmp.eq.s32.totalorder %s30, 0
      %p156 = por %p154, %p155
      %p157 = scmp.ne.s32.totalorder %s145, %s146
      %p158 = scmp.eq.s32.totalorder %s31, 1
      %p159 = por %p157, %p158
      %p161 = scmp.ne.s32.totalorder %s146, %s160
      %p162 = scmp.eq.s32.totalorder %s31, 0
      %p163 = por %p161, %p162
      %s165 = sadd.s32 %s164, 1
      %p168 = scmp.eq.s32.totalorder %s25, 1
      %p169 = scmp.ne.s32.totalorder %s164, %s166
      %p170 = scmp.eq.s32.totalorder %s25, 0
      %p171 = por %p169, %p170
      %p172 = scmp.ne.s32.totalorder %s164, %s166
      %p173 = scmp.eq.s32.totalorder %s30, 1
      %p174 = por %p172, %p173
      %p175 = scmp.ne.s32.totalorder %s166, %s167
      %p176 = scmp.eq.s32.totalorder %s30, 0
      %p177 = por %p175, %p176
      %p178 = scmp.ne.s32.totalorder %s166, %s167
      %p179 = scmp.eq.s32.totalorder %s31, 1
      %p180 = por %p178, %p179
      %p182 = scmp.ne.s32.totalorder %s167, %s181
      %p183 = scmp.eq.s32.totalorder %s31, 0
      %p184 = por %p182, %p183
      %s186 = sadd.s32 %s185, 1
      %p189 = scmp.eq.s32.totalorder %s25, 1
      %p190 = scmp.ne.s32.totalorder %s185, %s187
      %p191 = scmp.eq.s32.totalorder %s25, 0
      %p192 = por %p190, %p191
      %p193 = scmp.ne.s32.totalorder %s185, %s187
      %p194 = scmp.eq.s32.totalorder %s30, 1
      %p195 = por %p193, %p194
      %p196 = scmp.ne.s32.totalorder %s187, %s188
      %p197 = scmp.eq.s32.totalorder %s30, 0
      %p198 = por %p196, %p197
      %p199 = scmp.ne.s32.totalorder %s187, %s188
      %p200 = scmp.eq.s32.totalorder %s31, 1
      %p201 = por %p199, %p200
      %p203 = scmp.ne.s32.totalorder %s188, %s202
      %p204 = scmp.eq.s32.totalorder %s31, 0
      %p205 = por %p203, %p204
      %s207 = sadd.s32 %s206, 1
      %p210 = scmp.eq.s32.totalorder %s25, 1
      %p211 = scmp.ne.s32.totalorder %s206, %s208
      %p212 = scmp.eq.s32.totalorder %s25, 0
      %p213 = por %p211, %p212
      %p214 = scmp.ne.s32.totalorder %s206, %s208
      %p215 = scmp.eq.s32.totalorder %s30, 1
      %p216 = por %p214, %p215
      %p217 = scmp.ne.s32.totalorder %s208, %s209
      %p218 = scmp.eq.s32.totalorder %s30, 0
      %p219 = por %p217, %p218
      %p220 = scmp.ne.s32.totalorder %s208, %s209
      %p221 = scmp.eq.s32.totalorder %s31, 1
      %p222 = por %p220, %p221
      %p224 = scmp.ne.s32.totalorder %s209, %s223
      %p225 = scmp.eq.s32.totalorder %s31, 0
      %p226 = por %p224, %p225
      %s228 = sadd.s32 %s227, 1
      %p231 = scmp.eq.s32.totalorder %s25, 1
      %p232 = scmp.ne.s32.totalorder %s227, %s229
      %p233 = scmp.eq.s32.totalorder %s25, 0
      %p234 = por %p232, %p233
      %p235 = scmp.ne.s32.totalorder %s227, %s229
      %p236 = scmp.eq.s32.totalorder %s30, 1
      %p237 = por %p235, %p236
      %p238 = scmp.ne.s32.totalorder %s229, %s230
      %p239 = scmp.eq.s32.totalorder %s30, 0
      %p240 = por %p238, %p239
      %p241 = scmp.ne.s32.totalorder %s229, %s230
      %p242 = scmp.eq.s32.totalorder %s31, 1
      %p243 = por %p241, %p242
      %p245 = scmp.ne.s32.totalorder %s230, %s244
      %p246 = scmp.eq.s32.totalorder %s31, 0
      %p247 = por %p245, %p246
      %s249 = sadd.s32 %s248, 1
      %p252 = scmp.eq.s32.totalorder %s25, 1
      %p253 = scmp.ne.s32.totalorder %s248, %s250
      %p254 = scmp.eq.s32.totalorder %s25, 0
      %p255 = por %p253, %p254
      %p256 = scmp.ne.s32.totalorder %s248, %s250
      %p257 = scmp.eq.s32.totalorder %s30, 1
      %p258 = por %p256, %p257
      %p259 = scmp.ne.s32.totalorder %s250, %s251
      %p260 = scmp.eq.s32.totalorder %s30, 0
      %p261 = por %p259, %p260
      %p262 = scmp.ne.s32.totalorder %s250, %s251
      %p263 = scmp.eq.s32.totalorder %s31, 1
      %p264 = por %p262, %p263
      %p266 = scmp.ne.s32.totalorder %s251, %s265
      %p267 = scmp.eq.s32.totalorder %s31, 0
      %p268 = por %p266, %p267
      %s269 = ssub.s32 %s25, %s32
      %p270 = scmp.eq.s32.totalorder %s269, 0
      %s272 = sadd.s32 %s271, 1
      %s273 = scalar_select %p270, %s271, %s272
      %p276 = pneg %p270
      %p277 = scmp.eq.s32.totalorder %s25, 1
      %p278 = por %p276, %p277
      %p279 = scmp.ne.s32.totalorder %s271, %s274
      %p280 = scmp.eq.s32.totalorder %s25, 0
      %p281 = por %p279, %p280
      %p282 = scmp.ne.s32.totalorder %s271, %s274
      %p283 = scmp.eq.s32.totalorder %s30, 1
      %p284 = por %p282, %p283
      %p285 = scmp.ne.s32.totalorder %s274, %s275
      %p286 = scmp.eq.s32.totalorder %s30, 0
      %p287 = por %p285, %p286
      %p288 = scmp.ne.s32.totalorder %s274, %s275
      %p289 = scmp.eq.s32.totalorder %s31, 1
      %p290 = por %p288, %p289
      %p292 = scmp.ne.s32.totalorder %s275, %s291
      %p293 = scmp.eq.s32.totalorder %s31, 0
      %p294 = por %p292, %p293
      %s295 = ssub.s32 %s25, %s32
      %p296 = scmp.eq.s32.totalorder %s295, 0
      %s298 = sadd.s32 %s297, 1
      %s299 = scalar_select %p296, %s297, %s298
      %p302 = pneg %p296
      %p303 = scmp.eq.s32.totalorder %s25, 1
      %p304 = por %p302, %p303
      %p305 = scmp.ne.s32.totalorder %s297, %s300
      %p306 = scmp.eq.s32.totalorder %s25, 0
      %p307 = por %p305, %p306
      %p308 = scmp.ne.s32.totalorder %s297, %s300
      %p309 = scmp.eq.s32.totalorder %s30, 1
      %p310 = por %p308, %p309
      %p311 = scmp.ne.s32.totalorder %s300, %s301
      %p312 = scmp.eq.s32.totalorder %s30, 0
      %p313 = por %p311, %p312
      %p314 = scmp.ne.s32.totalorder %s300, %s301
      %p315 = scmp.eq.s32.totalorder %s31, 1
      %p316 = por %p314, %p315
      %p318 = scmp.ne.s32.totalorder %s301, %s317
      %p319 = scmp.eq.s32.totalorder %s31, 0
      %p320 = por %p318, %p319
      %p321 = scmp.le.s32.totalorder 1, %s25
      %p322 = scmp.lt.s32.totalorder %s25, 3
      %p323 = pnand %p321, %p322
      %p324 = pneg %p323
      // Predicated region
      $region9: #{tpu_custom_call.1} parent=5 // pred_check
        _
      $region10: #{tpu_custom_call.1} parent=5 // pred_check_branch
        %326 = sbr.rel (%p323) target = $region12
      $region11: #{tpu_custom_call.1} parent=5 // pred_region
        %s327 = ssub.s32 %s25, 1
        // Predicated region
        $region13: #{tpu_custom_call.1} parent=11 // pred_check
          %p328 = pneg %p72
        $region14: #{tpu_custom_call.1} parent=11 // pred_check_branch
          %330 = sbr.rel (%p328) target = $region16
        $region15: #{tpu_custom_call.1} parent=11 // pred_region
          _
        $region16: #{tpu_custom_call.1} parent=11 // pred_fallthru
          _
        // Predicated region
        $region17: #{tpu_custom_call.1} parent=11 // pred_check
          %p331 = pneg %p93
        $region18: #{tpu_custom_call.1} parent=11 // pred_check_branch
          %333 = sbr.rel (%p331) target = $region20
        $region19: #{tpu_custom_call.1} parent=11 // pred_region
          _
        $region20: #{tpu_custom_call.1} parent=11 // pred_fallthru
          _
        // Predicated region
        $region21: #{tpu_custom_call.1} parent=11 // pred_check
          %p334 = pneg %p114
        $region22: #{tpu_custom_call.1} parent=11 // pred_check_branch
          %336 = sbr.rel (%p334) target = $region24
        $region23: #{tpu_custom_call.1} parent=11 // pred_region
          _
        $region24: #{tpu_custom_call.1} parent=11 // pred_fallthru
          _
        // Predicated region
        $region25: #{tpu_custom_call.1} parent=11 // pred_check
          %p337 = pneg %p135
        $region26: #{tpu_custom_call.1} parent=11 // pred_check_branch
          %339 = sbr.rel (%p337) target = $region28
        $region27: #{tpu_custom_call.1} parent=11 // pred_region
          _
        $region28: #{tpu_custom_call.1} parent=11 // pred_fallthru
          _
        // Predicated region
        $region29: #{tpu_custom_call.1} parent=11 // pred_check
          %p340 = pneg %p156
        $region30: #{tpu_custom_call.1} parent=11 // pred_check_branch
          %342 = sbr.rel (%p340) target = $region32
        $region31: #{tpu_custom_call.1} parent=11 // pred_region
          _
        $region32: #{tpu_custom_call.1} parent=11 // pred_fallthru
          _
        // Predicated region
        $region33: #{tpu_custom_call.1} parent=11 // pred_check
          %p343 = pneg %p177
        $region34: #{tpu_custom_call.1} parent=11 // pred_check_branch
          %345 = sbr.rel (%p343) target = $region36
        $region35: #{tpu_custom_call.1} parent=11 // pred_region
          _
        $region36: #{tpu_custom_call.1} parent=11 // pred_fallthru
          _
        // Predicated region
        $region37: #{tpu_custom_call.1} parent=11 // pred_check
          %p346 = pneg %p198
        $region38: #{tpu_custom_call.1} parent=11 // pred_check_branch
          %348 = sbr.rel (%p346) target = $region40
        $region39: #{tpu_custom_call.1} parent=11 // pred_region
          _
        $region40: #{tpu_custom_call.1} parent=11 // pred_fallthru
          _
        // Predicated region
        $region41: #{tpu_custom_call.1} parent=11 // pred_check
          %p349 = pneg %p219
        $region42: #{tpu_custom_call.1} parent=11 // pred_check_branch
          %351 = sbr.rel (%p349) target = $region44
        $region43: #{tpu_custom_call.1} parent=11 // pred_region
          _
        $region44: #{tpu_custom_call.1} parent=11 // pred_fallthru
          _
        // Predicated region
        $region45: #{tpu_custom_call.1} parent=11 // pred_check
          %p352 = pneg %p240
        $region46: #{tpu_custom_call.1} parent=11 // pred_check_branch
          %354 = sbr.rel (%p352) target = $region48
        $region47: #{tpu_custom_call.1} parent=11 // pred_region
          _
        $region48: #{tpu_custom_call.1} parent=11 // pred_fallthru
          _
        // Predicated region
        $region49: #{tpu_custom_call.1} parent=11 // pred_check
          %p355 = pneg %p261
        $region50: #{tpu_custom_call.1} parent=11 // pred_check_branch
          %357 = sbr.rel (%p355) target = $region52
        $region51: #{tpu_custom_call.1} parent=11 // pred_region
          _
        $region52: #{tpu_custom_call.1} parent=11 // pred_fallthru
          _
      $region12: #{tpu_custom_call.1} parent=5 // pred_fallthru
        _
      %p358 = scmp.lt.s32.totalorder %s25, 2
      // Predicated region
      $region53: #{tpu_custom_call.1} parent=5 // pred_check
        %p359 = pneg %p358
      $region54: #{tpu_custom_call.1} parent=5 // pred_check_branch
        %361 = sbr.rel (%p359) target = $region56
      $region55: #{tpu_custom_call.1} parent=5 // pred_region
        // Predicated region
        $region57: #{tpu_custom_call.1} parent=55 // pred_check
          %p362 = pneg %p45
        $region58: #{tpu_custom_call.1} parent=55 // pred_check_branch
          %364 = sbr.rel (%p362) target = $region60
        $region59: #{tpu_custom_call.1} parent=55 // pred_region
          %p365 = scmp.lt.s32.totalorder %s25, 1
          %s366 = scalar_select %p365, %s25, 1
          %s367 = smul.addr %s366, 4
          %s368 = scalar_lea.vmem %s0, %s367
        $region60: #{tpu_custom_call.1} parent=55 // pred_fallthru
          _
      $region56: #{tpu_custom_call.1} parent=5 // pred_fallthru
        _
      %p369 = scmp.le.s32.totalorder 1, %s25
      %p370 = scmp.lt.s32.totalorder %s25, 3
      %p371 = pnand %p369, %p370
      %p372 = pneg %p371
      // Predicated region
      $region61: #{tpu_custom_call.1} parent=5 // pred_check
        _
      $region62: #{tpu_custom_call.1} parent=5 // pred_check_branch
        %374 = sbr.rel (%p371) target = $region64
      $region63: #{tpu_custom_call.1} parent=5 // pred_region
        %s375 = ssub.s32 %s25, 1
        %p376 = scmp.lt.s32.totalorder %s30, 1
        %s377 = scalar_select %p376, %s30, 1
        %s378 = smul.addr %s377, 4
        %s379 = scalar_lea.vmem %s0, %s378
        %p380 = pneg %p51
        %p381 = pneg %p48
        %p382 = pneg %p72
        %p383 = pneg %p69
        %p384 = pneg %p93
        %p385 = pneg %p90
        %p386 = pneg %p114
        %p387 = pneg %p111
        %p388 = pneg %p135
        %p389 = pneg %p132
        %p390 = pneg %p156
        %p391 = pneg %p153
        %p392 = pneg %p177
        %p393 = pneg %p174
        %p394 = pneg %p198
        %p395 = pneg %p195
        %p396 = pneg %p219
        %p397 = pneg %p216
        %p398 = pneg %p240
        %p399 = pneg %p237
        %p400 = pneg %p261
        %p401 = pneg %p258
        %p402 = pneg %p287
        %p403 = pneg %p284
        %s404 = sand.u32 %s274, 1
        %s405 = scalar_lea.sflag [#allocation3], %s404
        %s406 = sand.u32 %s274, 1
        %s407 = smul.addr %s406, 8
        %s408 = scalar_lea.vmem [#allocation2], %s407
        %p409 = pneg %p313
        %p410 = pneg %p310
        %s411 = sand.u32 %s300, 1
        %s412 = scalar_lea.sflag [#allocation5], %s411
        %s413 = sand.u32 %s300, 1
        %s414 = smul.addr %s413, 8
        %s415 = scalar_lea.vmem [#allocation4], %s414
        %p416 = scmp.lt.s32.totalorder %s30, 1
        %s417 = scalar_select %p416, %s30, 1
        %s418 = smul.addr %s417, 4
        %s419 = scalar_lea.vmem %s0, %s418
        %v420 = vld [vmem:[%s419] sm:$0xf]
        %v421 = vld [vmem:[%s1] sm:$0xff]
        %v422 = vld [vmem:[%s4] sm:$0xff]
        %v423 = vld [vmem:[%s4 + $0x8] sm:$0xff]
        %v424 = vld [vmem:[%s2] sm:$0xff]
        %v425 = vld [vmem:[%s2 + $0x8] sm:$0xff]
        %v426 = vld [vmem:[%s3] sm:$0xff]
        %v427 = vld [vmem:[%s3 + $0x8] sm:$0xff]
        %vm428 = vcmask 31744
        %v430 = vsel %vm428, %v426, 0
        %v433 = vsel %vm428, %v427, 0
        %vm435 = vcmask 1043456
        %v437 = vsel %vm435, %v420, 0
        %439 = vmatprep.subr.mxu0 0.0
        %v440 = vand.u32 %v437, 4294901760
        %441 = vmatpush1.msra.mxu0 %v440
        %442 = vmatprep.subr.mxu0 0.0
        %443 = vmatpush1.msra.mxu0 0.0
        %444 = vmatprep.subr.mxu0 0.0
        %445 = vmatpush1.msra.mxu0 0.0
        %446 = vmatprep.subr.mxu0 0.0
        %447 = vmatpush1.msra.mxu0 0.0
        %448 = vmatprep.subr.mxu0 0.0
        %449 = vmatpush1.msra.mxu0 0.0
        %450 = vmatprep.subr.mxu0 0.0
        %451 = vmatpush1.msra.mxu0 0.0
        %452 = vmatprep.subr.mxu0 0.0
        %453 = vmatpush1.msra.mxu0 0.0
        %454 = vmatprep.subr.mxu0 0.0
        %455 = vmatpush1.msra.mxu0 0.0
        %456 = vmatprep.subr.mxu0 0.0
        %457 = vmatpush1.msra.mxu0 0.0
        %458 = vmatprep.subr.mxu0 0.0
        %459 = vmatpush1.msra.mxu0 0.0
        %460 = vmatprep.subr.mxu0 0.0
        %461 = vmatpush1.msra.mxu0 0.0
        %462 = vmatprep.subr.mxu0 0.0
        %463 = vmatpush1.msra.mxu0 0.0
        %464 = vmatprep.subr.mxu0 0.0
        %465 = vmatpush1.msra.mxu0 0.0
        %466 = vmatprep.subr.mxu0 0.0
        %467 = vmatpush1.msra.mxu0 0.0
        %468 = vmatprep.subr.mxu0 0.0
        %469 = vmatpush1.msra.mxu0 0.0
        %470 = vmatprep.subr.mxu0 0.0
        %471 = vmatpush1.msra.mxu0 0.0
        %472 = vmatprep.subr.mxu0 0.0
        %473 = vmatpush1.msra.mxu0 0.0
        %474 = vmatprep.subr.mxu0 0.0
        %475 = vmatpush1.msra.mxu0 0.0
        %476 = vmatprep.subr.mxu0 0.0
        %477 = vmatpush1.msra.mxu0 0.0
        %478 = vmatprep.subr.mxu0 0.0
        %479 = vmatpush1.msra.mxu0 0.0
        %480 = vmatprep.subr.mxu0 0.0
        %481 = vmatpush1.msra.mxu0 0.0
        %482 = vmatprep.subr.mxu0 0.0
        %483 = vmatpush1.msra.mxu0 0.0
        %484 = vmatprep.subr.mxu0 0.0
        %485 = vmatpush1.msra.mxu0 0.0
        %486 = vmatprep.subr.mxu0 0.0
        %487 = vmatpush1.msra.mxu0 0.0
        %488 = vmatprep.subr.mxu0 0.0
        %489 = vmatpush1.msra.mxu0 0.0
        %490 = vmatprep.subr.mxu0 0.0
        %491 = vmatpush1.msra.mxu0 0.0
        %492 = vmatprep.subr.mxu0 0.0
        %493 = vmatpush1.msra.mxu0 0.0
        %494 = vmatprep.subr.mxu0 0.0
        %495 = vmatpush1.msra.mxu0 0.0
        %496 = vmatprep.subr.mxu0 0.0
        %497 = vmatpush1.msra.mxu0 0.0
        %498 = vmatprep.subr.mxu0 0.0
        %499 = vmatpush1.msra.mxu0 0.0
        %500 = vmatprep.subr.mxu0 0.0
        %501 = vmatpush1.msra.mxu0 0.0
        %502 = vmatprep.subr.mxu0 0.0
        %503 = vmatpush1.msra.mxu0 0.0
        %504 = vmatprep.mubr.f32.mxu0 0.0
        %v505 = vand.u32 %v430, 4294901760
        %v506 = vsub.f32 %v430, %v505
        %v507 = vand.u32 %v506, 4294901760
        %v508 = vsub.f32 %v506, %v507
        %v509 = vand.u32 %v508, 4294901760
        %510 = vmatmul.mubr.f32.gmra.mrb[0].mxu0 %v509
        %v511 = vpop.f32.mrb[0].mxu0
        %v512 = vadd.f32 0.0, %v511
        %v513 = vpop.f32.mrb[0].mxu0
        %514 = vmatprep.mubr.f32.mxu0 0.0
        %v515 = vand.u32 %v433, 4294901760
        %v516 = vsub.f32 %v433, %v515
        %v517 = vand.u32 %v516, 4294901760
        %v518 = vsub.f32 %v516, %v517
        %v519 = vand.u32 %v518, 4294901760
        %520 = vmatmul.mubr.f32.gmra.mrb[0].mxu0 %v519
        %v521 = vpop.f32.mrb[0].mxu0
        %v522 = vadd.f32 0.0, %v521
        %v523 = vpop.f32.mrb[0].mxu0
        %524 = vdwg.mxu0
        %525 = vmatprep.subr.mxu0 0.0
        %v526 = vand.u32 %v437, 4294901760
        %v527 = vsub.f32 %v437, %v526
        %v528 = vand.u32 %v527, 4294901760
        %v529 = vsub.f32 %v527, %v528
        %v530 = vand.u32 %v529, 4294901760
        %531 = vmatpush1.msra.mxu0 %v530
        %532 = vmatprep.subr.mxu0 0.0
        %533 = vmatpush1.msra.mxu0 0.0
        %534 = vmatprep.subr.mxu0 0.0
        %535 = vmatpush1.msra.mxu0 0.0
        %536 = vmatprep.subr.mxu0 0.0
        %537 = vmatpush1.msra.mxu0 0.0
        %538 = vmatprep.subr.mxu0 0.0
        %539 = vmatpush1.msra.mxu0 0.0
        %540 = vmatprep.subr.mxu0 0.0
        %541 = vmatpush1.msra.mxu0 0.0
        %542 = vmatprep.subr.mxu0 0.0
        %543 = vmatpush1.msra.mxu0 0.0
        %544 = vmatprep.subr.mxu0 0.0
        %545 = vmatpush1.msra.mxu0 0.0
        %546 = vmatprep.subr.mxu0 0.0
        %547 = vmatpush1.msra.mxu0 0.0
        %548 = vmatprep.subr.mxu0 0.0
        %549 = vmatpush1.msra.mxu0 0.0
        %550 = vmatprep.subr.mxu0 0.0
        %551 = vmatpush1.msra.mxu0 0.0
        %552 = vmatprep.subr.mxu0 0.0
        %553 = vmatpush1.msra.mxu0 0.0
        %554 = vmatprep.subr.mxu0 0.0
        %555 = vmatpush1.msra.mxu0 0.0
        %556 = vmatprep.subr.mxu0 0.0
        %557 = vmatpush1.msra.mxu0 0.0
        %558 = vmatprep.subr.mxu0 0.0
        %559 = vmatpush1.msra.mxu0 0.0
        %560 = vmatprep.subr.mxu0 0.0
        %561 = vmatpush1.msra.mxu0 0.0
        %562 = vmatprep.subr.mxu0 0.0
        %563 = vmatpush1.msra.mxu0 0.0
        %564 = vmatprep.subr.mxu0 0.0
        %565 = vmatpush1.msra.mxu0 0.0
        %566 = vmatprep.subr.mxu0 0.0
        %567 = vmatpush1.msra.mxu0 0.0
        %568 = vmatprep.subr.mxu0 0.0
        %569 = vmatpush1.msra.mxu0 0.0
        %570 = vmatprep.subr.mxu0 0.0
        %571 = vmatpush1.msra.mxu0 0.0
        %572 = vmatprep.subr.mxu0 0.0
        %573 = vmatpush1.msra.mxu0 0.0
        %574 = vmatprep.subr.mxu0 0.0
        %575 = vmatpush1.msra.mxu0 0.0
        %576 = vmatprep.subr.mxu0 0.0
        %577 = vmatpush1.msra.mxu0 0.0
        %578 = vmatprep.subr.mxu0 0.0
        %579 = vmatpush1.msra.mxu0 0.0
        %580 = vmatprep.subr.mxu0 0.0
        %581 = vmatpush1.msra.mxu0 0.0
        %582 = vmatprep.subr.mxu0 0.0
        %583 = vmatpush1.msra.mxu0 0.0
        %584 = vmatprep.subr.mxu0 0.0
        %585 = vmatpush1.msra.mxu0 0.0
        %586 = vmatprep.subr.mxu0 0.0
        %587 = vmatpush1.msra.mxu0 0.0
        %588 = vmatprep.subr.mxu0 0.0
        %589 = vmatpush1.msra.mxu0 0.0
        %590 = vmatprep.subr.mxu0 0.0
        %591 = vmatpush1.msra.mxu0 0.0
        %592 = vmatprep.subr.mxu0 0.0
        %593 = vmatpush1.msra.mxu0 0.0
        %594 = vmatprep.mubr.f32.mxu0 0.0
        %v595 = vand.u32 %v430, 4294901760
        %596 = vmatmul.mubr.f32.gmra.mrb[0].mxu0 %v595
        %v597 = vpop.f32.mrb[0].mxu0
        %v598 = vadd.f32 %v512, %v597
        %v599 = vpop.f32.mrb[0].mxu0
        %600 = vmatprep.mubr.f32.mxu0 0.0
        %v601 = vand.u32 %v433, 4294901760
        %602 = vmatmul.mubr.f32.gmra.mrb[0].mxu0 %v601
        %v603 = vpop.f32.mrb[0].mxu0
        %v604 = vadd.f32 %v522, %v603
        %v605 = vpop.f32.mrb[0].mxu0
        %606 = vdwg.mxu0
        %607 = vmatprep.subr.mxu0 0.0
        %v608 = vand.u32 %v437, 4294901760
        %v609 = vsub.f32 %v437, %v608
        %610 = vmatpush1.msra.mxu0 %v609
        %611 = vmatprep.subr.mxu0 0.0
        %612 = vmatpush1.msra.mxu0 0.0
        %613 = vmatprep.subr.mxu0 0.0
        %614 = vmatpush1.msra.mxu0 0.0
        %615 = vmatprep.subr.mxu0 0.0
        %616 = vmatpush1.msra.mxu0 0.0
        %617 = vmatprep.subr.mxu0 0.0
        %618 = vmatpush1.msra.mxu0 0.0
        %619 = vmatprep.subr.mxu0 0.0
        %620 = vmatpush1.msra.mxu0 0.0
        %621 = vmatprep.subr.mxu0 0.0
        %622 = vmatpush1.msra.mxu0 0.0
        %623 = vmatprep.subr.mxu0 0.0
        %624 = vmatpush1.msra.mxu0 0.0
        %625 = vmatprep.subr.mxu0 0.0
        %626 = vmatpush1.msra.mxu0 0.0
        %627 = vmatprep.subr.mxu0 0.0
        %628 = vmatpush1.msra.mxu0 0.0
        %629 = vmatprep.subr.mxu0 0.0
        %630 = vmatpush1.msra.mxu0 0.0
        %631 = vmatprep.subr.mxu0 0.0
        %632 = vmatpush1.msra.mxu0 0.0
        %633 = vmatprep.subr.mxu0 0.0
        %634 = vmatpush1.msra.mxu0 0.0
        %635 = vmatprep.subr.mxu0 0.0
        %636 = vmatpush1.msra.mxu0 0.0
        %637 = vmatprep.subr.mxu0 0.0
        %638 = vmatpush1.msra.mxu0 0.0
        %639 = vmatprep.subr.mxu0 0.0
        %640 = vmatpush1.msra.mxu0 0.0
        %641 = vmatprep.subr.mxu0 0.0
        %642 = vmatpush1.msra.mxu0 0.0
        %643 = vmatprep.subr.mxu0 0.0
        %644 = vmatpush1.msra.mxu0 0.0
        %645 = vmatprep.subr.mxu0 0.0
        %646 = vmatpush1.msra.mxu0 0.0
        %647 = vmatprep.subr.mxu0 0.0
        %648 = vmatpush1.msra.mxu0 0.0
        %649 = vmatprep.subr.mxu0 0.0
        %650 = vmatpush1.msra.mxu0 0.0
        %651 = vmatprep.subr.mxu0 0.0
        %652 = vmatpush1.msra.mxu0 0.0
        %653 = vmatprep.subr.mxu0 0.0
        %654 = vmatpush1.msra.mxu0 0.0
        %655 = vmatprep.subr.mxu0 0.0
        %656 = vmatpush1.msra.mxu0 0.0
        %657 = vmatprep.subr.mxu0 0.0
        %658 = vmatpush1.msra.mxu0 0.0
        %659 = vmatprep.subr.mxu0 0.0
        %660 = vmatpush1.msra.mxu0 0.0
        %661 = vmatprep.subr.mxu0 0.0
        %662 = vmatpush1.msra.mxu0 0.0
        %663 = vmatprep.subr.mxu0 0.0
        %664 = vmatpush1.msra.mxu0 0.0
        %665 = vmatprep.subr.mxu0 0.0
        %666 = vmatpush1.msra.mxu0 0.0
        %667 = vmatprep.subr.mxu0 0.0
        %668 = vmatpush1.msra.mxu0 0.0
        %669 = vmatprep.subr.mxu0 0.0
        %670 = vmatpush1.msra.mxu0 0.0
        %671 = vmatprep.subr.mxu0 0.0
        %672 = vmatpush1.msra.mxu0 0.0
        %673 = vmatprep.mubr.f32.mxu0 0.0
        %v674 = vand.u32 %v430, 4294901760
        %v675 = vsub.f32 %v430, %v674
        %676 = vmatmul.mubr.f32.gmra.mrb[0].mxu0 %v675
        %v677 = vpop.f32.mrb[0].mxu0
        %v678 = vadd.f32 %v598, %v677
        %v679 = vpop.f32.mrb[0].mxu0
        %680 = vmatprep.mubr.f32.mxu0 0.0
        %v681 = vand.u32 %v433, 4294901760
        %v682 = vsub.f32 %v433, %v681
        %683 = vmatmul.mubr.f32.gmra.mrb[0].mxu0 %v682
        %v684 = vpop.f32.mrb[0].mxu0
        %v685 = vadd.f32 %v604, %v684
        %v686 = vpop.f32.mrb[0].mxu0
        %687 = vdwg.mxu0
        %688 = vmatprep.subr.mxu0 0.0
        %v689 = vand.u32 %v437, 4294901760
        %690 = vmatpush1.msra.mxu0 %v689
        %691 = vmatprep.subr.mxu0 0.0
        %692 = vmatpush1.msra.mxu0 0.0
        %693 = vmatprep.subr.mxu0 0.0
        %694 = vmatpush1.msra.mxu0 0.0
        %695 = vmatprep.subr.mxu0 0.0
        %696 = vmatpush1.msra.mxu0 0.0
        %697 = vmatprep.subr.mxu0 0.0
        %698 = vmatpush1.msra.mxu0 0.0
        %699 = vmatprep.subr.mxu0 0.0
        %700 = vmatpush1.msra.mxu0 0.0
        %701 = vmatprep.subr.mxu0 0.0
        %702 = vmatpush1.msra.mxu0 0.0
        %703 = vmatprep.subr.mxu0 0.0
        %704 = vmatpush1.msra.mxu0 0.0
        %705 = vmatprep.subr.mxu0 0.0
        %706 = vmatpush1.msra.mxu0 0.0
        %707 = vmatprep.subr.mxu0 0.0
        %708 = vmatpush1.msra.mxu0 0.0
        %709 = vmatprep.subr.mxu0 0.0
        %710 = vmatpush1.msra.mxu0 0.0
        %711 = vmatprep.subr.mxu0 0.0
        %712 = vmatpush1.msra.mxu0 0.0
        %713 = vmatprep.subr.mxu0 0.0
        %714 = vmatpush1.msra.mxu0 0.0
        %715 = vmatprep.subr.mxu0 0.0
        %716 = vmatpush1.msra.mxu0 0.0
        %717 = vmatprep.subr.mxu0 0.0
        %718 = vmatpush1.msra.mxu0 0.0
        %719 = vmatprep.subr.mxu0 0.0
        %720 = vmatpush1.msra.mxu0 0.0
        %721 = vmatprep.subr.mxu0 0.0
        %722 = vmatpush1.msra.mxu0 0.0
        %723 = vmatprep.subr.mxu0 0.0
        %724 = vmatpush1.msra.mxu0 0.0
        %725 = vmatprep.subr.mxu0 0.0
        %726 = vmatpush1.msra.mxu0 0.0
        %727 = vmatprep.subr.mxu0 0.0
        %728 = vmatpush1.msra.mxu0 0.0
        %729 = vmatprep.subr.mxu0 0.0
        %730 = vmatpush1.msra.mxu0 0.0
        %731 = vmatprep.subr.mxu0 0.0
        %732 = vmatpush1.msra.mxu0 0.0
        %733 = vmatprep.subr.mxu0 0.0
        %734 = vmatpush1.msra.mxu0 0.0
        %735 = vmatprep.subr.mxu0 0.0
        %736 = vmatpush1.msra.mxu0 0.0
        %737 = vmatprep.subr.mxu0 0.0
        %738 = vmatpush1.msra.mxu0 0.0
        %739 = vmatprep.subr.mxu0 0.0
        %740 = vmatpush1.msra.mxu0 0.0
        %741 = vmatprep.subr.mxu0 0.0
        %742 = vmatpush1.msra.mxu0 0.0
        %743 = vmatprep.subr.mxu0 0.0
        %744 = vmatpush1.msra.mxu0 0.0
        %745 = vmatprep.subr.mxu0 0.0
        %746 = vmatpush1.msra.mxu0 0.0
        %747 = vmatprep.subr.mxu0 0.0
        %748 = vmatpush1.msra.mxu0 0.0
        %749 = vmatprep.subr.mxu0 0.0
        %750 = vmatpush1.msra.mxu0 0.0
        %751 = vmatprep.subr.mxu0 0.0
        %752 = vmatpush1.msra.mxu0 0.0
        %753 = vmatprep.mubr.f32.mxu0 0.0
        %v754 = vand.u32 %v430, 4294901760
        %v755 = vsub.f32 %v430, %v754
        %v756 = vand.u32 %v755, 4294901760
        %757 = vmatmul.mubr.f32.gmra.mrb[0].mxu0 %v756
        %v758 = vpop.f32.mrb[0].mxu0
        %v759 = vadd.f32 %v678, %v758
        %v760 = vpop.f32.mrb[0].mxu0
        %761 = vmatprep.mubr.f32.mxu0 0.0
        %v762 = vand.u32 %v433, 4294901760
        %v763 = vsub.f32 %v433, %v762
        %v764 = vand.u32 %v763, 4294901760
        %765 = vmatmul.mubr.f32.gmra.mrb[0].mxu0 %v764
        %v766 = vpop.f32.mrb[0].mxu0
        %v767 = vadd.f32 %v685, %v766
        %v768 = vpop.f32.mrb[0].mxu0
        %769 = vdwg.mxu0
        %770 = vmatprep.subr.mxu0 0.0
        %v771 = vand.u32 %v437, 4294901760
        %v772 = vsub.f32 %v437, %v771
        %v773 = vand.u32 %v772, 4294901760
        %774 = vmatpush1.msra.mxu0 %v773
        %775 = vmatprep.subr.mxu0 0.0
        %776 = vmatpush1.msra.mxu0 0.0
        %777 = vmatprep.subr.mxu0 0.0
        %778 = vmatpush1.msra.mxu0 0.0
        %779 = vmatprep.subr.mxu0 0.0
        %780 = vmatpush1.msra.mxu0 0.0
        %781 = vmatprep.subr.mxu0 0.0
        %782 = vmatpush1.msra.mxu0 0.0
        %783 = vmatprep.subr.mxu0 0.0
        %784 = vmatpush1.msra.mxu0 0.0
        %785 = vmatprep.subr.mxu0 0.0
        %786 = vmatpush1.msra.mxu0 0.0
        %787 = vmatprep.subr.mxu0 0.0
        %788 = vmatpush1.msra.mxu0 0.0
        %789 = vmatprep.subr.mxu0 0.0
        %790 = vmatpush1.msra.mxu0 0.0
        %791 = vmatprep.subr.mxu0 0.0
        %792 = vmatpush1.msra.mxu0 0.0
        %793 = vmatprep.subr.mxu0 0.0
        %794 = vmatpush1.msra.mxu0 0.0
        %795 = vmatprep.subr.mxu0 0.0
        %796 = vmatpush1.msra.mxu0 0.0
        %797 = vmatprep.subr.mxu0 0.0
        %798 = vmatpush1.msra.mxu0 0.0
        %799 = vmatprep.subr.mxu0 0.0
        %800 = vmatpush1.msra.mxu0 0.0
        %801 = vmatprep.subr.mxu0 0.0
        %802 = vmatpush1.msra.mxu0 0.0
        %803 = vmatprep.subr.mxu0 0.0
        %804 = vmatpush1.msra.mxu0 0.0
        %805 = vmatprep.subr.mxu0 0.0
        %806 = vmatpush1.msra.mxu0 0.0
        %807 = vmatprep.subr.mxu0 0.0
        %808 = vmatpush1.msra.mxu0 0.0
        %809 = vmatprep.subr.mxu0 0.0
        %810 = vmatpush1.msra.mxu0 0.0
        %811 = vmatprep.subr.mxu0 0.0
        %812 = vmatpush1.msra.mxu0 0.0
        %813 = vmatprep.subr.mxu0 0.0
        %814 = vmatpush1.msra.mxu0 0.0
        %815 = vmatprep.subr.mxu0 0.0
        %816 = vmatpush1.msra.mxu0 0.0
        %817 = vmatprep.subr.mxu0 0.0
        %818 = vmatpush1.msra.mxu0 0.0
        %819 = vmatprep.subr.mxu0 0.0
        %820 = vmatpush1.msra.mxu0 0.0
        %821 = vmatprep.subr.mxu0 0.0
        %822 = vmatpush1.msra.mxu0 0.0
        %823 = vmatprep.subr.mxu0 0.0
        %824 = vmatpush1.msra.mxu0 0.0
        %825 = vmatprep.subr.mxu0 0.0
        %826 = vmatpush1.msra.mxu0 0.0
        %827 = vmatprep.subr.mxu0 0.0
        %828 = vmatpush1.msra.mxu0 0.0
        %829 = vmatprep.subr.mxu0 0.0
        %830 = vmatpush1.msra.mxu0 0.0
        %831 = vmatprep.subr.mxu0 0.0
        %832 = vmatpush1.msra.mxu0 0.0
        %833 = vmatprep.subr.mxu0 0.0
        %834 = vmatpush1.msra.mxu0 0.0
        %835 = vmatprep.subr.mxu0 0.0
        %836 = vmatpush1.msra.mxu0 0.0
        %837 = vmatprep.mubr.f32.mxu0 0.0
        %v838 = vand.u32 %v430, 4294901760
        %839 = vmatmul.mubr.f32.gmra.mrb[0].mxu0 %v838
        %v840 = vpop.f32.mrb[0].mxu0
        %v841 = vadd.f32 %v759, %v840
        %v842 = vpop.f32.mrb[0].mxu0
        %843 = vmatprep.mubr.f32.mxu0 0.0
        %v844 = vand.u32 %v433, 4294901760
        %845 = vmatmul.mubr.f32.gmra.mrb[0].mxu0 %v844
        %v846 = vpop.f32.mrb[0].mxu0
        %v847 = vadd.f32 %v767, %v846
        %v848 = vpop.f32.mrb[0].mxu0
        %849 = vdwg.mxu0
        %850 = vmatprep.subr.mxu0 0.0
        %v851 = vand.u32 %v437, 4294901760
        %852 = vmatpush1.msra.mxu0 %v851
        %853 = vmatprep.subr.mxu0 0.0
        %854 = vmatpush1.msra.mxu0 0.0
        %855 = vmatprep.subr.mxu0 0.0
        %856 = vmatpush1.msra.mxu0 0.0
        %857 = vmatprep.subr.mxu0 0.0
        %858 = vmatpush1.msra.mxu0 0.0
        %859 = vmatprep.subr.mxu0 0.0
        %860 = vmatpush1.msra.mxu0 0.0
        %861 = vmatprep.subr.mxu0 0.0
        %862 = vmatpush1.msra.mxu0 0.0
        %863 = vmatprep.subr.mxu0 0.0
        %864 = vmatpush1.msra.mxu0 0.0
        %865 = vmatprep.subr.mxu0 0.0
        %866 = vmatpush1.msra.mxu0 0.0
        %867 = vmatprep.subr.mxu0 0.0
        %868 = vmatpush1.msra.mxu0 0.0
        %869 = vmatprep.subr.mxu0 0.0
        %870 = vmatpush1.msra.mxu0 0.0
        %871 = vmatprep.subr.mxu0 0.0
        %872 = vmatpush1.msra.mxu0 0.0
        %873 = vmatprep.subr.mxu0 0.0
        %874 = vmatpush1.msra.mxu0 0.0
        %875 = vmatprep.subr.mxu0 0.0
        %876 = vmatpush1.msra.mxu0 0.0
        %877 = vmatprep.subr.mxu0 0.0
        %878 = vmatpush1.msra.mxu0 0.0
        %879 = vmatprep.subr.mxu0 0.0
        %880 = vmatpush1.msra.mxu0 0.0
        %881 = vmatprep.subr.mxu0 0.0
        %882 = vmatpush1.msra.mxu0 0.0
        %883 = vmatprep.subr.mxu0 0.0
        %884 = vmatpush1.msra.mxu0 0.0
        %885 = vmatprep.subr.mxu0 0.0
        %886 = vmatpush1.msra.mxu0 0.0
        %887 = vmatprep.subr.mxu0 0.0
        %888 = vmatpush1.msra.mxu0 0.0
        %889 = vmatprep.subr.mxu0 0.0
        %890 = vmatpush1.msra.mxu0 0.0
        %891 = vmatprep.subr.mxu0 0.0
        %892 = vmatpush1.msra.mxu0 0.0
        %893 = vmatprep.subr.mxu0 0.0
        %894 = vmatpush1.msra.mxu0 0.0
        %895 = vmatprep.subr.mxu0 0.0
        %896 = vmatpush1.msra.mxu0 0.0
        %897 = vmatprep.subr.mxu0 0.0
        %898 = vmatpush1.msra.mxu0 0.0
        %899 = vmatprep.subr.mxu0 0.0
        %900 = vmatpush1.msra.mxu0 0.0
        %901 = vmatprep.subr.mxu0 0.0
        %902 = vmatpush1.msra.mxu0 0.0
        %903 = vmatprep.subr.mxu0 0.0
        %904 = vmatpush1.msra.mxu0 0.0
        %905 = vmatprep.subr.mxu0 0.0
        %906 = vmatpush1.msra.mxu0 0.0
        %907 = vmatprep.subr.mxu0 0.0
        %908 = vmatpush1.msra.mxu0 0.0
        %909 = vmatprep.subr.mxu0 0.0
        %910 = vmatpush1.msra.mxu0 0.0
        %911 = vmatprep.subr.mxu0 0.0
        %912 = vmatpush1.msra.mxu0 0.0
        %913 = vmatprep.subr.mxu0 0.0
        %914 = vmatpush1.msra.mxu0 0.0
        %915 = vmatprep.mubr.f32.mxu0 0.0
        %v916 = vand.u32 %v430, 4294901760
        %917 = vmatmul.mubr.f32.gmra.mrb[0].mxu0 %v916
        %v918 = vpop.f32.mrb[0].mxu0
        %v919 = vadd.f32 %v841, %v918
        %v920 = vpop.f32.mrb[0].mxu0
        %921 = vmatprep.mubr.f32.mxu0 0.0
        %v922 = vand.u32 %v433, 4294901760
        %923 = vmatmul.mubr.f32.gmra.mrb[0].mxu0 %v922
        %v924 = vpop.f32.mrb[0].mxu0
        %v925 = vadd.f32 %v847, %v924
        %v926 = vpop.f32.mrb[0].mxu0
        %927 = vdwg.mxu0
        %vm928 = vcmask 64512
        %v930 = vsel %vm928, %v424, 0
        %v933 = vsel %vm928, %v425, 0
        %935 = vmatprep.subr.mxu0 0.0
        %v936 = vand.u32 %v421, 4294901760
        %937 = vmatpush1.msra.mxu0 %v936
        %938 = vmatprep.subr.mxu0 0.0
        %939 = vmatpush1.msra.mxu0 0.0
        %940 = vmatprep.subr.mxu0 0.0
        %941 = vmatpush1.msra.mxu0 0.0
        %942 = vmatprep.subr.mxu0 0.0
        %943 = vmatpush1.msra.mxu0 0.0
        %944 = vmatprep.subr.mxu0 0.0
        %945 = vmatpush1.msra.mxu0 0.0
        %946 = vmatprep.subr.mxu0 0.0
        %947 = vmatpush1.msra.mxu0 0.0
        %948 = vmatprep.subr.mxu0 0.0
        %949 = vmatpush1.msra.mxu0 0.0
        %950 = vmatprep.subr.mxu0 0.0
        %951 = vmatpush1.msra.mxu0 0.0
        %952 = vmatprep.subr.mxu0 0.0
        %953 = vmatpush1.msra.mxu0 0.0
        %954 = vmatprep.subr.mxu0 0.0
        %955 = vmatpush1.msra.mxu0 0.0
        %956 = vmatprep.subr.mxu0 0.0
        %957 = vmatpush1.msra.mxu0 0.0
        %958 = vmatprep.subr.mxu0 0.0
        %959 = vmatpush1.msra.mxu0 0.0
        %960 = vmatprep.subr.mxu0 0.0
        %961 = vmatpush1.msra.mxu0 0.0
        %962 = vmatprep.subr.mxu0 0.0
        %963 = vmatpush1.msra.mxu0 0.0
        %964 = vmatprep.subr.mxu0 0.0
        %965 = vmatpush1.msra.mxu0 0.0
        %966 = vmatprep.subr.mxu0 0.0
        %967 = vmatpush1.msra.mxu0 0.0
        %968 = vmatprep.subr.mxu0 0.0
        %969 = vmatpush1.msra.mxu0 0.0
        %970 = vmatprep.subr.mxu0 0.0
        %971 = vmatpush1.msra.mxu0 0.0
        %972 = vmatprep.subr.mxu0 0.0
        %973 = vmatpush1.msra.mxu0 0.0
        %974 = vmatprep.subr.mxu0 0.0
        %975 = vmatpush1.msra.mxu0 0.0
        %976 = vmatprep.subr.mxu0 0.0
        %977 = vmatpush1.msra.mxu0 0.0
        %978 = vmatprep.subr.mxu0 0.0
        %979 = vmatpush1.msra.mxu0 0.0
        %980 = vmatprep.subr.mxu0 0.0
        %981 = vmatpush1.msra.mxu0 0.0
        %982 = vmatprep.subr.mxu0 0.0
        %983 = vmatpush1.msra.mxu0 0.0
        %984 = vmatprep.subr.mxu0 0.0
        %985 = vmatpush1.msra.mxu0 0.0
        %986 = vmatprep.subr.mxu0 0.0
        %987 = vmatpush1.msra.mxu0 0.0
        %988 = vmatprep.subr.mxu0 0.0
        %989 = vmatpush1.msra.mxu0 0.0
        %990 = vmatprep.subr.mxu0 0.0
        %991 = vmatpush1.msra.mxu0 0.0
        %992 = vmatprep.subr.mxu0 0.0
        %993 = vmatpush1.msra.mxu0 0.0
        %994 = vmatprep.subr.mxu0 0.0
        %995 = vmatpush1.msra.mxu0 0.0
        %996 = vmatprep.subr.mxu0 0.0
        %997 = vmatpush1.msra.mxu0 0.0
        %998 = vmatprep.subr.mxu0 0.0
        %999 = vmatpush1.msra.mxu0 0.0
        %1000 = vmatprep.mubr.f32.mxu0 0.0
        %v1001 = vand.u32 %v930, 4294901760
        %v1002 = vsub.f32 %v930, %v1001
        %v1003 = vand.u32 %v1002, 4294901760
        %v1004 = vsub.f32 %v1002, %v1003
        %v1005 = vand.u32 %v1004, 4294901760
        %1006 = vmatmul.mubr.f32.gmra.mrb[0].mxu0 %v1005
        %v1007 = vpop.f32.mrb[0].mxu0
        %v1008 = vadd.f32 %v919, %v1007
        %v1009 = vpop.f32.mrb[0].mxu0
        %1010 = vmatprep.mubr.f32.mxu0 0.0
        %v1011 = vand.u32 %v933, 4294901760
        %v1012 = vsub.f32 %v933, %v1011
        %v1013 = vand.u32 %v1012, 4294901760
        %v1014 = vsub.f32 %v1012, %v1013
        %v1015 = vand.u32 %v1014, 4294901760
        %1016 = vmatmul.mubr.f32.gmra.mrb[0].mxu0 %v1015
        %v1017 = vpop.f32.mrb[0].mxu0
        %v1018 = vadd.f32 %v925, %v1017
        %v1019 = vpop.f32.mrb[0].mxu0
        %1020 = vdwg.mxu0
        %1021 = vmatprep.subr.mxu0 0.0
        %v1022 = vand.u32 %v421, 4294901760
        %v1023 = vsub.f32 %v421, %v1022
        %v1024 = vand.u32 %v1023, 4294901760
        %v1025 = vsub.f32 %v1023, %v1024
        %v1026 = vand.u32 %v1025, 4294901760
        %1027 = vmatpush1.msra.mxu0 %v1026
        %1028 = vmatprep.subr.mxu0 0.0
        %1029 = vmatpush1.msra.mxu0 0.0
        %1030 = vmatprep.subr.mxu0 0.0
        %1031 = vmatpush1.msra.mxu0 0.0
        %1032 = vmatprep.subr.mxu0 0.0
        %1033 = vmatpush1.msra.mxu0 0.0
        %1034 = vmatprep.subr.mxu0 0.0
        %1035 = vmatpush1.msra.mxu0 0.0
        %1036 = vmatprep.subr.mxu0 0.0
        %1037 = vmatpush1.msra.mxu0 0.0
        %1038 = vmatprep.subr.mxu0 0.0
        %1039 = vmatpush1.msra.mxu0 0.0
        %1040 = vmatprep.subr.mxu0 0.0
        %1041 = vmatpush1.msra.mxu0 0.0
        %1042 = vmatprep.subr.mxu0 0.0
        %1043 = vmatpush1.msra.mxu0 0.0
        %1044 = vmatprep.subr.mxu0 0.0
        %1045 = vmatpush1.msra.mxu0 0.0
        %1046 = vmatprep.subr.mxu0 0.0
        %1047 = vmatpush1.msra.mxu0 0.0
        %1048 = vmatprep.subr.mxu0 0.0
        %1049 = vmatpush1.msra.mxu0 0.0
        %1050 = vmatprep.subr.mxu0 0.0
        %1051 = vmatpush1.msra.mxu0 0.0
        %1052 = vmatprep.subr.mxu0 0.0
        %1053 = vmatpush1.msra.mxu0 0.0
        %1054 = vmatprep.subr.mxu0 0.0
        %1055 = vmatpush1.msra.mxu0 0.0
        %1056 = vmatprep.subr.mxu0 0.0
        %1057 = vmatpush1.msra.mxu0 0.0
        %1058 = vmatprep.subr.mxu0 0.0
        %1059 = vmatpush1.msra.mxu0 0.0
        %1060 = vmatprep.subr.mxu0 0.0
        %1061 = vmatpush1.msra.mxu0 0.0
        %1062 = vmatprep.subr.mxu0 0.0
        %1063 = vmatpush1.msra.mxu0 0.0
        %1064 = vmatprep.subr.mxu0 0.0
        %1065 = vmatpush1.msra.mxu0 0.0
        %1066 = vmatprep.subr.mxu0 0.0
        %1067 = vmatpush1.msra.mxu0 0.0
        %1068 = vmatprep.subr.mxu0 0.0
        %1069 = vmatpush1.msra.mxu0 0.0
        %1070 = vmatprep.subr.mxu0 0.0
        %1071 = vmatpush1.msra.mxu0 0.0
        %1072 = vmatprep.subr.mxu0 0.0
        %1073 = vmatpush1.msra.mxu0 0.0
        %1074 = vmatprep.subr.mxu0 0.0
        %1075 = vmatpush1.msra.mxu0 0.0
        %1076 = vmatprep.subr.mxu0 0.0
        %1077 = vmatpush1.msra.mxu0 0.0
        %1078 = vmatprep.subr.mxu0 0.0
        %1079 = vmatpush1.msra.mxu0 0.0
        %1080 = vmatprep.subr.mxu0 0.0
        %1081 = vmatpush1.msra.mxu0 0.0
        %1082 = vmatprep.subr.mxu0 0.0
        %1083 = vmatpush1.msra.mxu0 0.0
        %1084 = vmatprep.subr.mxu0 0.0
        %1085 = vmatpush1.msra.mxu0 0.0
        %1086 = vmatprep.subr.mxu0 0.0
        %1087 = vmatpush1.msra.mxu0 0.0
        %1088 = vmatprep.subr.mxu0 0.0
        %1089 = vmatpush1.msra.mxu0 0.0
        %1090 = vmatprep.mubr.f32.mxu0 0.0
        %v1091 = vand.u32 %v930, 4294901760
        %1092 = vmatmul.mubr.f32.gmra.mrb[0].mxu0 %v1091
        %v1093 = vpop.f32.mrb[0].mxu0
        %v1094 = vadd.f32 %v1008, %v1093
        %v1095 = vpop.f32.mrb[0].mxu0
        %1096 = vmatprep.mubr.f32.mxu0 0.0
        %v1097 = vand.u32 %v933, 4294901760
        %1098 = vmatmul.mubr.f32.gmra.mrb[0].mxu0 %v1097
        %v1099 = vpop.f32.mrb[0].mxu0
        %v1100 = vadd.f32 %v1018, %v1099
        %v1101 = vpop.f32.mrb[0].mxu0
        %1102 = vdwg.mxu0
        %1103 = vmatprep.subr.mxu0 0.0
        %v1104 = vand.u32 %v421, 4294901760
        %v1105 = vsub.f32 %v421, %v1104
        %1106 = vmatpush1.msra.mxu0 %v1105
        %1107 = vmatprep.subr.mxu0 0.0
        %1108 = vmatpush1.msra.mxu0 0.0
        %1109 = vmatprep.subr.mxu0 0.0
        %1110 = vmatpush1.msra.mxu0 0.0
        %1111 = vmatprep.subr.mxu0 0.0
        %1112 = vmatpush1.msra.mxu0 0.0
        %1113 = vmatprep.subr.mxu0 0.0
        %1114 = vmatpush1.msra.mxu0 0.0
        %1115 = vmatprep.subr.mxu0 0.0
        %1116 = vmatpush1.msra.mxu0 0.0
        %1117 = vmatprep.subr.mxu0 0.0
        %1118 = vmatpush1.msra.mxu0 0.0
        %1119 = vmatprep.subr.mxu0 0.0
        %1120 = vmatpush1.msra.mxu0 0.0
        %1121 = vmatprep.subr.mxu0 0.0
        %1122 = vmatpush1.msra.mxu0 0.0
        %1123 = vmatprep.subr.mxu0 0.0
        %1124 = vmatpush1.msra.mxu0 0.0
        %1125 = vmatprep.subr.mxu0 0.0
        %1126 = vmatpush1.msra.mxu0 0.0
        %1127 = vmatprep.subr.mxu0 0.0
        %1128 = vmatpush1.msra.mxu0 0.0
        %1129 = vmatprep.subr.mxu0 0.0
        %1130 = vmatpush1.msra.mxu0 0.0
        %1131 = vmatprep.subr.mxu0 0.0
        %1132 = vmatpush1.msra.mxu0 0.0
        %1133 = vmatprep.subr.mxu0 0.0
        %1134 = vmatpush1.msra.mxu0 0.0
        %1135 = vmatprep.subr.mxu0 0.0
        %1136 = vmatpush1.msra.mxu0 0.0
        %1137 = vmatprep.subr.mxu0 0.0
        %1138 = vmatpush1.msra.mxu0 0.0
        %1139 = vmatprep.subr.mxu0 0.0
        %1140 = vmatpush1.msra.mxu0 0.0
        %1141 = vmatprep.subr.mxu0 0.0
        %1142 = vmatpush1.msra.mxu0 0.0
        %1143 = vmatprep.subr.mxu0 0.0
        %1144 = vmatpush1.msra.mxu0 0.0
        %1145 = vmatprep.subr.mxu0 0.0
        %1146 = vmatpush1.msra.mxu0 0.0
        %1147 = vmatprep.subr.mxu0 0.0
        %1148 = vmatpush1.msra.mxu0 0.0
        %1149 = vmatprep.subr.mxu0 0.0
        %1150 = vmatpush1.msra.mxu0 0.0
        %1151 = vmatprep.subr.mxu0 0.0
        %1152 = vmatpush1.msra.mxu0 0.0
        %1153 = vmatprep.subr.mxu0 0.0
        %1154 = vmatpush1.msra.mxu0 0.0
        %1155 = vmatprep.subr.mxu0 0.0
        %1156 = vmatpush1.msra.mxu0 0.0
        %1157 = vmatprep.subr.mxu0 0.0
        %1158 = vmatpush1.msra.mxu0 0.0
        %1159 = vmatprep.subr.mxu0 0.0
        %1160 = vmatpush1.msra.mxu0 0.0
        %1161 = vmatprep.subr.mxu0 0.0
        %1162 = vmatpush1.msra.mxu0 0.0
        %1163 = vmatprep.subr.mxu0 0.0
        %1164 = vmatpush1.msra.mxu0 0.0
        %1165 = vmatprep.subr.mxu0 0.0
        %1166 = vmatpush1.msra.mxu0 0.0
        %1167 = vmatprep.subr.mxu0 0.0
        %1168 = vmatpush1.msra.mxu0 0.0
        %1169 = vmatprep.mubr.f32.mxu0 0.0
        %v1170 = vand.u32 %v930, 4294901760
        %v1171 = vsub.f32 %v930, %v1170
        %1172 = vmatmul.mubr.f32.gmra.mrb[0].mxu0 %v1171
        %v1173 = vpop.f32.mrb[0].mxu0
        %v1174 = vadd.f32 %v1094, %v1173
        %v1175 = vpop.f32.mrb[0].mxu0
        %1176 = vmatprep.mubr.f32.mxu0 0.0
        %v1177 = vand.u32 %v933, 4294901760
        %v1178 = vsub.f32 %v933, %v1177
        %1179 = vmatmul.mubr.f32.gmra.mrb[0].mxu0 %v1178
        %v1180 = vpop.f32.mrb[0].mxu0
        %v1181 = vadd.f32 %v1100, %v1180
        %v1182 = vpop.f32.mrb[0].mxu0
        %1183 = vdwg.mxu0
        %1184 = vmatprep.subr.mxu0 0.0
        %v1185 = vand.u32 %v421, 4294901760
        %1186 = vmatpush1.msra.mxu0 %v1185
        %1187 = vmatprep.subr.mxu0 0.0
        %1188 = vmatpush1.msra.mxu0 0.0
        %1189 = vmatprep.subr.mxu0 0.0
        %1190 = vmatpush1.msra.mxu0 0.0
        %1191 = vmatprep.subr.mxu0 0.0
        %1192 = vmatpush1.msra.mxu0 0.0
        %1193 = vmatprep.subr.mxu0 0.0
        %1194 = vmatpush1.msra.mxu0 0.0
        %1195 = vmatprep.subr.mxu0 0.0
        %1196 = vmatpush1.msra.mxu0 0.0
        %1197 = vmatprep.subr.mxu0 0.0
        %1198 = vmatpush1.msra.mxu0 0.0
        %1199 = vmatprep.subr.mxu0 0.0
        %1200 = vmatpush1.msra.mxu0 0.0
        %1201 = vmatprep.subr.mxu0 0.0
        %1202 = vmatpush1.msra.mxu0 0.0
        %1203 = vmatprep.subr.mxu0 0.0
        %1204 = vmatpush1.msra.mxu0 0.0
        %1205 = vmatprep.subr.mxu0 0.0
        %1206 = vmatpush1.msra.mxu0 0.0
        %1207 = vmatprep.subr.mxu0 0.0
        %1208 = vmatpush1.msra.mxu0 0.0
        %1209 = vmatprep.subr.mxu0 0.0
        %1210 = vmatpush1.msra.mxu0 0.0
        %1211 = vmatprep.subr.mxu0 0.0
        %1212 = vmatpush1.msra.mxu0 0.0
        %1213 = vmatprep.subr.mxu0 0.0
        %1214 = vmatpush1.msra.mxu0 0.0
        %1215 = vmatprep.subr.mxu0 0.0
        %1216 = vmatpush1.msra.mxu0 0.0
        %1217 = vmatprep.subr.mxu0 0.0
        %1218 = vmatpush1.msra.mxu0 0.0
        %1219 = vmatprep.subr.mxu0 0.0
        %1220 = vmatpush1.msra.mxu0 0.0
        %1221 = vmatprep.subr.mxu0 0.0
        %1222 = vmatpush1.msra.mxu0 0.0
        %1223 = vmatprep.subr.mxu0 0.0
        %1224 = vmatpush1.msra.mxu0 0.0
        %1225 = vmatprep.subr.mxu0 0.0
        %1226 = vmatpush1.msra.mxu0 0.0
        %1227 = vmatprep.subr.mxu0 0.0
        %1228 = vmatpush1.msra.mxu0 0.0
        %1229 = vmatprep.subr.mxu0 0.0
        %1230 = vmatpush1.msra.mxu0 0.0
        %1231 = vmatprep.subr.mxu0 0.0
        %1232 = vmatpush1.msra.mxu0 0.0
        %1233 = vmatprep.subr.mxu0 0.0
        %1234 = vmatpush1.msra.mxu0 0.0
        %1235 = vmatprep.subr.mxu0 0.0
        %1236 = vmatpush1.msra.mxu0 0.0
        %1237 = vmatprep.subr.mxu0 0.0
        %1238 = vmatpush1.msra.mxu0 0.0
        %1239 = vmatprep.subr.mxu0 0.0
        %1240 = vmatpush1.msra.mxu0 0.0
        %1241 = vmatprep.subr.mxu0 0.0
        %1242 = vmatpush1.msra.mxu0 0.0
        %1243 = vmatprep.subr.mxu0 0.0
        %1244 = vmatpush1.msra.mxu0 0.0
        %1245 = vmatprep.subr.mxu0 0.0
        %1246 = vmatpush1.msra.mxu0 0.0
        %1247 = vmatprep.subr.mxu0 0.0
        %1248 = vmatpush1.msra.mxu0 0.0
        %1249 = vmatprep.mubr.f32.mxu0 0.0
        %v1250 = vand.u32 %v930, 4294901760
        %v1251 = vsub.f32 %v930, %v1250
        %v1252 = vand.u32 %v1251, 4294901760
        %1253 = vmatmul.mubr.f32.gmra.mrb[0].mxu0 %v1252
        %v1254 = vpop.f32.mrb[0].mxu0
        %v1255 = vadd.f32 %v1174, %v1254
        %v1256 = vpop.f32.mrb[0].mxu0
        %1257 = vmatprep.mubr.f32.mxu0 0.0
        %v1258 = vand.u32 %v933, 4294901760
        %v1259 = vsub.f32 %v933, %v1258
        %v1260 = vand.u32 %v1259, 4294901760
        %1261 = vmatmul.mubr.f32.gmra.mrb[0].mxu0 %v1260
        %v1262 = vpop.f32.mrb[0].mxu0
        %v1263 = vadd.f32 %v1181, %v1262
        %v1264 = vpop.f32.mrb[0].mxu0
        %1265 = vdwg.mxu0
        %1266 = vmatprep.subr.mxu0 0.0
        %v1267 = vand.u32 %v421, 4294901760
        %v1268 = vsub.f32 %v421, %v1267
        %v1269 = vand.u32 %v1268, 4294901760
        %1270 = vmatpush1.msra.mxu0 %v1269
        %1271 = vmatprep.subr.mxu0 0.0
        %1272 = vmatpush1.msra.mxu0 0.0
        %1273 = vmatprep.subr.mxu0 0.0
        %1274 = vmatpush1.msra.mxu0 0.0
        %1275 = vmatprep.subr.mxu0 0.0
        %1276 = vmatpush1.msra.mxu0 0.0
        %1277 = vmatprep.subr.mxu0 0.0
        %1278 = vmatpush1.msra.mxu0 0.0
        %1279 = vmatprep.subr.mxu0 0.0
        %1280 = vmatpush1.msra.mxu0 0.0
        %1281 = vmatprep.subr.mxu0 0.0
        %1282 = vmatpush1.msra.mxu0 0.0
        %1283 = vmatprep.subr.mxu0 0.0
        %1284 = vmatpush1.msra.mxu0 0.0
        %1285 = vmatprep.subr.mxu0 0.0
        %1286 = vmatpush1.msra.mxu0 0.0
        %1287 = vmatprep.subr.mxu0 0.0
        %1288 = vmatpush1.msra.mxu0 0.0
        %1289 = vmatprep.subr.mxu0 0.0
        %1290 = vmatpush1.msra.mxu0 0.0
        %1291 = vmatprep.subr.mxu0 0.0
        %1292 = vmatpush1.msra.mxu0 0.0
        %1293 = vmatprep.subr.mxu0 0.0
        %1294 = vmatpush1.msra.mxu0 0.0
        %1295 = vmatprep.subr.mxu0 0.0
        %1296 = vmatpush1.msra.mxu0 0.0
        %1297 = vmatprep.subr.mxu0 0.0
        %1298 = vmatpush1.msra.mxu0 0.0
        %1299 = vmatprep.subr.mxu0 0.0
        %1300 = vmatpush1.msra.mxu0 0.0
        %1301 = vmatprep.subr.mxu0 0.0
        %1302 = vmatpush1.msra.mxu0 0.0
        %1303 = vmatprep.subr.mxu0 0.0
        %1304 = vmatpush1.msra.mxu0 0.0
        %1305 = vmatprep.subr.mxu0 0.0
        %1306 = vmatpush1.msra.mxu0 0.0
        %1307 = vmatprep.subr.mxu0 0.0
        %1308 = vmatpush1.msra.mxu0 0.0
        %1309 = vmatprep.subr.mxu0 0.0
        %1310 = vmatpush1.msra.mxu0 0.0
        %1311 = vmatprep.subr.mxu0 0.0
        %1312 = vmatpush1.msra.mxu0 0.0
        %1313 = vmatprep.subr.mxu0 0.0
        %1314 = vmatpush1.msra.mxu0 0.0
        %1315 = vmatprep.subr.mxu0 0.0
        %1316 = vmatpush1.msra.mxu0 0.0
        %1317 = vmatprep.subr.mxu0 0.0
        %1318 = vmatpush1.msra.mxu0 0.0
        %1319 = vmatprep.subr.mxu0 0.0
        %1320 = vmatpush1.msra.mxu0 0.0
        %1321 = vmatprep.subr.mxu0 0.0
        %1322 = vmatpush1.msra.mxu0 0.0
        %1323 = vmatprep.subr.mxu0 0.0
        %1324 = vmatpush1.msra.mxu0 0.0
        %1325 = vmatprep.subr.mxu0 0.0
        %1326 = vmatpush1.msra.mxu0 0.0
        %1327 = vmatprep.subr.mxu0 0.0
        %1328 = vmatpush1.msra.mxu0 0.0
        %1329 = vmatprep.subr.mxu0 0.0
        %1330 = vmatpush1.msra.mxu0 0.0
        %1331 = vmatprep.subr.mxu0 0.0
        %1332 = vmatpush1.msra.mxu0 0.0
        %1333 = vmatprep.mubr.f32.mxu0 0.0
        %v1334 = vand.u32 %v930, 4294901760
        %1335 = vmatmul.mubr.f32.gmra.mrb[0].mxu0 %v1334
        %v1336 = vpop.f32.mrb[0].mxu0
        %v1337 = vadd.f32 %v1255, %v1336
        %v1338 = vpop.f32.mrb[0].mxu0
        %1339 = vmatprep.mubr.f32.mxu0 0.0
        %v1340 = vand.u32 %v933, 4294901760
        %1341 = vmatmul.mubr.f32.gmra.mrb[0].mxu0 %v1340
        %v1342 = vpop.f32.mrb[0].mxu0
        %v1343 = vadd.f32 %v1263, %v1342
        %v1344 = vpop.f32.mrb[0].mxu0
        %1345 = vdwg.mxu0
        %1346 = vmatprep.subr.mxu0 0.0
        %v1347 = vand.u32 %v421, 4294901760
        %1348 = vmatpush1.msra.mxu0 %v1347
        %1349 = vmatprep.subr.mxu0 0.0
        %1350 = vmatpush1.msra.mxu0 0.0
        %1351 = vmatprep.subr.mxu0 0.0
        %1352 = vmatpush1.msra.mxu0 0.0
        %1353 = vmatprep.subr.mxu0 0.0
        %1354 = vmatpush1.msra.mxu0 0.0
        %1355 = vmatprep.subr.mxu0 0.0
        %1356 = vmatpush1.msra.mxu0 0.0
        %1357 = vmatprep.subr.mxu0 0.0
        %1358 = vmatpush1.msra.mxu0 0.0
        %1359 = vmatprep.subr.mxu0 0.0
        %1360 = vmatpush1.msra.mxu0 0.0
        %1361 = vmatprep.subr.mxu0 0.0
        %1362 = vmatpush1.msra.mxu0 0.0
        %1363 = vmatprep.subr.mxu0 0.0
        %1364 = vmatpush1.msra.mxu0 0.0
        %1365 = vmatprep.subr.mxu0 0.0
        %1366 = vmatpush1.msra.mxu0 0.0
        %1367 = vmatprep.subr.mxu0 0.0
        %1368 = vmatpush1.msra.mxu0 0.0
        %1369 = vmatprep.subr.mxu0 0.0
        %1370 = vmatpush1.msra.mxu0 0.0
        %1371 = vmatprep.subr.mxu0 0.0
        %1372 = vmatpush1.msra.mxu0 0.0
        %1373 = vmatprep.subr.mxu0 0.0
        %1374 = vmatpush1.msra.mxu0 0.0
        %1375 = vmatprep.subr.mxu0 0.0
        %1376 = vmatpush1.msra.mxu0 0.0
        %1377 = vmatprep.subr.mxu0 0.0
        %1378 = vmatpush1.msra.mxu0 0.0
        %1379 = vmatprep.subr.mxu0 0.0
        %1380 = vmatpush1.msra.mxu0 0.0
        %1381 = vmatprep.subr.mxu0 0.0
        %1382 = vmatpush1.msra.mxu0 0.0
        %1383 = vmatprep.subr.mxu0 0.0
        %1384 = vmatpush1.msra.mxu0 0.0
        %1385 = vmatprep.subr.mxu0 0.0
        %1386 = vmatpush1.msra.mxu0 0.0
        %1387 = vmatprep.subr.mxu0 0.0
        %1388 = vmatpush1.msra.mxu0 0.0
        %1389 = vmatprep.subr.mxu0 0.0
        %1390 = vmatpush1.msra.mxu0 0.0
        %1391 = vmatprep.subr.mxu0 0.0
        %1392 = vmatpush1.msra.mxu0 0.0
        %1393 = vmatprep.subr.mxu0 0.0
        %1394 = vmatpush1.msra.mxu0 0.0
        %1395 = vmatprep.subr.mxu0 0.0
        %1396 = vmatpush1.msra.mxu0 0.0
        %1397 = vmatprep.subr.mxu0 0.0
        %1398 = vmatpush1.msra.mxu0 0.0
        %1399 = vmatprep.subr.mxu0 0.0
        %1400 = vmatpush1.msra.mxu0 0.0
        %1401 = vmatprep.subr.mxu0 0.0
        %1402 = vmatpush1.msra.mxu0 0.0
        %1403 = vmatprep.subr.mxu0 0.0
        %1404 = vmatpush1.msra.mxu0 0.0
        %1405 = vmatprep.subr.mxu0 0.0
        %1406 = vmatpush1.msra.mxu0 0.0
        %1407 = vmatprep.subr.mxu0 0.0
        %1408 = vmatpush1.msra.mxu0 0.0
        %1409 = vmatprep.subr.mxu0 0.0
        %1410 = vmatpush1.msra.mxu0 0.0
        %1411 = vmatprep.mubr.f32.mxu0 0.0
        %v1412 = vand.u32 %v930, 4294901760
        %1413 = vmatmul.mubr.f32.gmra.mrb[0].mxu0 %v1412
        %v1414 = vpop.f32.mrb[0].mxu0
        %v1415 = vadd.f32 %v1337, %v1414
        %v1416 = vpop.f32.mrb[0].mxu0
        %1417 = vmatprep.mubr.f32.mxu0 0.0
        %v1418 = vand.u32 %v933, 4294901760
        %1419 = vmatmul.mubr.f32.gmra.mrb[0].mxu0 %v1418
        %v1420 = vpop.f32.mrb[0].mxu0
        %v1421 = vadd.f32 %v1343, %v1420
        %v1422 = vpop.f32.mrb[0].mxu0
        %1423 = vdwg.mxu0
        %v1424 = vtanh.pop %v1415
        %1426 = vset.pattern.permute.xlu0 0
        %1427 = vperm.xlu0 %1426, %v422
        %v1428 = vpop.permute.xlu0 %1427
        %1431 = vset.pattern.permute.xlu0 0
        %1432 = vperm.xlu0 %1431, %v423
        %v1433 = vpop.permute.xlu0 %1432
        %v1435 = vlaneseq
        %v1436 = vshrl.u32 %v1435, 7
        %v1437 = vsub.s32 0, %v1436
        %v1438 = vrot.slane %v1424, %v1437
        %v1439 = vmul.f32 %v1428, %v1438
        %v1440 = vmul.f32 %v1433, %v1438
        %v1441 = vadd.f32 %v1415, %v1439
        %v1442 = vadd.f32 %v1421, %v1440
        %v1443 = vtanh.pop %v1441
        %1444 = vset.pattern.permute.xlu0 1
        %1445 = vperm.xlu0 %1444, %v422
        %v1446 = vpop.permute.xlu0 %1445
        %1448 = vset.pattern.permute.xlu0 1
        %1449 = vperm.xlu0 %1448, %v423
        %v1450 = vpop.permute.xlu0 %1449
        %v1452 = vlaneseq
        %v1453 = vshrl.u32 %v1452, 7
        %v1454 = vsub.s32 1, %v1453
        %v1455 = vrot.slane %v1443, %v1454
        %v1456 = vmul.f32 %v1446, %v1455
        %v1457 = vmul.f32 %v1450, %v1455
        %v1458 = vadd.f32 %v1441, %v1456
        %v1459 = vadd.f32 %v1442, %v1457
        %v1460 = vtanh.pop %v1458
        %1461 = vset.pattern.permute.xlu0 2
        %1462 = vperm.xlu0 %1461, %v422
        %v1463 = vpop.permute.xlu0 %1462
        %1465 = vset.pattern.permute.xlu0 2
        %1466 = vperm.xlu0 %1465, %v423
        %v1467 = vpop.permute.xlu0 %1466
        %v1469 = vlaneseq
        %v1470 = vshrl.u32 %v1469, 7
        %v1471 = vsub.s32 2, %v1470
        %v1472 = vrot.slane %v1460, %v1471
        %v1473 = vmul.f32 %v1463, %v1472
        %v1474 = vmul.f32 %v1467, %v1472
        %v1475 = vadd.f32 %v1458, %v1473
        %v1476 = vadd.f32 %v1459, %v1474
        %v1477 = vtanh.pop %v1475
        %1478 = vset.pattern.permute.xlu0 3
        %1479 = vperm.xlu0 %1478, %v422
        %v1480 = vpop.permute.xlu0 %1479
        %1482 = vset.pattern.permute.xlu0 3
        %1483 = vperm.xlu0 %1482, %v423
        %v1484 = vpop.permute.xlu0 %1483
        %v1486 = vlaneseq
        %v1487 = vshrl.u32 %v1486, 7
        %v1488 = vsub.s32 3, %v1487
        %v1489 = vrot.slane %v1477, %v1488
        %v1490 = vmul.f32 %v1480, %v1489
        %v1491 = vmul.f32 %v1484, %v1489
        %v1492 = vadd.f32 %v1475, %v1490
        %v1493 = vadd.f32 %v1476, %v1491
        %v1494 = vtanh.pop %v1492
        %1495 = vset.pattern.permute.xlu0 4
        %1496 = vperm.xlu0 %1495, %v422
        %v1497 = vpop.permute.xlu0 %1496
        %1499 = vset.pattern.permute.xlu0 4
        %1500 = vperm.xlu0 %1499, %v423
        %v1501 = vpop.permute.xlu0 %1500
        %v1503 = vlaneseq
        %v1504 = vshrl.u32 %v1503, 7
        %v1505 = vsub.s32 4, %v1504
        %v1506 = vrot.slane %v1494, %v1505
        %v1507 = vmul.f32 %v1497, %v1506
        %v1508 = vmul.f32 %v1501, %v1506
        %v1509 = vadd.f32 %v1492, %v1507
        %v1510 = vadd.f32 %v1493, %v1508
        %v1511 = vtanh.pop %v1509
        %1512 = vset.pattern.permute.xlu0 5
        %1513 = vperm.xlu0 %1512, %v422
        %v1514 = vpop.permute.xlu0 %1513
        %1516 = vset.pattern.permute.xlu0 5
        %1517 = vperm.xlu0 %1516, %v423
        %v1518 = vpop.permute.xlu0 %1517
        %v1520 = vlaneseq
        %v1521 = vshrl.u32 %v1520, 7
        %v1522 = vsub.s32 5, %v1521
        %v1523 = vrot.slane %v1511, %v1522
        %v1524 = vmul.f32 %v1514, %v1523
        %v1525 = vmul.f32 %v1518, %v1523
        %v1526 = vadd.f32 %v1509, %v1524
        %v1527 = vadd.f32 %v1510, %v1525
        %v1528 = vtanh.pop %v1526
        %1529 = vset.pattern.permute.xlu0 6
        %1530 = vperm.xlu0 %1529, %v422
        %v1531 = vpop.permute.xlu0 %1530
        %1533 = vset.pattern.permute.xlu0 6
        %1534 = vperm.xlu0 %1533, %v423
        %v1535 = vpop.permute.xlu0 %1534
        %v1537 = vlaneseq
        %v1538 = vshrl.u32 %v1537, 7
        %v1539 = vsub.s32 6, %v1538
        %v1540 = vrot.slane %v1528, %v1539
        %v1541 = vmul.f32 %v1531, %v1540
        %v1542 = vmul.f32 %v1535, %v1540
        %v1543 = vadd.f32 %v1526, %v1541
        %v1544 = vadd.f32 %v1527, %v1542
        %v1545 = vtanh.pop %v1543
        %1546 = vset.pattern.permute.xlu0 7
        %1547 = vperm.xlu0 %1546, %v423
        %v1548 = vpop.permute.xlu0 %1547
        %v1550 = vlaneseq
        %v1551 = vshrl.u32 %v1550, 7
        %v1552 = vsub.s32 7, %v1551
        %v1553 = vrot.slane %v1545, %v1552
        %v1554 = vmul.f32 %v1548, %v1553
        %v1555 = vadd.f32 %v1544, %v1554
        %v1556 = vld [vmem:[%s5] sm:$0xff]
        %v1557 = vld [vmem:[%s6] sm:$0xff]
        %v1559 = vsel %vm928, %v1557, 0
        %1561 = vmatprep.subr.mxu0 0.0
        %v1562 = vand.u32 %v1555, 4294901760
        %1563 = vmatpush1.msra.mxu0 %v1562
        %1564 = vmatprep.subr.mxu0 0.0
        %1565 = vmatpush1.msra.mxu0 0.0
        %1566 = vmatprep.subr.mxu0 0.0
        %1567 = vmatpush1.msra.mxu0 0.0
        %1568 = vmatprep.subr.mxu0 0.0
        %1569 = vmatpush1.msra.mxu0 0.0
        %1570 = vmatprep.subr.mxu0 0.0
        %1571 = vmatpush1.msra.mxu0 0.0
        %1572 = vmatprep.subr.mxu0 0.0
        %1573 = vmatpush1.msra.mxu0 0.0
        %1574 = vmatprep.subr.mxu0 0.0
        %1575 = vmatpush1.msra.mxu0 0.0
        %1576 = vmatprep.subr.mxu0 0.0
        %1577 = vmatpush1.msra.mxu0 0.0
        %1578 = vmatprep.subr.mxu0 0.0
        %1579 = vmatpush1.msra.mxu0 0.0
        %1580 = vmatprep.subr.mxu0 0.0
        %1581 = vmatpush1.msra.mxu0 0.0
        %1582 = vmatprep.subr.mxu0 0.0
        %1583 = vmatpush1.msra.mxu0 0.0
        %1584 = vmatprep.subr.mxu0 0.0
        %1585 = vmatpush1.msra.mxu0 0.0
        %1586 = vmatprep.subr.mxu0 0.0
        %1587 = vmatpush1.msra.mxu0 0.0
        %1588 = vmatprep.subr.mxu0 0.0
        %1589 = vmatpush1.msra.mxu0 0.0
        %1590 = vmatprep.subr.mxu0 0.0
        %1591 = vmatpush1.msra.mxu0 0.0
        %1592 = vmatprep.subr.mxu0 0.0
        %1593 = vmatpush1.msra.mxu0 0.0
        %1594 = vmatprep.subr.mxu0 0.0
        %1595 = vmatpush1.msra.mxu0 0.0
        %1596 = vmatprep.subr.mxu0 0.0
        %1597 = vmatpush1.msra.mxu0 0.0
        %1598 = vmatprep.subr.mxu0 0.0
        %1599 = vmatpush1.msra.mxu0 0.0
        %1600 = vmatprep.subr.mxu0 0.0
        %1601 = vmatpush1.msra.mxu0 0.0
        %1602 = vmatprep.subr.mxu0 0.0
        %1603 = vmatpush1.msra.mxu0 0.0
        %1604 = vmatprep.subr.mxu0 0.0
        %1605 = vmatpush1.msra.mxu0 0.0
        %1606 = vmatprep.subr.mxu0 0.0
        %1607 = vmatpush1.msra.mxu0 0.0
        %1608 = vmatprep.subr.mxu0 0.0
        %1609 = vmatpush1.msra.mxu0 0.0
        %1610 = vmatprep.subr.mxu0 0.0
        %1611 = vmatpush1.msra.mxu0 0.0
        %1612 = vmatprep.subr.mxu0 0.0
        %1613 = vmatpush1.msra.mxu0 0.0
        %1614 = vmatprep.subr.mxu0 0.0
        %1615 = vmatpush1.msra.mxu0 0.0
        %1616 = vmatprep.subr.mxu0 0.0
        %1617 = vmatpush1.msra.mxu0 0.0
        %1618 = vmatprep.subr.mxu0 0.0
        %1619 = vmatpush1.msra.mxu0 0.0
        %1620 = vmatprep.subr.mxu0 0.0
        %1621 = vmatpush1.msra.mxu0 0.0
        %1622 = vmatprep.subr.mxu0 0.0
        %1623 = vmatpush1.msra.mxu0 0.0
        %1624 = vmatprep.subr.mxu0 0.0
        %1625 = vmatpush1.msra.mxu0 0.0
        %1626 = vmatprep.mubr.f32.mxu0 0.0
        %v1627 = vand.u32 %v1559, 4294901760
        %v1628 = vsub.f32 %v1559, %v1627
        %v1629 = vand.u32 %v1628, 4294901760
        %v1630 = vsub.f32 %v1628, %v1629
        %v1631 = vand.u32 %v1630, 4294901760
        %1632 = vmatmul.mubr.f32.gmra.mrb[0].mxu0 %v1631
        %v1633 = vpop.f32.mrb[0].mxu0
        %v1634 = vadd.f32 0.0, %v1633
        %v1635 = vpop.f32.mrb[0].mxu0
        %1636 = vdwg.mxu0
        %1637 = vmatprep.subr.mxu0 0.0
        %v1638 = vand.u32 %v1555, 4294901760
        %v1639 = vsub.f32 %v1555, %v1638
        %v1640 = vand.u32 %v1639, 4294901760
        %v1641 = vsub.f32 %v1639, %v1640
        %v1642 = vand.u32 %v1641, 4294901760
        %1643 = vmatpush1.msra.mxu0 %v1642
        %1644 = vmatprep.subr.mxu0 0.0
        %1645 = vmatpush1.msra.mxu0 0.0
        %1646 = vmatprep.subr.mxu0 0.0
        %1647 = vmatpush1.msra.mxu0 0.0
        %1648 = vmatprep.subr.mxu0 0.0
        %1649 = vmatpush1.msra.mxu0 0.0
        %1650 = vmatprep.subr.mxu0 0.0
        %1651 = vmatpush1.msra.mxu0 0.0
        %1652 = vmatprep.subr.mxu0 0.0
        %1653 = vmatpush1.msra.mxu0 0.0
        %1654 = vmatprep.subr.mxu0 0.0
        %1655 = vmatpush1.msra.mxu0 0.0
        %1656 = vmatprep.subr.mxu0 0.0
        %1657 = vmatpush1.msra.mxu0 0.0
        %1658 = vmatprep.subr.mxu0 0.0
        %1659 = vmatpush1.msra.mxu0 0.0
        %1660 = vmatprep.subr.mxu0 0.0
        %1661 = vmatpush1.msra.mxu0 0.0
        %1662 = vmatprep.subr.mxu0 0.0
        %1663 = vmatpush1.msra.mxu0 0.0
        %1664 = vmatprep.subr.mxu0 0.0
        %1665 = vmatpush1.msra.mxu0 0.0
        %1666 = vmatprep.subr.mxu0 0.0
        %1667 = vmatpush1.msra.mxu0 0.0
        %1668 = vmatprep.subr.mxu0 0.0
        %1669 = vmatpush1.msra.mxu0 0.0
        %1670 = vmatprep.subr.mxu0 0.0
        %1671 = vmatpush1.msra.mxu0 0.0
        %1672 = vmatprep.subr.mxu0 0.0
        %1673 = vmatpush1.msra.mxu0 0.0
        %1674 = vmatprep.subr.mxu0 0.0
        %1675 = vmatpush1.msra.mxu0 0.0
        %1676 = vmatprep.subr.mxu0 0.0
        %1677 = vmatpush1.msra.mxu0 0.0
        %1678 = vmatprep.subr.mxu0 0.0
        %1679 = vmatpush1.msra.mxu0 0.0
        %1680 = vmatprep.subr.mxu0 0.0
        %1681 = vmatpush1.msra.mxu0 0.0
        %1682 = vmatprep.subr.mxu0 0.0
        %1683 = vmatpush1.msra.mxu0 0.0
        %1684 = vmatprep.subr.mxu0 0.0
        %1685 = vmatpush1.msra.mxu0 0.0
        %1686 = vmatprep.subr.mxu0 0.0
        %1687 = vmatpush1.msra.mxu0 0.0
        %1688 = vmatprep.subr.mxu0 0.0
        %1689 = vmatpush1.msra.mxu0 0.0
        %1690 = vmatprep.subr.mxu0 0.0
        %1691 = vmatpush1.msra.mxu0 0.0
        %1692 = vmatprep.subr.mxu0 0.0
        %1693 = vmatpush1.msra.mxu0 0.0
        %1694 = vmatprep.subr.mxu0 0.0
        %1695 = vmatpush1.msra.mxu0 0.0
        %1696 = vmatprep.subr.mxu0 0.0
        %1697 = vmatpush1.msra.mxu0 0.0
        %1698 = vmatprep.subr.mxu0 0.0
        %1699 = vmatpush1.msra.mxu0 0.0
        %1700 = vmatprep.subr.mxu0 0.0
        %1701 = vmatpush1.msra.mxu0 0.0
        %1702 = vmatprep.subr.mxu0 0.0
        %1703 = vmatpush1.msra.mxu0 0.0
        %1704 = vmatprep.subr.mxu0 0.0
        %1705 = vmatpush1.msra.mxu0 0.0
        %1706 = vmatprep.mubr.f32.mxu0 0.0
        %v1707 = vand.u32 %v1559, 4294901760
        %1708 = vmatmul.mubr.f32.gmra.mrb[0].mxu0 %v1707
        %v1709 = vpop.f32.mrb[0].mxu0
        %v1710 = vadd.f32 %v1634, %v1709
        %v1711 = vpop.f32.mrb[0].mxu0
        %1712 = vdwg.mxu0
        %1713 = vmatprep.subr.mxu0 0.0
        %v1714 = vand.u32 %v1555, 4294901760
        %v1715 = vsub.f32 %v1555, %v1714
        %1716 = vmatpush1.msra.mxu0 %v1715
        %1717 = vmatprep.subr.mxu0 0.0
        %1718 = vmatpush1.msra.mxu0 0.0
        %1719 = vmatprep.subr.mxu0 0.0
        %1720 = vmatpush1.msra.mxu0 0.0
        %1721 = vmatprep.subr.mxu0 0.0
        %1722 = vmatpush1.msra.mxu0 0.0
        %1723 = vmatprep.subr.mxu0 0.0
        %1724 = vmatpush1.msra.mxu0 0.0
        %1725 = vmatprep.subr.mxu0 0.0
        %1726 = vmatpush1.msra.mxu0 0.0
        %1727 = vmatprep.subr.mxu0 0.0
        %1728 = vmatpush1.msra.mxu0 0.0
        %1729 = vmatprep.subr.mxu0 0.0
        %1730 = vmatpush1.msra.mxu0 0.0
        %1731 = vmatprep.subr.mxu0 0.0
        %1732 = vmatpush1.msra.mxu0 0.0
        %1733 = vmatprep.subr.mxu0 0.0
        %1734 = vmatpush1.msra.mxu0 0.0
        %1735 = vmatprep.subr.mxu0 0.0
        %1736 = vmatpush1.msra.mxu0 0.0
        %1737 = vmatprep.subr.mxu0 0.0
        %1738 = vmatpush1.msra.mxu0 0.0
        %1739 = vmatprep.subr.mxu0 0.0
        %1740 = vmatpush1.msra.mxu0 0.0
        %1741 = vmatprep.subr.mxu0 0.0
        %1742 = vmatpush1.msra.mxu0 0.0
        %1743 = vmatprep.subr.mxu0 0.0
        %1744 = vmatpush1.msra.mxu0 0.0
        %1745 = vmatprep.subr.mxu0 0.0
        %1746 = vmatpush1.msra.mxu0 0.0
        %1747 = vmatprep.subr.mxu0 0.0
        %1748 = vmatpush1.msra.mxu0 0.0
        %1749 = vmatprep.subr.mxu0 0.0
        %1750 = vmatpush1.msra.mxu0 0.0
        %1751 = vmatprep.subr.mxu0 0.0
        %1752 = vmatpush1.msra.mxu0 0.0
        %1753 = vmatprep.subr.mxu0 0.0
        %1754 = vmatpush1.msra.mxu0 0.0
        %1755 = vmatprep.subr.mxu0 0.0
        %1756 = vmatpush1.msra.mxu0 0.0
        %1757 = vmatprep.subr.mxu0 0.0
        %1758 = vmatpush1.msra.mxu0 0.0
        %1759 = vmatprep.subr.mxu0 0.0
        %1760 = vmatpush1.msra.mxu0 0.0
        %1761 = vmatprep.subr.mxu0 0.0
        %1762 = vmatpush1.msra.mxu0 0.0
        %1763 = vmatprep.subr.mxu0 0.0
        %1764 = vmatpush1.msra.mxu0 0.0
        %1765 = vmatprep.subr.mxu0 0.0
        %1766 = vmatpush1.msra.mxu0 0.0
        %1767 = vmatprep.subr.mxu0 0.0
        %1768 = vmatpush1.msra.mxu0 0.0
        %1769 = vmatprep.subr.mxu0 0.0
        %1770 = vmatpush1.msra.mxu0 0.0
        %1771 = vmatprep.subr.mxu0 0.0
        %1772 = vmatpush1.msra.mxu0 0.0
        %1773 = vmatprep.subr.mxu0 0.0
        %1774 = vmatpush1.msra.mxu0 0.0
        %1775 = vmatprep.subr.mxu0 0.0
        %1776 = vmatpush1.msra.mxu0 0.0
        %1777 = vmatprep.subr.mxu0 0.0
        %1778 = vmatpush1.msra.mxu0 0.0
        %1779 = vmatprep.mubr.f32.mxu0 0.0
        %v1780 = vand.u32 %v1559, 4294901760
        %v1781 = vsub.f32 %v1559, %v1780
        %1782 = vmatmul.mubr.f32.gmra.mrb[0].mxu0 %v1781
        %v1783 = vpop.f32.mrb[0].mxu0
        %v1784 = vadd.f32 %v1710, %v1783
        %v1785 = vpop.f32.mrb[0].mxu0
        %1786 = vdwg.mxu0
        %1787 = vmatprep.subr.mxu0 0.0
        %v1788 = vand.u32 %v1555, 4294901760
        %1789 = vmatpush1.msra.mxu0 %v1788
        %1790 = vmatprep.subr.mxu0 0.0
        %1791 = vmatpush1.msra.mxu0 0.0
        %1792 = vmatprep.subr.mxu0 0.0
        %1793 = vmatpush1.msra.mxu0 0.0
        %1794 = vmatprep.subr.mxu0 0.0
        %1795 = vmatpush1.msra.mxu0 0.0
        %1796 = vmatprep.subr.mxu0 0.0
        %1797 = vmatpush1.msra.mxu0 0.0
        %1798 = vmatprep.subr.mxu0 0.0
        %1799 = vmatpush1.msra.mxu0 0.0
        %1800 = vmatprep.subr.mxu0 0.0
        %1801 = vmatpush1.msra.mxu0 0.0
        %1802 = vmatprep.subr.mxu0 0.0
        %1803 = vmatpush1.msra.mxu0 0.0
        %1804 = vmatprep.subr.mxu0 0.0
        %1805 = vmatpush1.msra.mxu0 0.0
        %1806 = vmatprep.subr.mxu0 0.0
        %1807 = vmatpush1.msra.mxu0 0.0
        %1808 = vmatprep.subr.mxu0 0.0
        %1809 = vmatpush1.msra.mxu0 0.0
        %1810 = vmatprep.subr.mxu0 0.0
        %1811 = vmatpush1.msra.mxu0 0.0
        %1812 = vmatprep.subr.mxu0 0.0
        %1813 = vmatpush1.msra.mxu0 0.0
        %1814 = vmatprep.subr.mxu0 0.0
        %1815 = vmatpush1.msra.mxu0 0.0
        %1816 = vmatprep.subr.mxu0 0.0
        %1817 = vmatpush1.msra.mxu0 0.0
        %1818 = vmatprep.subr.mxu0 0.0
        %1819 = vmatpush1.msra.mxu0 0.0
        %1820 = vmatprep.subr.mxu0 0.0
        %1821 = vmatpush1.msra.mxu0 0.0
        %1822 = vmatprep.subr.mxu0 0.0
        %1823 = vmatpush1.msra.mxu0 0.0
        %1824 = vmatprep.subr.mxu0 0.0
        %1825 = vmatpush1.msra.mxu0 0.0
        %1826 = vmatprep.subr.mxu0 0.0
        %1827 = vmatpush1.msra.mxu0 0.0
        %1828 = vmatprep.subr.mxu0 0.0
        %1829 = vmatpush1.msra.mxu0 0.0
        %1830 = vmatprep.subr.mxu0 0.0
        %1831 = vmatpush1.msra.mxu0 0.0
        %1832 = vmatprep.subr.mxu0 0.0
        %1833 = vmatpush1.msra.mxu0 0.0
        %1834 = vmatprep.subr.mxu0 0.0
        %1835 = vmatpush1.msra.mxu0 0.0
        %1836 = vmatprep.subr.mxu0 0.0
        %1837 = vmatpush1.msra.mxu0 0.0
        %1838 = vmatprep.subr.mxu0 0.0
        %1839 = vmatpush1.msra.mxu0 0.0
        %1840 = vmatprep.subr.mxu0 0.0
        %1841 = vmatpush1.msra.mxu0 0.0
        %1842 = vmatprep.subr.mxu0 0.0
        %1843 = vmatpush1.msra.mxu0 0.0
        %1844 = vmatprep.subr.mxu0 0.0
        %1845 = vmatpush1.msra.mxu0 0.0
        %1846 = vmatprep.subr.mxu0 0.0
        %1847 = vmatpush1.msra.mxu0 0.0
        %1848 = vmatprep.subr.mxu0 0.0
        %1849 = vmatpush1.msra.mxu0 0.0
        %1850 = vmatprep.subr.mxu0 0.0
        %1851 = vmatpush1.msra.mxu0 0.0
        %1852 = vmatprep.mubr.f32.mxu0 0.0
        %v1853 = vand.u32 %v1559, 4294901760
        %v1854 = vsub.f32 %v1559, %v1853
        %v1855 = vand.u32 %v1854, 4294901760
        %1856 = vmatmul.mubr.f32.gmra.mrb[0].mxu0 %v1855
        %v1857 = vpop.f32.mrb[0].mxu0
        %v1858 = vadd.f32 %v1784, %v1857
        %v1859 = vpop.f32.mrb[0].mxu0
        %1860 = vdwg.mxu0
        %1861 = vmatprep.subr.mxu0 0.0
        %v1862 = vand.u32 %v1555, 4294901760
        %v1863 = vsub.f32 %v1555, %v1862
        %v1864 = vand.u32 %v1863, 4294901760
        %1865 = vmatpush1.msra.mxu0 %v1864
        %1866 = vmatprep.subr.mxu0 0.0
        %1867 = vmatpush1.msra.mxu0 0.0
        %1868 = vmatprep.subr.mxu0 0.0
        %1869 = vmatpush1.msra.mxu0 0.0
        %1870 = vmatprep.subr.mxu0 0.0
        %1871 = vmatpush1.msra.mxu0 0.0
        %1872 = vmatprep.subr.mxu0 0.0
        %1873 = vmatpush1.msra.mxu0 0.0
        %1874 = vmatprep.subr.mxu0 0.0
        %1875 = vmatpush1.msra.mxu0 0.0
        %1876 = vmatprep.subr.mxu0 0.0
        %1877 = vmatpush1.msra.mxu0 0.0
        %1878 = vmatprep.subr.mxu0 0.0
        %1879 = vmatpush1.msra.mxu0 0.0
        %1880 = vmatprep.subr.mxu0 0.0
        %1881 = vmatpush1.msra.mxu0 0.0
        %1882 = vmatprep.subr.mxu0 0.0
        %1883 = vmatpush1.msra.mxu0 0.0
        %1884 = vmatprep.subr.mxu0 0.0
        %1885 = vmatpush1.msra.mxu0 0.0
        %1886 = vmatprep.subr.mxu0 0.0
        %1887 = vmatpush1.msra.mxu0 0.0
        %1888 = vmatprep.subr.mxu0 0.0
        %1889 = vmatpush1.msra.mxu0 0.0
        %1890 = vmatprep.subr.mxu0 0.0
        %1891 = vmatpush1.msra.mxu0 0.0
        %1892 = vmatprep.subr.mxu0 0.0
        %1893 = vmatpush1.msra.mxu0 0.0
        %1894 = vmatprep.subr.mxu0 0.0
        %1895 = vmatpush1.msra.mxu0 0.0
        %1896 = vmatprep.subr.mxu0 0.0
        %1897 = vmatpush1.msra.mxu0 0.0
        %1898 = vmatprep.subr.mxu0 0.0
        %1899 = vmatpush1.msra.mxu0 0.0
        %1900 = vmatprep.subr.mxu0 0.0
        %1901 = vmatpush1.msra.mxu0 0.0
        %1902 = vmatprep.subr.mxu0 0.0
        %1903 = vmatpush1.msra.mxu0 0.0
        %1904 = vmatprep.subr.mxu0 0.0
        %1905 = vmatpush1.msra.mxu0 0.0
        %1906 = vmatprep.subr.mxu0 0.0
        %1907 = vmatpush1.msra.mxu0 0.0
        %1908 = vmatprep.subr.mxu0 0.0
        %1909 = vmatpush1.msra.mxu0 0.0
        %1910 = vmatprep.subr.mxu0 0.0
        %1911 = vmatpush1.msra.mxu0 0.0
        %1912 = vmatprep.subr.mxu0 0.0
        %1913 = vmatpush1.msra.mxu0 0.0
        %1914 = vmatprep.subr.mxu0 0.0
        %1915 = vmatpush1.msra.mxu0 0.0
        %1916 = vmatprep.subr.mxu0 0.0
        %1917 = vmatpush1.msra.mxu0 0.0
        %1918 = vmatprep.subr.mxu0 0.0
        %1919 = vmatpush1.msra.mxu0 0.0
        %1920 = vmatprep.subr.mxu0 0.0
        %1921 = vmatpush1.msra.mxu0 0.0
        %1922 = vmatprep.subr.mxu0 0.0
        %1923 = vmatpush1.msra.mxu0 0.0
        %1924 = vmatprep.subr.mxu0 0.0
        %1925 = vmatpush1.msra.mxu0 0.0
        %1926 = vmatprep.subr.mxu0 0.0
        %1927 = vmatpush1.msra.mxu0 0.0
        %1928 = vmatprep.mubr.f32.mxu0 0.0
        %v1929 = vand.u32 %v1559, 4294901760
        %1930 = vmatmul.mubr.f32.gmra.mrb[0].mxu0 %v1929
        %v1931 = vpop.f32.mrb[0].mxu0
        %v1932 = vadd.f32 %v1858, %v1931
        %v1933 = vpop.f32.mrb[0].mxu0
        %1934 = vdwg.mxu0
        %1935 = vmatprep.subr.mxu0 0.0
        %v1936 = vand.u32 %v1555, 4294901760
        %1937 = vmatpush1.msra.mxu0 %v1936
        %1938 = vmatprep.subr.mxu0 0.0
        %1939 = vmatpush1.msra.mxu0 0.0
        %1940 = vmatprep.subr.mxu0 0.0
        %1941 = vmatpush1.msra.mxu0 0.0
        %1942 = vmatprep.subr.mxu0 0.0
        %1943 = vmatpush1.msra.mxu0 0.0
        %1944 = vmatprep.subr.mxu0 0.0
        %1945 = vmatpush1.msra.mxu0 0.0
        %1946 = vmatprep.subr.mxu0 0.0
        %1947 = vmatpush1.msra.mxu0 0.0
        %1948 = vmatprep.subr.mxu0 0.0
        %1949 = vmatpush1.msra.mxu0 0.0
        %1950 = vmatprep.subr.mxu0 0.0
        %1951 = vmatpush1.msra.mxu0 0.0
        %1952 = vmatprep.subr.mxu0 0.0
        %1953 = vmatpush1.msra.mxu0 0.0
        %1954 = vmatprep.subr.mxu0 0.0
        %1955 = vmatpush1.msra.mxu0 0.0
        %1956 = vmatprep.subr.mxu0 0.0
        %1957 = vmatpush1.msra.mxu0 0.0
        %1958 = vmatprep.subr.mxu0 0.0
        %1959 = vmatpush1.msra.mxu0 0.0
        %1960 = vmatprep.subr.mxu0 0.0
        %1961 = vmatpush1.msra.mxu0 0.0
        %1962 = vmatprep.subr.mxu0 0.0
        %1963 = vmatpush1.msra.mxu0 0.0
        %1964 = vmatprep.subr.mxu0 0.0
        %1965 = vmatpush1.msra.mxu0 0.0
        %1966 = vmatprep.subr.mxu0 0.0
        %1967 = vmatpush1.msra.mxu0 0.0
        %1968 = vmatprep.subr.mxu0 0.0
        %1969 = vmatpush1.msra.mxu0 0.0
        %1970 = vmatprep.subr.mxu0 0.0
        %1971 = vmatpush1.msra.mxu0 0.0
        %1972 = vmatprep.subr.mxu0 0.0
        %1973 = vmatpush1.msra.mxu0 0.0
        %1974 = vmatprep.subr.mxu0 0.0
        %1975 = vmatpush1.msra.mxu0 0.0
        %1976 = vmatprep.subr.mxu0 0.0
        %1977 = vmatpush1.msra.mxu0 0.0
        %1978 = vmatprep.subr.mxu0 0.0
        %1979 = vmatpush1.msra.mxu0 0.0
        %1980 = vmatprep.subr.mxu0 0.0
        %1981 = vmatpush1.msra.mxu0 0.0
        %1982 = vmatprep.subr.mxu0 0.0
        %1983 = vmatpush1.msra.mxu0 0.0
        %1984 = vmatprep.subr.mxu0 0.0
        %1985 = vmatpush1.msra.mxu0 0.0
        %1986 = vmatprep.subr.mxu0 0.0
        %1987 = vmatpush1.msra.mxu0 0.0
        %1988 = vmatprep.subr.mxu0 0.0
        %1989 = vmatpush1.msra.mxu0 0.0
        %1990 = vmatprep.subr.mxu0 0.0
        %1991 = vmatpush1.msra.mxu0 0.0
        %1992 = vmatprep.subr.mxu0 0.0
        %1993 = vmatpush1.msra.mxu0 0.0
        %1994 = vmatprep.subr.mxu0 0.0
        %1995 = vmatpush1.msra.mxu0 0.0
        %1996 = vmatprep.subr.mxu0 0.0
        %1997 = vmatpush1.msra.mxu0 0.0
        %1998 = vmatprep.subr.mxu0 0.0
        %1999 = vmatpush1.msra.mxu0 0.0
        %2000 = vmatprep.mubr.f32.mxu0 0.0
        %v2001 = vand.u32 %v1559, 4294901760
        %2002 = vmatmul.mubr.f32.gmra.mrb[0].mxu0 %v2001
        %v2003 = vpop.f32.mrb[0].mxu0
        %v2004 = vadd.f32 %v1932, %v2003
        %v2005 = vpop.f32.mrb[0].mxu0
        %2006 = vdwg.mxu0
        %v2008 = vsel %vm928, %v1556, 0
        %2010 = vmatprep.subr.mxu0 0.0
        %v2011 = vand.u32 %v421, 4294901760
        %2012 = vmatpush1.msra.mxu0 %v2011
        %2013 = vmatprep.subr.mxu0 0.0
        %2014 = vmatpush1.msra.mxu0 0.0
        %2015 = vmatprep.subr.mxu0 0.0
        %2016 = vmatpush1.msra.mxu0 0.0
        %2017 = vmatprep.subr.mxu0 0.0
        %2018 = vmatpush1.msra.mxu0 0.0
        %2019 = vmatprep.subr.mxu0 0.0
        %2020 = vmatpush1.msra.mxu0 0.0
        %2021 = vmatprep.subr.mxu0 0.0
        %2022 = vmatpush1.msra.mxu0 0.0
        %2023 = vmatprep.subr.mxu0 0.0
        %2024 = vmatpush1.msra.mxu0 0.0
        %2025 = vmatprep.subr.mxu0 0.0
        %2026 = vmatpush1.msra.mxu0 0.0
        %2027 = vmatprep.subr.mxu0 0.0
        %2028 = vmatpush1.msra.mxu0 0.0
        %2029 = vmatprep.subr.mxu0 0.0
        %2030 = vmatpush1.msra.mxu0 0.0
        %2031 = vmatprep.subr.mxu0 0.0
        %2032 = vmatpush1.msra.mxu0 0.0
        %2033 = vmatprep.subr.mxu0 0.0
        %2034 = vmatpush1.msra.mxu0 0.0
        %2035 = vmatprep.subr.mxu0 0.0
        %2036 = vmatpush1.msra.mxu0 0.0
        %2037 = vmatprep.subr.mxu0 0.0
        %2038 = vmatpush1.msra.mxu0 0.0
        %2039 = vmatprep.subr.mxu0 0.0
        %2040 = vmatpush1.msra.mxu0 0.0
        %2041 = vmatprep.subr.mxu0 0.0
        %2042 = vmatpush1.msra.mxu0 0.0
        %2043 = vmatprep.subr.mxu0 0.0
        %2044 = vmatpush1.msra.mxu0 0.0
        %2045 = vmatprep.subr.mxu0 0.0
        %2046 = vmatpush1.msra.mxu0 0.0
        %2047 = vmatprep.subr.mxu0 0.0
        %2048 = vmatpush1.msra.mxu0 0.0
        %2049 = vmatprep.subr.mxu0 0.0
        %2050 = vmatpush1.msra.mxu0 0.0
        %2051 = vmatprep.subr.mxu0 0.0
        %2052 = vmatpush1.msra.mxu0 0.0
        %2053 = vmatprep.subr.mxu0 0.0
        %2054 = vmatpush1.msra.mxu0 0.0
        %2055 = vmatprep.subr.mxu0 0.0
        %2056 = vmatpush1.msra.mxu0 0.0
        %2057 = vmatprep.subr.mxu0 0.0
        %2058 = vmatpush1.msra.mxu0 0.0
        %2059 = vmatprep.subr.mxu0 0.0
        %2060 = vmatpush1.msra.mxu0 0.0
        %2061 = vmatprep.subr.mxu0 0.0
        %2062 = vmatpush1.msra.mxu0 0.0
        %2063 = vmatprep.subr.mxu0 0.0
        %2064 = vmatpush1.msra.mxu0 0.0
        %2065 = vmatprep.subr.mxu0 0.0
        %2066 = vmatpush1.msra.mxu0 0.0
        %2067 = vmatprep.subr.mxu0 0.0
        %2068 = vmatpush1.msra.mxu0 0.0
        %2069 = vmatprep.subr.mxu0 0.0
        %2070 = vmatpush1.msra.mxu0 0.0
        %2071 = vmatprep.subr.mxu0 0.0
        %2072 = vmatpush1.msra.mxu0 0.0
        %2073 = vmatprep.subr.mxu0 0.0
        %2074 = vmatpush1.msra.mxu0 0.0
        %2075 = vmatprep.mubr.f32.mxu0 0.0
        %v2076 = vand.u32 %v2008, 4294901760
        %v2077 = vsub.f32 %v2008, %v2076
        %v2078 = vand.u32 %v2077, 4294901760
        %v2079 = vsub.f32 %v2077, %v2078
        %v2080 = vand.u32 %v2079, 4294901760
        %2081 = vmatmul.mubr.f32.gmra.mrb[0].mxu0 %v2080
        %v2082 = vpop.f32.mrb[0].mxu0
        %v2083 = vadd.f32 %v2004, %v2082
        %v2084 = vpop.f32.mrb[0].mxu0
        %2085 = vdwg.mxu0
        %2086 = vmatprep.subr.mxu0 0.0
        %v2087 = vand.u32 %v421, 4294901760
        %v2088 = vsub.f32 %v421, %v2087
        %v2089 = vand.u32 %v2088, 4294901760
        %v2090 = vsub.f32 %v2088, %v2089
        %v2091 = vand.u32 %v2090, 4294901760
        %2092 = vmatpush1.msra.mxu0 %v2091
        %2093 = vmatprep.subr.mxu0 0.0
        %2094 = vmatpush1.msra.mxu0 0.0
        %2095 = vmatprep.subr.mxu0 0.0
        %2096 = vmatpush1.msra.mxu0 0.0
        %2097 = vmatprep.subr.mxu0 0.0
        %2098 = vmatpush1.msra.mxu0 0.0
        %2099 = vmatprep.subr.mxu0 0.0
        %2100 = vmatpush1.msra.mxu0 0.0
        %2101 = vmatprep.subr.mxu0 0.0
        %2102 = vmatpush1.msra.mxu0 0.0
        %2103 = vmatprep.subr.mxu0 0.0
        %2104 = vmatpush1.msra.mxu0 0.0
        %2105 = vmatprep.subr.mxu0 0.0
        %2106 = vmatpush1.msra.mxu0 0.0
        %2107 = vmatprep.subr.mxu0 0.0
        %2108 = vmatpush1.msra.mxu0 0.0
        %2109 = vmatprep.subr.mxu0 0.0
        %2110 = vmatpush1.msra.mxu0 0.0
        %2111 = vmatprep.subr.mxu0 0.0
        %2112 = vmatpush1.msra.mxu0 0.0
        %2113 = vmatprep.subr.mxu0 0.0
        %2114 = vmatpush1.msra.mxu0 0.0
        %2115 = vmatprep.subr.mxu0 0.0
        %2116 = vmatpush1.msra.mxu0 0.0
        %2117 = vmatprep.subr.mxu0 0.0
        %2118 = vmatpush1.msra.mxu0 0.0
        %2119 = vmatprep.subr.mxu0 0.0
        %2120 = vmatpush1.msra.mxu0 0.0
        %2121 = vmatprep.subr.mxu0 0.0
        %2122 = vmatpush1.msra.mxu0 0.0
        %2123 = vmatprep.subr.mxu0 0.0
        %2124 = vmatpush1.msra.mxu0 0.0
        %2125 = vmatprep.subr.mxu0 0.0
        %2126 = vmatpush1.msra.mxu0 0.0
        %2127 = vmatprep.subr.mxu0 0.0
        %2128 = vmatpush1.msra.mxu0 0.0
        %2129 = vmatprep.subr.mxu0 0.0
        %2130 = vmatpush1.msra.mxu0 0.0
        %2131 = vmatprep.subr.mxu0 0.0
        %2132 = vmatpush1.msra.mxu0 0.0
        %2133 = vmatprep.subr.mxu0 0.0
        %2134 = vmatpush1.msra.mxu0 0.0
        %2135 = vmatprep.subr.mxu0 0.0
        %2136 = vmatpush1.msra.mxu0 0.0
        %2137 = vmatprep.subr.mxu0 0.0
        %2138 = vmatpush1.msra.mxu0 0.0
        %2139 = vmatprep.subr.mxu0 0.0
        %2140 = vmatpush1.msra.mxu0 0.0
        %2141 = vmatprep.subr.mxu0 0.0
        %2142 = vmatpush1.msra.mxu0 0.0
        %2143 = vmatprep.subr.mxu0 0.0
        %2144 = vmatpush1.msra.mxu0 0.0
        %2145 = vmatprep.subr.mxu0 0.0
        %2146 = vmatpush1.msra.mxu0 0.0
        %2147 = vmatprep.subr.mxu0 0.0
        %2148 = vmatpush1.msra.mxu0 0.0
        %2149 = vmatprep.subr.mxu0 0.0
        %2150 = vmatpush1.msra.mxu0 0.0
        %2151 = vmatprep.subr.mxu0 0.0
        %2152 = vmatpush1.msra.mxu0 0.0
        %2153 = vmatprep.subr.mxu0 0.0
        %2154 = vmatpush1.msra.mxu0 0.0
        %2155 = vmatprep.mubr.f32.mxu0 0.0
        %v2156 = vand.u32 %v2008, 4294901760
        %2157 = vmatmul.mubr.f32.gmra.mrb[0].mxu0 %v2156
        %v2158 = vpop.f32.mrb[0].mxu0
        %v2159 = vadd.f32 %v2083, %v2158
        %v2160 = vpop.f32.mrb[0].mxu0
        %2161 = vdwg.mxu0
        %2162 = vmatprep.subr.mxu0 0.0
        %v2163 = vand.u32 %v421, 4294901760
        %v2164 = vsub.f32 %v421, %v2163
        %2165 = vmatpush1.msra.mxu0 %v2164
        %2166 = vmatprep.subr.mxu0 0.0
        %2167 = vmatpush1.msra.mxu0 0.0
        %2168 = vmatprep.subr.mxu0 0.0
        %2169 = vmatpush1.msra.mxu0 0.0
        %2170 = vmatprep.subr.mxu0 0.0
        %2171 = vmatpush1.msra.mxu0 0.0
        %2172 = vmatprep.subr.mxu0 0.0
        %2173 = vmatpush1.msra.mxu0 0.0
        %2174 = vmatprep.subr.mxu0 0.0
        %2175 = vmatpush1.msra.mxu0 0.0
        %2176 = vmatprep.subr.mxu0 0.0
        %2177 = vmatpush1.msra.mxu0 0.0
        %2178 = vmatprep.subr.mxu0 0.0
        %2179 = vmatpush1.msra.mxu0 0.0
        %2180 = vmatprep.subr.mxu0 0.0
        %2181 = vmatpush1.msra.mxu0 0.0
        %2182 = vmatprep.subr.mxu0 0.0
        %2183 = vmatpush1.msra.mxu0 0.0
        %2184 = vmatprep.subr.mxu0 0.0
        %2185 = vmatpush1.msra.mxu0 0.0
        %2186 = vmatprep.subr.mxu0 0.0
        %2187 = vmatpush1.msra.mxu0 0.0
        %2188 = vmatprep.subr.mxu0 0.0
        %2189 = vmatpush1.msra.mxu0 0.0
        %2190 = vmatprep.subr.mxu0 0.0
        %2191 = vmatpush1.msra.mxu0 0.0
        %2192 = vmatprep.subr.mxu0 0.0
        %2193 = vmatpush1.msra.mxu0 0.0
        %2194 = vmatprep.subr.mxu0 0.0
        %2195 = vmatpush1.msra.mxu0 0.0
        %2196 = vmatprep.subr.mxu0 0.0
        %2197 = vmatpush1.msra.mxu0 0.0
        %2198 = vmatprep.subr.mxu0 0.0
        %2199 = vmatpush1.msra.mxu0 0.0
        %2200 = vmatprep.subr.mxu0 0.0
        %2201 = vmatpush1.msra.mxu0 0.0
        %2202 = vmatprep.subr.mxu0 0.0
        %2203 = vmatpush1.msra.mxu0 0.0
        %2204 = vmatprep.subr.mxu0 0.0
        %2205 = vmatpush1.msra.mxu0 0.0
        %2206 = vmatprep.subr.mxu0 0.0
        %2207 = vmatpush1.msra.mxu0 0.0
        %2208 = vmatprep.subr.mxu0 0.0
        %2209 = vmatpush1.msra.mxu0 0.0
        %2210 = vmatprep.subr.mxu0 0.0
        %2211 = vmatpush1.msra.mxu0 0.0
        %2212 = vmatprep.subr.mxu0 0.0
        %2213 = vmatpush1.msra.mxu0 0.0
        %2214 = vmatprep.subr.mxu0 0.0
        %2215 = vmatpush1.msra.mxu0 0.0
        %2216 = vmatprep.subr.mxu0 0.0
        %2217 = vmatpush1.msra.mxu0 0.0
        %2218 = vmatprep.subr.mxu0 0.0
        %2219 = vmatpush1.msra.mxu0 0.0
        %2220 = vmatprep.subr.mxu0 0.0
        %2221 = vmatpush1.msra.mxu0 0.0
        %2222 = vmatprep.subr.mxu0 0.0
        %2223 = vmatpush1.msra.mxu0 0.0
        %2224 = vmatprep.subr.mxu0 0.0
        %2225 = vmatpush1.msra.mxu0 0.0
        %2226 = vmatprep.subr.mxu0 0.0
        %2227 = vmatpush1.msra.mxu0 0.0
        %2228 = vmatprep.mubr.f32.mxu0 0.0
        %v2229 = vand.u32 %v2008, 4294901760
        %v2230 = vsub.f32 %v2008, %v2229
        %2231 = vmatmul.mubr.f32.gmra.mrb[0].mxu0 %v2230
        %v2232 = vpop.f32.mrb[0].mxu0
        %v2233 = vadd.f32 %v2159, %v2232
        %v2234 = vpop.f32.mrb[0].mxu0
        %2235 = vdwg.mxu0
        %2236 = vmatprep.subr.mxu0 0.0
        %v2237 = vand.u32 %v421, 4294901760
        %2238 = vmatpush1.msra.mxu0 %v2237
        %2239 = vmatprep.subr.mxu0 0.0
        %2240 = vmatpush1.msra.mxu0 0.0
        %2241 = vmatprep.subr.mxu0 0.0
        %2242 = vmatpush1.msra.mxu0 0.0
        %2243 = vmatprep.subr.mxu0 0.0
        %2244 = vmatpush1.msra.mxu0 0.0
        %2245 = vmatprep.subr.mxu0 0.0
        %2246 = vmatpush1.msra.mxu0 0.0
        %2247 = vmatprep.subr.mxu0 0.0
        %2248 = vmatpush1.msra.mxu0 0.0
        %2249 = vmatprep.subr.mxu0 0.0
        %2250 = vmatpush1.msra.mxu0 0.0
        %2251 = vmatprep.subr.mxu0 0.0
        %2252 = vmatpush1.msra.mxu0 0.0
        %2253 = vmatprep.subr.mxu0 0.0
        %2254 = vmatpush1.msra.mxu0 0.0
        %2255 = vmatprep.subr.mxu0 0.0
        %2256 = vmatpush1.msra.mxu0 0.0
        %2257 = vmatprep.subr.mxu0 0.0
        %2258 = vmatpush1.msra.mxu0 0.0
        %2259 = vmatprep.subr.mxu0 0.0
        %2260 = vmatpush1.msra.mxu0 0.0
        %2261 = vmatprep.subr.mxu0 0.0
        %2262 = vmatpush1.msra.mxu0 0.0
        %2263 = vmatprep.subr.mxu0 0.0
        %2264 = vmatpush1.msra.mxu0 0.0
        %2265 = vmatprep.subr.mxu0 0.0
        %2266 = vmatpush1.msra.mxu0 0.0
        %2267 = vmatprep.subr.mxu0 0.0
        %2268 = vmatpush1.msra.mxu0 0.0
        %2269 = vmatprep.subr.mxu0 0.0
        %2270 = vmatpush1.msra.mxu0 0.0
        %2271 = vmatprep.subr.mxu0 0.0
        %2272 = vmatpush1.msra.mxu0 0.0
        %2273 = vmatprep.subr.mxu0 0.0
        %2274 = vmatpush1.msra.mxu0 0.0
        %2275 = vmatprep.subr.mxu0 0.0
        %2276 = vmatpush1.msra.mxu0 0.0
        %2277 = vmatprep.subr.mxu0 0.0
        %2278 = vmatpush1.msra.mxu0 0.0
        %2279 = vmatprep.subr.mxu0 0.0
        %2280 = vmatpush1.msra.mxu0 0.0
        %2281 = vmatprep.subr.mxu0 0.0
        %2282 = vmatpush1.msra.mxu0 0.0
        %2283 = vmatprep.subr.mxu0 0.0
        %2284 = vmatpush1.msra.mxu0 0.0
        %2285 = vmatprep.subr.mxu0 0.0
        %2286 = vmatpush1.msra.mxu0 0.0
        %2287 = vmatprep.subr.mxu0 0.0
        %2288 = vmatpush1.msra.mxu0 0.0
        %2289 = vmatprep.subr.mxu0 0.0
        %2290 = vmatpush1.msra.mxu0 0.0
        %2291 = vmatprep.subr.mxu0 0.0
        %2292 = vmatpush1.msra.mxu0 0.0
        %2293 = vmatprep.subr.mxu0 0.0
        %2294 = vmatpush1.msra.mxu0 0.0
        %2295 = vmatprep.subr.mxu0 0.0
        %2296 = vmatpush1.msra.mxu0 0.0
        %2297 = vmatprep.subr.mxu0 0.0
        %2298 = vmatpush1.msra.mxu0 0.0
        %2299 = vmatprep.subr.mxu0 0.0
        %2300 = vmatpush1.msra.mxu0 0.0
        %2301 = vmatprep.mubr.f32.mxu0 0.0
        %v2302 = vand.u32 %v2008, 4294901760
        %v2303 = vsub.f32 %v2008, %v2302
        %v2304 = vand.u32 %v2303, 4294901760
        %2305 = vmatmul.mubr.f32.gmra.mrb[0].mxu0 %v2304
        %v2306 = vpop.f32.mrb[0].mxu0
        %v2307 = vadd.f32 %v2233, %v2306
        %v2308 = vpop.f32.mrb[0].mxu0
        %2309 = vdwg.mxu0
        %2310 = vmatprep.subr.mxu0 0.0
        %v2311 = vand.u32 %v421, 4294901760
        %v2312 = vsub.f32 %v421, %v2311
        %v2313 = vand.u32 %v2312, 4294901760
        %2314 = vmatpush1.msra.mxu0 %v2313
        %2315 = vmatprep.subr.mxu0 0.0
        %2316 = vmatpush1.msra.mxu0 0.0
        %2317 = vmatprep.subr.mxu0 0.0
        %2318 = vmatpush1.msra.mxu0 0.0
        %2319 = vmatprep.subr.mxu0 0.0
        %2320 = vmatpush1.msra.mxu0 0.0
        %2321 = vmatprep.subr.mxu0 0.0
        %2322 = vmatpush1.msra.mxu0 0.0
        %2323 = vmatprep.subr.mxu0 0.0
        %2324 = vmatpush1.msra.mxu0 0.0
        %2325 = vmatprep.subr.mxu0 0.0
        %2326 = vmatpush1.msra.mxu0 0.0
        %2327 = vmatprep.subr.mxu0 0.0
        %2328 = vmatpush1.msra.mxu0 0.0
        %2329 = vmatprep.subr.mxu0 0.0
        %2330 = vmatpush1.msra.mxu0 0.0
        %2331 = vmatprep.subr.mxu0 0.0
        %2332 = vmatpush1.msra.mxu0 0.0
        %2333 = vmatprep.subr.mxu0 0.0
        %2334 = vmatpush1.msra.mxu0 0.0
        %2335 = vmatprep.subr.mxu0 0.0
        %2336 = vmatpush1.msra.mxu0 0.0
        %2337 = vmatprep.subr.mxu0 0.0
        %2338 = vmatpush1.msra.mxu0 0.0
        %2339 = vmatprep.subr.mxu0 0.0
        %2340 = vmatpush1.msra.mxu0 0.0
        %2341 = vmatprep.subr.mxu0 0.0
        %2342 = vmatpush1.msra.mxu0 0.0
        %2343 = vmatprep.subr.mxu0 0.0
        %2344 = vmatpush1.msra.mxu0 0.0
        %2345 = vmatprep.subr.mxu0 0.0
        %2346 = vmatpush1.msra.mxu0 0.0
        %2347 = vmatprep.subr.mxu0 0.0
        %2348 = vmatpush1.msra.mxu0 0.0
        %2349 = vmatprep.subr.mxu0 0.0
        %2350 = vmatpush1.msra.mxu0 0.0
        %2351 = vmatprep.subr.mxu0 0.0
        %2352 = vmatpush1.msra.mxu0 0.0
        %2353 = vmatprep.subr.mxu0 0.0
        %2354 = vmatpush1.msra.mxu0 0.0
        %2355 = vmatprep.subr.mxu0 0.0
        %2356 = vmatpush1.msra.mxu0 0.0
        %2357 = vmatprep.subr.mxu0 0.0
        %2358 = vmatpush1.msra.mxu0 0.0
        %2359 = vmatprep.subr.mxu0 0.0
        %2360 = vmatpush1.msra.mxu0 0.0
        %2361 = vmatprep.subr.mxu0 0.0
        %2362 = vmatpush1.msra.mxu0 0.0
        %2363 = vmatprep.subr.mxu0 0.0
        %2364 = vmatpush1.msra.mxu0 0.0
        %2365 = vmatprep.subr.mxu0 0.0
        %2366 = vmatpush1.msra.mxu0 0.0
        %2367 = vmatprep.subr.mxu0 0.0
        %2368 = vmatpush1.msra.mxu0 0.0
        %2369 = vmatprep.subr.mxu0 0.0
        %2370 = vmatpush1.msra.mxu0 0.0
        %2371 = vmatprep.subr.mxu0 0.0
        %2372 = vmatpush1.msra.mxu0 0.0
        %2373 = vmatprep.subr.mxu0 0.0
        %2374 = vmatpush1.msra.mxu0 0.0
        %2375 = vmatprep.subr.mxu0 0.0
        %2376 = vmatpush1.msra.mxu0 0.0
        %2377 = vmatprep.mubr.f32.mxu0 0.0
        %v2378 = vand.u32 %v2008, 4294901760
        %2379 = vmatmul.mubr.f32.gmra.mrb[0].mxu0 %v2378
        %v2380 = vpop.f32.mrb[0].mxu0
        %v2381 = vadd.f32 %v2307, %v2380
        %v2382 = vpop.f32.mrb[0].mxu0
        %2383 = vdwg.mxu0
        %2384 = vmatprep.subr.mxu0 0.0
        %v2385 = vand.u32 %v421, 4294901760
        %2386 = vmatpush1.msra.mxu0 %v2385
        %2387 = vmatprep.subr.mxu0 0.0
        %2388 = vmatpush1.msra.mxu0 0.0
        %2389 = vmatprep.subr.mxu0 0.0
        %2390 = vmatpush1.msra.mxu0 0.0
        %2391 = vmatprep.subr.mxu0 0.0
        %2392 = vmatpush1.msra.mxu0 0.0
        %2393 = vmatprep.subr.mxu0 0.0
        %2394 = vmatpush1.msra.mxu0 0.0
        %2395 = vmatprep.subr.mxu0 0.0
        %2396 = vmatpush1.msra.mxu0 0.0
        %2397 = vmatprep.subr.mxu0 0.0
        %2398 = vmatpush1.msra.mxu0 0.0
        %2399 = vmatprep.subr.mxu0 0.0
        %2400 = vmatpush1.msra.mxu0 0.0
        %2401 = vmatprep.subr.mxu0 0.0
        %2402 = vmatpush1.msra.mxu0 0.0
        %2403 = vmatprep.subr.mxu0 0.0
        %2404 = vmatpush1.msra.mxu0 0.0
        %2405 = vmatprep.subr.mxu0 0.0
        %2406 = vmatpush1.msra.mxu0 0.0
        %2407 = vmatprep.subr.mxu0 0.0
        %2408 = vmatpush1.msra.mxu0 0.0
        %2409 = vmatprep.subr.mxu0 0.0
        %2410 = vmatpush1.msra.mxu0 0.0
        %2411 = vmatprep.subr.mxu0 0.0
        %2412 = vmatpush1.msra.mxu0 0.0
        %2413 = vmatprep.subr.mxu0 0.0
        %2414 = vmatpush1.msra.mxu0 0.0
        %2415 = vmatprep.subr.mxu0 0.0
        %2416 = vmatpush1.msra.mxu0 0.0
        %2417 = vmatprep.subr.mxu0 0.0
        %2418 = vmatpush1.msra.mxu0 0.0
        %2419 = vmatprep.subr.mxu0 0.0
        %2420 = vmatpush1.msra.mxu0 0.0
        %2421 = vmatprep.subr.mxu0 0.0
        %2422 = vmatpush1.msra.mxu0 0.0
        %2423 = vmatprep.subr.mxu0 0.0
        %2424 = vmatpush1.msra.mxu0 0.0
        %2425 = vmatprep.subr.mxu0 0.0
        %2426 = vmatpush1.msra.mxu0 0.0
        %2427 = vmatprep.subr.mxu0 0.0
        %2428 = vmatpush1.msra.mxu0 0.0
        %2429 = vmatprep.subr.mxu0 0.0
        %2430 = vmatpush1.msra.mxu0 0.0
        %2431 = vmatprep.subr.mxu0 0.0
        %2432 = vmatpush1.msra.mxu0 0.0
        %2433 = vmatprep.subr.mxu0 0.0
        %2434 = vmatpush1.msra.mxu0 0.0
        %2435 = vmatprep.subr.mxu0 0.0
        %2436 = vmatpush1.msra.mxu0 0.0
        %2437 = vmatprep.subr.mxu0 0.0
        %2438 = vmatpush1.msra.mxu0 0.0
        %2439 = vmatprep.subr.mxu0 0.0
        %2440 = vmatpush1.msra.mxu0 0.0
        %2441 = vmatprep.subr.mxu0 0.0
        %2442 = vmatpush1.msra.mxu0 0.0
        %2443 = vmatprep.subr.mxu0 0.0
        %2444 = vmatpush1.msra.mxu0 0.0
        %2445 = vmatprep.subr.mxu0 0.0
        %2446 = vmatpush1.msra.mxu0 0.0
        %2447 = vmatprep.subr.mxu0 0.0
        %2448 = vmatpush1.msra.mxu0 0.0
        %2449 = vmatprep.mubr.f32.mxu0 0.0
        %v2450 = vand.u32 %v2008, 4294901760
        %2451 = vmatmul.mubr.f32.gmra.mrb[0].mxu0 %v2450
        %v2452 = vpop.f32.mrb[0].mxu0
        %v2453 = vadd.f32 %v2381, %v2452
        %v2454 = vpop.f32.mrb[0].mxu0
        %2455 = vdwg.mxu0
        %v2456 = vld [vmem:[%s7] sm:$0xff]
        %v2458 = vsel %vm428, %v2456, 0
        %2460 = vmatprep.subr.mxu0 0.0
        %v2461 = vand.u32 %v437, 4294901760
        %2462 = vmatpush1.msra.mxu0 %v2461
        %2463 = vmatprep.subr.mxu0 0.0
        %2464 = vmatpush1.msra.mxu0 0.0
        %2465 = vmatprep.subr.mxu0 0.0
        %2466 = vmatpush1.msra.mxu0 0.0
        %2467 = vmatprep.subr.mxu0 0.0
        %2468 = vmatpush1.msra.mxu0 0.0
        %2469 = vmatprep.subr.mxu0 0.0
        %2470 = vmatpush1.msra.mxu0 0.0
        %2471 = vmatprep.subr.mxu0 0.0
        %2472 = vmatpush1.msra.mxu0 0.0
        %2473 = vmatprep.subr.mxu0 0.0
        %2474 = vmatpush1.msra.mxu0 0.0
        %2475 = vmatprep.subr.mxu0 0.0
        %2476 = vmatpush1.msra.mxu0 0.0
        %2477 = vmatprep.subr.mxu0 0.0
        %2478 = vmatpush1.msra.mxu0 0.0
        %2479 = vmatprep.subr.mxu0 0.0
        %2480 = vmatpush1.msra.mxu0 0.0
        %2481 = vmatprep.subr.mxu0 0.0
        %2482 = vmatpush1.msra.mxu0 0.0
        %2483 = vmatprep.subr.mxu0 0.0
        %2484 = vmatpush1.msra.mxu0 0.0
        %2485 = vmatprep.subr.mxu0 0.0
        %2486 = vmatpush1.msra.mxu0 0.0
        %2487 = vmatprep.subr.mxu0 0.0
        %2488 = vmatpush1.msra.mxu0 0.0
        %2489 = vmatprep.subr.mxu0 0.0
        %2490 = vmatpush1.msra.mxu0 0.0
        %2491 = vmatprep.subr.mxu0 0.0
        %2492 = vmatpush1.msra.mxu0 0.0
        %2493 = vmatprep.subr.mxu0 0.0
        %2494 = vmatpush1.msra.mxu0 0.0
        %2495 = vmatprep.subr.mxu0 0.0
        %2496 = vmatpush1.msra.mxu0 0.0
        %2497 = vmatprep.subr.mxu0 0.0
        %2498 = vmatpush1.msra.mxu0 0.0
        %2499 = vmatprep.subr.mxu0 0.0
        %2500 = vmatpush1.msra.mxu0 0.0
        %2501 = vmatprep.subr.mxu0 0.0
        %2502 = vmatpush1.msra.mxu0 0.0
        %2503 = vmatprep.subr.mxu0 0.0
        %2504 = vmatpush1.msra.mxu0 0.0
        %2505 = vmatprep.subr.mxu0 0.0
        %2506 = vmatpush1.msra.mxu0 0.0
        %2507 = vmatprep.subr.mxu0 0.0
        %2508 = vmatpush1.msra.mxu0 0.0
        %2509 = vmatprep.subr.mxu0 0.0
        %2510 = vmatpush1.msra.mxu0 0.0
        %2511 = vmatprep.subr.mxu0 0.0
        %2512 = vmatpush1.msra.mxu0 0.0
        %2513 = vmatprep.subr.mxu0 0.0
        %2514 = vmatpush1.msra.mxu0 0.0
        %2515 = vmatprep.subr.mxu0 0.0
        %2516 = vmatpush1.msra.mxu0 0.0
        %2517 = vmatprep.subr.mxu0 0.0
        %2518 = vmatpush1.msra.mxu0 0.0
        %2519 = vmatprep.subr.mxu0 0.0
        %2520 = vmatpush1.msra.mxu0 0.0
        %2521 = vmatprep.subr.mxu0 0.0
        %2522 = vmatpush1.msra.mxu0 0.0
        %2523 = vmatprep.subr.mxu0 0.0
        %2524 = vmatpush1.msra.mxu0 0.0
        %2525 = vmatprep.mubr.f32.mxu0 0.0
        %v2526 = vand.u32 %v2458, 4294901760
        %v2527 = vsub.f32 %v2458, %v2526
        %v2528 = vand.u32 %v2527, 4294901760
        %v2529 = vsub.f32 %v2527, %v2528
        %v2530 = vand.u32 %v2529, 4294901760
        %2531 = vmatmul.mubr.f32.gmra.mrb[0].mxu0 %v2530
        %v2532 = vpop.f32.mrb[0].mxu0
        %v2533 = vadd.f32 0.0, %v2532
        %v2534 = vpop.f32.mrb[0].mxu0
        %2535 = vdwg.mxu0
        %2536 = vmatprep.subr.mxu0 0.0
        %v2537 = vand.u32 %v437, 4294901760
        %v2538 = vsub.f32 %v437, %v2537
        %v2539 = vand.u32 %v2538, 4294901760
        %v2540 = vsub.f32 %v2538, %v2539
        %v2541 = vand.u32 %v2540, 4294901760
        %2542 = vmatpush1.msra.mxu0 %v2541
        %2543 = vmatprep.subr.mxu0 0.0
        %2544 = vmatpush1.msra.mxu0 0.0
        %2545 = vmatprep.subr.mxu0 0.0
        %2546 = vmatpush1.msra.mxu0 0.0
        %2547 = vmatprep.subr.mxu0 0.0
        %2548 = vmatpush1.msra.mxu0 0.0
        %2549 = vmatprep.subr.mxu0 0.0
        %2550 = vmatpush1.msra.mxu0 0.0
        %2551 = vmatprep.subr.mxu0 0.0
        %2552 = vmatpush1.msra.mxu0 0.0
        %2553 = vmatprep.subr.mxu0 0.0
        %2554 = vmatpush1.msra.mxu0 0.0
        %2555 = vmatprep.subr.mxu0 0.0
        %2556 = vmatpush1.msra.mxu0 0.0
        %2557 = vmatprep.subr.mxu0 0.0
        %2558 = vmatpush1.msra.mxu0 0.0
        %2559 = vmatprep.subr.mxu0 0.0
        %2560 = vmatpush1.msra.mxu0 0.0
        %2561 = vmatprep.subr.mxu0 0.0
        %2562 = vmatpush1.msra.mxu0 0.0
        %2563 = vmatprep.subr.mxu0 0.0
        %2564 = vmatpush1.msra.mxu0 0.0
        %2565 = vmatprep.subr.mxu0 0.0
        %2566 = vmatpush1.msra.mxu0 0.0
        %2567 = vmatprep.subr.mxu0 0.0
        %2568 = vmatpush1.msra.mxu0 0.0
        %2569 = vmatprep.subr.mxu0 0.0
        %2570 = vmatpush1.msra.mxu0 0.0
        %2571 = vmatprep.subr.mxu0 0.0
        %2572 = vmatpush1.msra.mxu0 0.0
        %2573 = vmatprep.subr.mxu0 0.0
        %2574 = vmatpush1.msra.mxu0 0.0
        %2575 = vmatprep.subr.mxu0 0.0
        %2576 = vmatpush1.msra.mxu0 0.0
        %2577 = vmatprep.subr.mxu0 0.0
        %2578 = vmatpush1.msra.mxu0 0.0
        %2579 = vmatprep.subr.mxu0 0.0
        %2580 = vmatpush1.msra.mxu0 0.0
        %2581 = vmatprep.subr.mxu0 0.0
        %2582 = vmatpush1.msra.mxu0 0.0
        %2583 = vmatprep.subr.mxu0 0.0
        %2584 = vmatpush1.msra.mxu0 0.0
        %2585 = vmatprep.subr.mxu0 0.0
        %2586 = vmatpush1.msra.mxu0 0.0
        %2587 = vmatprep.subr.mxu0 0.0
        %2588 = vmatpush1.msra.mxu0 0.0
        %2589 = vmatprep.subr.mxu0 0.0
        %2590 = vmatpush1.msra.mxu0 0.0
        %2591 = vmatprep.subr.mxu0 0.0
        %2592 = vmatpush1.msra.mxu0 0.0
        %2593 = vmatprep.subr.mxu0 0.0
        %2594 = vmatpush1.msra.mxu0 0.0
        %2595 = vmatprep.subr.mxu0 0.0
        %2596 = vmatpush1.msra.mxu0 0.0
        %2597 = vmatprep.subr.mxu0 0.0
        %2598 = vmatpush1.msra.mxu0 0.0
        %2599 = vmatprep.subr.mxu0 0.0
        %2600 = vmatpush1.msra.mxu0 0.0
        %2601 = vmatprep.subr.mxu0 0.0
        %2602 = vmatpush1.msra.mxu0 0.0
        %2603 = vmatprep.subr.mxu0 0.0
        %2604 = vmatpush1.msra.mxu0 0.0
        %2605 = vmatprep.mubr.f32.mxu0 0.0
        %v2606 = vand.u32 %v2458, 4294901760
        %2607 = vmatmul.mubr.f32.gmra.mrb[0].mxu0 %v2606
        %v2608 = vpop.f32.mrb[0].mxu0
        %v2609 = vadd.f32 %v2533, %v2608
        %v2610 = vpop.f32.mrb[0].mxu0
        %2611 = vdwg.mxu0
        %2612 = vmatprep.subr.mxu0 0.0
        %v2613 = vand.u32 %v437, 4294901760
        %v2614 = vsub.f32 %v437, %v2613
        %2615 = vmatpush1.msra.mxu0 %v2614
        %2616 = vmatprep.subr.mxu0 0.0
        %2617 = vmatpush1.msra.mxu0 0.0
        %2618 = vmatprep.subr.mxu0 0.0
        %2619 = vmatpush1.msra.mxu0 0.0
        %2620 = vmatprep.subr.mxu0 0.0
        %2621 = vmatpush1.msra.mxu0 0.0
        %2622 = vmatprep.subr.mxu0 0.0
        %2623 = vmatpush1.msra.mxu0 0.0
        %2624 = vmatprep.subr.mxu0 0.0
        %2625 = vmatpush1.msra.mxu0 0.0
        %2626 = vmatprep.subr.mxu0 0.0
        %2627 = vmatpush1.msra.mxu0 0.0
        %2628 = vmatprep.subr.mxu0 0.0
        %2629 = vmatpush1.msra.mxu0 0.0
        %2630 = vmatprep.subr.mxu0 0.0
        %2631 = vmatpush1.msra.mxu0 0.0
        %2632 = vmatprep.subr.mxu0 0.0
        %2633 = vmatpush1.msra.mxu0 0.0
        %2634 = vmatprep.subr.mxu0 0.0
        %2635 = vmatpush1.msra.mxu0 0.0
        %2636 = vmatprep.subr.mxu0 0.0
        %2637 = vmatpush1.msra.mxu0 0.0
        %2638 = vmatprep.subr.mxu0 0.0
        %2639 = vmatpush1.msra.mxu0 0.0
        %2640 = vmatprep.subr.mxu0 0.0
        %2641 = vmatpush1.msra.mxu0 0.0
        %2642 = vmatprep.subr.mxu0 0.0
        %2643 = vmatpush1.msra.mxu0 0.0
        %2644 = vmatprep.subr.mxu0 0.0
        %2645 = vmatpush1.msra.mxu0 0.0
        %2646 = vmatprep.subr.mxu0 0.0
        %2647 = vmatpush1.msra.mxu0 0.0
        %2648 = vmatprep.subr.mxu0 0.0
        %2649 = vmatpush1.msra.mxu0 0.0
        %2650 = vmatprep.subr.mxu0 0.0
        %2651 = vmatpush1.msra.mxu0 0.0
        %2652 = vmatprep.subr.mxu0 0.0
        %2653 = vmatpush1.msra.mxu0 0.0
        %2654 = vmatprep.subr.mxu0 0.0
        %2655 = vmatpush1.msra.mxu0 0.0
        %2656 = vmatprep.subr.mxu0 0.0
        %2657 = vmatpush1.msra.mxu0 0.0
        %2658 = vmatprep.subr.mxu0 0.0
        %2659 = vmatpush1.msra.mxu0 0.0
        %2660 = vmatprep.subr.mxu0 0.0
        %2661 = vmatpush1.msra.mxu0 0.0
        %2662 = vmatprep.subr.mxu0 0.0
        %2663 = vmatpush1.msra.mxu0 0.0
        %2664 = vmatprep.subr.mxu0 0.0
        %2665 = vmatpush1.msra.mxu0 0.0
        %2666 = vmatprep.subr.mxu0 0.0
        %2667 = vmatpush1.msra.mxu0 0.0
        %2668 = vmatprep.subr.mxu0 0.0
        %2669 = vmatpush1.msra.mxu0 0.0
        %2670 = vmatprep.subr.mxu0 0.0
        %2671 = vmatpush1.msra.mxu0 0.0
        %2672 = vmatprep.subr.mxu0 0.0
        %2673 = vmatpush1.msra.mxu0 0.0
        %2674 = vmatprep.subr.mxu0 0.0
        %2675 = vmatpush1.msra.mxu0 0.0
        %2676 = vmatprep.subr.mxu0 0.0
        %2677 = vmatpush1.msra.mxu0 0.0
        %2678 = vmatprep.mubr.f32.mxu0 0.0
        %v2679 = vand.u32 %v2458, 4294901760
        %v2680 = vsub.f32 %v2458, %v2679
        %2681 = vmatmul.mubr.f32.gmra.mrb[0].mxu0 %v2680
        %v2682 = vpop.f32.mrb[0].mxu0
        %v2683 = vadd.f32 %v2609, %v2682
        %v2684 = vpop.f32.mrb[0].mxu0
        %2685 = vdwg.mxu0
        %2686 = vmatprep.subr.mxu0 0.0
        %v2687 = vand.u32 %v437, 4294901760
        %2688 = vmatpush1.msra.mxu0 %v2687
        %2689 = vmatprep.subr.mxu0 0.0
        %2690 = vmatpush1.msra.mxu0 0.0
        %2691 = vmatprep.subr.mxu0 0.0
        %2692 = vmatpush1.msra.mxu0 0.0
        %2693 = vmatprep.subr.mxu0 0.0
        %2694 = vmatpush1.msra.mxu0 0.0
        %2695 = vmatprep.subr.mxu0 0.0
        %2696 = vmatpush1.msra.mxu0 0.0
        %2697 = vmatprep.subr.mxu0 0.0
        %2698 = vmatpush1.msra.mxu0 0.0
        %2699 = vmatprep.subr.mxu0 0.0
        %2700 = vmatpush1.msra.mxu0 0.0
        %2701 = vmatprep.subr.mxu0 0.0
        %2702 = vmatpush1.msra.mxu0 0.0
        %2703 = vmatprep.subr.mxu0 0.0
        %2704 = vmatpush1.msra.mxu0 0.0
        %2705 = vmatprep.subr.mxu0 0.0
        %2706 = vmatpush1.msra.mxu0 0.0
        %2707 = vmatprep.subr.mxu0 0.0
        %2708 = vmatpush1.msra.mxu0 0.0
        %2709 = vmatprep.subr.mxu0 0.0
        %2710 = vmatpush1.msra.mxu0 0.0
        %2711 = vmatprep.subr.mxu0 0.0
        %2712 = vmatpush1.msra.mxu0 0.0
        %2713 = vmatprep.subr.mxu0 0.0
        %2714 = vmatpush1.msra.mxu0 0.0
        %2715 = vmatprep.subr.mxu0 0.0
        %2716 = vmatpush1.msra.mxu0 0.0
        %2717 = vmatprep.subr.mxu0 0.0
        %2718 = vmatpush1.msra.mxu0 0.0
        %2719 = vmatprep.subr.mxu0 0.0
        %2720 = vmatpush1.msra.mxu0 0.0
        %2721 = vmatprep.subr.mxu0 0.0
        %2722 = vmatpush1.msra.mxu0 0.0
        %2723 = vmatprep.subr.mxu0 0.0
        %2724 = vmatpush1.msra.mxu0 0.0
        %2725 = vmatprep.subr.mxu0 0.0
        %2726 = vmatpush1.msra.mxu0 0.0
        %2727 = vmatprep.subr.mxu0 0.0
        %2728 = vmatpush1.msra.mxu0 0.0
        %2729 = vmatprep.subr.mxu0 0.0
        %2730 = vmatpush1.msra.mxu0 0.0
        %2731 = vmatprep.subr.mxu0 0.0
        %2732 = vmatpush1.msra.mxu0 0.0
        %2733 = vmatprep.subr.mxu0 0.0
        %2734 = vmatpush1.msra.mxu0 0.0
        %2735 = vmatprep.subr.mxu0 0.0
        %2736 = vmatpush1.msra.mxu0 0.0
        %2737 = vmatprep.subr.mxu0 0.0
        %2738 = vmatpush1.msra.mxu0 0.0
        %2739 = vmatprep.subr.mxu0 0.0
        %2740 = vmatpush1.msra.mxu0 0.0
        %2741 = vmatprep.subr.mxu0 0.0
        %2742 = vmatpush1.msra.mxu0 0.0
        %2743 = vmatprep.subr.mxu0 0.0
        %2744 = vmatpush1.msra.mxu0 0.0
        %2745 = vmatprep.subr.mxu0 0.0
        %2746 = vmatpush1.msra.mxu0 0.0
        %2747 = vmatprep.subr.mxu0 0.0
        %2748 = vmatpush1.msra.mxu0 0.0
        %2749 = vmatprep.subr.mxu0 0.0
        %2750 = vmatpush1.msra.mxu0 0.0
        %2751 = vmatprep.mubr.f32.mxu0 0.0
        %v2752 = vand.u32 %v2458, 4294901760
        %v2753 = vsub.f32 %v2458, %v2752
        %v2754 = vand.u32 %v2753, 4294901760
        %2755 = vmatmul.mubr.f32.gmra.mrb[0].mxu0 %v2754
        %v2756 = vpop.f32.mrb[0].mxu0
        %v2757 = vadd.f32 %v2683, %v2756
        %v2758 = vpop.f32.mrb[0].mxu0
        %2759 = vdwg.mxu0
        %2760 = vmatprep.subr.mxu0 0.0
        %v2761 = vand.u32 %v437, 4294901760
        %v2762 = vsub.f32 %v437, %v2761
        %v2763 = vand.u32 %v2762, 4294901760
        %2764 = vmatpush1.msra.mxu0 %v2763
        %2765 = vmatprep.subr.mxu0 0.0
        %2766 = vmatpush1.msra.mxu0 0.0
        %2767 = vmatprep.subr.mxu0 0.0
        %2768 = vmatpush1.msra.mxu0 0.0
        %2769 = vmatprep.subr.mxu0 0.0
        %2770 = vmatpush1.msra.mxu0 0.0
        %2771 = vmatprep.subr.mxu0 0.0
        %2772 = vmatpush1.msra.mxu0 0.0
        %2773 = vmatprep.subr.mxu0 0.0
        %2774 = vmatpush1.msra.mxu0 0.0
        %2775 = vmatprep.subr.mxu0 0.0
        %2776 = vmatpush1.msra.mxu0 0.0
        %2777 = vmatprep.subr.mxu0 0.0
        %2778 = vmatpush1.msra.mxu0 0.0
        %2779 = vmatprep.subr.mxu0 0.0
        %2780 = vmatpush1.msra.mxu0 0.0
        %2781 = vmatprep.subr.mxu0 0.0
        %2782 = vmatpush1.msra.mxu0 0.0
        %2783 = vmatprep.subr.mxu0 0.0
        %2784 = vmatpush1.msra.mxu0 0.0
        %2785 = vmatprep.subr.mxu0 0.0
        %2786 = vmatpush1.msra.mxu0 0.0
        %2787 = vmatprep.subr.mxu0 0.0
        %2788 = vmatpush1.msra.mxu0 0.0
        %2789 = vmatprep.subr.mxu0 0.0
        %2790 = vmatpush1.msra.mxu0 0.0
        %2791 = vmatprep.subr.mxu0 0.0
        %2792 = vmatpush1.msra.mxu0 0.0
        %2793 = vmatprep.subr.mxu0 0.0
        %2794 = vmatpush1.msra.mxu0 0.0
        %2795 = vmatprep.subr.mxu0 0.0
        %2796 = vmatpush1.msra.mxu0 0.0
        %2797 = vmatprep.subr.mxu0 0.0
        %2798 = vmatpush1.msra.mxu0 0.0
        %2799 = vmatprep.subr.mxu0 0.0
        %2800 = vmatpush1.msra.mxu0 0.0
        %2801 = vmatprep.subr.mxu0 0.0
        %2802 = vmatpush1.msra.mxu0 0.0
        %2803 = vmatprep.subr.mxu0 0.0
        %2804 = vmatpush1.msra.mxu0 0.0
        %2805 = vmatprep.subr.mxu0 0.0
        %2806 = vmatpush1.msra.mxu0 0.0
        %2807 = vmatprep.subr.mxu0 0.0
        %2808 = vmatpush1.msra.mxu0 0.0
        %2809 = vmatprep.subr.mxu0 0.0
        %2810 = vmatpush1.msra.mxu0 0.0
        %2811 = vmatprep.subr.mxu0 0.0
        %2812 = vmatpush1.msra.mxu0 0.0
        %2813 = vmatprep.subr.mxu0 0.0
        %2814 = vmatpush1.msra.mxu0 0.0
        %2815 = vmatprep.subr.mxu0 0.0
        %2816 = vmatpush1.msra.mxu0 0.0
        %2817 = vmatprep.subr.mxu0 0.0
        %2818 = vmatpush1.msra.mxu0 0.0
        %2819 = vmatprep.subr.mxu0 0.0
        %2820 = vmatpush1.msra.mxu0 0.0
        %2821 = vmatprep.subr.mxu0 0.0
        %2822 = vmatpush1.msra.mxu0 0.0
        %2823 = vmatprep.subr.mxu0 0.0
        %2824 = vmatpush1.msra.mxu0 0.0
        %2825 = vmatprep.subr.mxu0 0.0
        %2826 = vmatpush1.msra.mxu0 0.0
        %2827 = vmatprep.mubr.f32.mxu0 0.0
        %v2828 = vand.u32 %v2458, 4294901760
        %2829 = vmatmul.mubr.f32.gmra.mrb[0].mxu0 %v2828
        %v2830 = vpop.f32.mrb[0].mxu0
        %v2831 = vadd.f32 %v2757, %v2830
        %v2832 = vpop.f32.mrb[0].mxu0
        %2833 = vdwg.mxu0
        %2834 = vmatprep.subr.mxu0 0.0
        %v2835 = vand.u32 %v437, 4294901760
        %2836 = vmatpush1.msra.mxu0 %v2835
        %2837 = vmatprep.subr.mxu0 0.0
        %2838 = vmatpush1.msra.mxu0 0.0
        %2839 = vmatprep.subr.mxu0 0.0
        %2840 = vmatpush1.msra.mxu0 0.0
        %2841 = vmatprep.subr.mxu0 0.0
        %2842 = vmatpush1.msra.mxu0 0.0
        %2843 = vmatprep.subr.mxu0 0.0
        %2844 = vmatpush1.msra.mxu0 0.0
        %2845 = vmatprep.subr.mxu0 0.0
        %2846 = vmatpush1.msra.mxu0 0.0
        %2847 = vmatprep.subr.mxu0 0.0
        %2848 = vmatpush1.msra.mxu0 0.0
        %2849 = vmatprep.subr.mxu0 0.0
        %2850 = vmatpush1.msra.mxu0 0.0
        %2851 = vmatprep.subr.mxu0 0.0
        %2852 = vmatpush1.msra.mxu0 0.0
        %2853 = vmatprep.subr.mxu0 0.0
        %2854 = vmatpush1.msra.mxu0 0.0
        %2855 = vmatprep.subr.mxu0 0.0
        %2856 = vmatpush1.msra.mxu0 0.0
        %2857 = vmatprep.subr.mxu0 0.0
        %2858 = vmatpush1.msra.mxu0 0.0
        %2859 = vmatprep.subr.mxu0 0.0
        %2860 = vmatpush1.msra.mxu0 0.0
        %2861 = vmatprep.subr.mxu0 0.0
        %2862 = vmatpush1.msra.mxu0 0.0
        %2863 = vmatprep.subr.mxu0 0.0
        %2864 = vmatpush1.msra.mxu0 0.0
        %2865 = vmatprep.subr.mxu0 0.0
        %2866 = vmatpush1.msra.mxu0 0.0
        %2867 = vmatprep.subr.mxu0 0.0
        %2868 = vmatpush1.msra.mxu0 0.0
        %2869 = vmatprep.subr.mxu0 0.0
        %2870 = vmatpush1.msra.mxu0 0.0
        %2871 = vmatprep.subr.mxu0 0.0
        %2872 = vmatpush1.msra.mxu0 0.0
        %2873 = vmatprep.subr.mxu0 0.0
        %2874 = vmatpush1.msra.mxu0 0.0
        %2875 = vmatprep.subr.mxu0 0.0
        %2876 = vmatpush1.msra.mxu0 0.0
        %2877 = vmatprep.subr.mxu0 0.0
        %2878 = vmatpush1.msra.mxu0 0.0
        %2879 = vmatprep.subr.mxu0 0.0
        %2880 = vmatpush1.msra.mxu0 0.0
        %2881 = vmatprep.subr.mxu0 0.0
        %2882 = vmatpush1.msra.mxu0 0.0
        %2883 = vmatprep.subr.mxu0 0.0
        %2884 = vmatpush1.msra.mxu0 0.0
        %2885 = vmatprep.subr.mxu0 0.0
        %2886 = vmatpush1.msra.mxu0 0.0
        %2887 = vmatprep.subr.mxu0 0.0
        %2888 = vmatpush1.msra.mxu0 0.0
        %2889 = vmatprep.subr.mxu0 0.0
        %2890 = vmatpush1.msra.mxu0 0.0
        %2891 = vmatprep.subr.mxu0 0.0
        %2892 = vmatpush1.msra.mxu0 0.0
        %2893 = vmatprep.subr.mxu0 0.0
        %2894 = vmatpush1.msra.mxu0 0.0
        %2895 = vmatprep.subr.mxu0 0.0
        %2896 = vmatpush1.msra.mxu0 0.0
        %2897 = vmatprep.subr.mxu0 0.0
        %2898 = vmatpush1.msra.mxu0 0.0
        %2899 = vmatprep.mubr.f32.mxu0 0.0
        %v2900 = vand.u32 %v2458, 4294901760
        %2901 = vmatmul.mubr.f32.gmra.mrb[0].mxu0 %v2900
        %v2902 = vpop.f32.mrb[0].mxu0
        %v2903 = vadd.f32 %v2831, %v2902
        %v2904 = vpop.f32.mrb[0].mxu0
        %2905 = vdwg.mxu0
        %v2906 = vadd.f32 %v2453, %v2903
        %v2907 = vld [vmem:[%s8] sm:$0x3f]
        %v2908 = vld [vmem:[%s9] sm:$0x3f]
        %v2910 = vsel %vm928, %v2908, 0
        %2912 = vmatprep.subr.mxu0 0.0
        %v2913 = vand.u32 %v1555, 4294901760
        %2914 = vmatpush1.msra.mxu0 %v2913
        %2915 = vmatprep.subr.mxu0 0.0
        %2916 = vmatpush1.msra.mxu0 0.0
        %2917 = vmatprep.subr.mxu0 0.0
        %2918 = vmatpush1.msra.mxu0 0.0
        %2919 = vmatprep.subr.mxu0 0.0
        %2920 = vmatpush1.msra.mxu0 0.0
        %2921 = vmatprep.subr.mxu0 0.0
        %2922 = vmatpush1.msra.mxu0 0.0
        %2923 = vmatprep.subr.mxu0 0.0
        %2924 = vmatpush1.msra.mxu0 0.0
        %2925 = vmatprep.subr.mxu0 0.0
        %2926 = vmatpush1.msra.mxu0 0.0
        %2927 = vmatprep.subr.mxu0 0.0
        %2928 = vmatpush1.msra.mxu0 0.0
        %2929 = vmatprep.subr.mxu0 0.0
        %2930 = vmatpush1.msra.mxu0 0.0
        %2931 = vmatprep.subr.mxu0 0.0
        %2932 = vmatpush1.msra.mxu0 0.0
        %2933 = vmatprep.subr.mxu0 0.0
        %2934 = vmatpush1.msra.mxu0 0.0
        %2935 = vmatprep.subr.mxu0 0.0
        %2936 = vmatpush1.msra.mxu0 0.0
        %2937 = vmatprep.subr.mxu0 0.0
        %2938 = vmatpush1.msra.mxu0 0.0
        %2939 = vmatprep.subr.mxu0 0.0
        %2940 = vmatpush1.msra.mxu0 0.0
        %2941 = vmatprep.subr.mxu0 0.0
        %2942 = vmatpush1.msra.mxu0 0.0
        %2943 = vmatprep.subr.mxu0 0.0
        %2944 = vmatpush1.msra.mxu0 0.0
        %2945 = vmatprep.subr.mxu0 0.0
        %2946 = vmatpush1.msra.mxu0 0.0
        %2947 = vmatprep.subr.mxu0 0.0
        %2948 = vmatpush1.msra.mxu0 0.0
        %2949 = vmatprep.subr.mxu0 0.0
        %2950 = vmatpush1.msra.mxu0 0.0
        %2951 = vmatprep.subr.mxu0 0.0
        %2952 = vmatpush1.msra.mxu0 0.0
        %2953 = vmatprep.subr.mxu0 0.0
        %2954 = vmatpush1.msra.mxu0 0.0
        %2955 = vmatprep.subr.mxu0 0.0
        %2956 = vmatpush1.msra.mxu0 0.0
        %2957 = vmatprep.subr.mxu0 0.0
        %2958 = vmatpush1.msra.mxu0 0.0
        %2959 = vmatprep.subr.mxu0 0.0
        %2960 = vmatpush1.msra.mxu0 0.0
        %2961 = vmatprep.subr.mxu0 0.0
        %2962 = vmatpush1.msra.mxu0 0.0
        %2963 = vmatprep.subr.mxu0 0.0
        %2964 = vmatpush1.msra.mxu0 0.0
        %2965 = vmatprep.subr.mxu0 0.0
        %2966 = vmatpush1.msra.mxu0 0.0
        %2967 = vmatprep.subr.mxu0 0.0
        %2968 = vmatpush1.msra.mxu0 0.0
        %2969 = vmatprep.subr.mxu0 0.0
        %2970 = vmatpush1.msra.mxu0 0.0
        %2971 = vmatprep.subr.mxu0 0.0
        %2972 = vmatpush1.msra.mxu0 0.0
        %2973 = vmatprep.subr.mxu0 0.0
        %2974 = vmatpush1.msra.mxu0 0.0
        %2975 = vmatprep.subr.mxu0 0.0
        %2976 = vmatpush1.msra.mxu0 0.0
        %2977 = vmatprep.mubr.f32.mxu0 0.0
        %v2978 = vand.u32 %v2910, 4294901760
        %v2979 = vsub.f32 %v2910, %v2978
        %v2980 = vand.u32 %v2979, 4294901760
        %v2981 = vsub.f32 %v2979, %v2980
        %v2982 = vand.u32 %v2981, 4294901760
        %2983 = vmatmul.mubr.f32.gmra.mrb[0].mxu0 %v2982
        %v2984 = vpop.f32.mrb[0].mxu0
        %v2985 = vadd.f32 0.0, %v2984
        %v2986 = vpop.f32.mrb[0].mxu0
        %2987 = vdwg.mxu0
        %2988 = vmatprep.subr.mxu0 0.0
        %v2989 = vand.u32 %v1555, 4294901760
        %v2990 = vsub.f32 %v1555, %v2989
        %v2991 = vand.u32 %v2990, 4294901760
        %v2992 = vsub.f32 %v2990, %v2991
        %v2993 = vand.u32 %v2992, 4294901760
        %2994 = vmatpush1.msra.mxu0 %v2993
        %2995 = vmatprep.subr.mxu0 0.0
        %2996 = vmatpush1.msra.mxu0 0.0
        %2997 = vmatprep.subr.mxu0 0.0
        %2998 = vmatpush1.msra.mxu0 0.0
        %2999 = vmatprep.subr.mxu0 0.0
        %3000 = vmatpush1.msra.mxu0 0.0
        %3001 = vmatprep.subr.mxu0 0.0
        %3002 = vmatpush1.msra.mxu0 0.0
        %3003 = vmatprep.subr.mxu0 0.0
        %3004 = vmatpush1.msra.mxu0 0.0
        %3005 = vmatprep.subr.mxu0 0.0
        %3006 = vmatpush1.msra.mxu0 0.0
        %3007 = vmatprep.subr.mxu0 0.0
        %3008 = vmatpush1.msra.mxu0 0.0
        %3009 = vmatprep.subr.mxu0 0.0
        %3010 = vmatpush1.msra.mxu0 0.0
        %3011 = vmatprep.subr.mxu0 0.0
        %3012 = vmatpush1.msra.mxu0 0.0
        %3013 = vmatprep.subr.mxu0 0.0
        %3014 = vmatpush1.msra.mxu0 0.0
        %3015 = vmatprep.subr.mxu0 0.0
        %3016 = vmatpush1.msra.mxu0 0.0
        %3017 = vmatprep.subr.mxu0 0.0
        %3018 = vmatpush1.msra.mxu0 0.0
        %3019 = vmatprep.subr.mxu0 0.0
        %3020 = vmatpush1.msra.mxu0 0.0
        %3021 = vmatprep.subr.mxu0 0.0
        %3022 = vmatpush1.msra.mxu0 0.0
        %3023 = vmatprep.subr.mxu0 0.0
        %3024 = vmatpush1.msra.mxu0 0.0
        %3025 = vmatprep.subr.mxu0 0.0
        %3026 = vmatpush1.msra.mxu0 0.0
        %3027 = vmatprep.subr.mxu0 0.0
        %3028 = vmatpush1.msra.mxu0 0.0
        %3029 = vmatprep.subr.mxu0 0.0
        %3030 = vmatpush1.msra.mxu0 0.0
        %3031 = vmatprep.subr.mxu0 0.0
        %3032 = vmatpush1.msra.mxu0 0.0
        %3033 = vmatprep.subr.mxu0 0.0
        %3034 = vmatpush1.msra.mxu0 0.0
        %3035 = vmatprep.subr.mxu0 0.0
        %3036 = vmatpush1.msra.mxu0 0.0
        %3037 = vmatprep.subr.mxu0 0.0
        %3038 = vmatpush1.msra.mxu0 0.0
        %3039 = vmatprep.subr.mxu0 0.0
        %3040 = vmatpush1.msra.mxu0 0.0
        %3041 = vmatprep.subr.mxu0 0.0
        %3042 = vmatpush1.msra.mxu0 0.0
        %3043 = vmatprep.subr.mxu0 0.0
        %3044 = vmatpush1.msra.mxu0 0.0
        %3045 = vmatprep.subr.mxu0 0.0
        %3046 = vmatpush1.msra.mxu0 0.0
        %3047 = vmatprep.subr.mxu0 0.0
        %3048 = vmatpush1.msra.mxu0 0.0
        %3049 = vmatprep.subr.mxu0 0.0
        %3050 = vmatpush1.msra.mxu0 0.0
        %3051 = vmatprep.subr.mxu0 0.0
        %3052 = vmatpush1.msra.mxu0 0.0
        %3053 = vmatprep.subr.mxu0 0.0
        %3054 = vmatpush1.msra.mxu0 0.0
        %3055 = vmatprep.subr.mxu0 0.0
        %3056 = vmatpush1.msra.mxu0 0.0
        %3057 = vmatprep.mubr.f32.mxu0 0.0
        %v3058 = vand.u32 %v2910, 4294901760
        %3059 = vmatmul.mubr.f32.gmra.mrb[0].mxu0 %v3058
        %v3060 = vpop.f32.mrb[0].mxu0
        %v3061 = vadd.f32 %v2985, %v3060
        %v3062 = vpop.f32.mrb[0].mxu0
        %3063 = vdwg.mxu0
        %3064 = vmatprep.subr.mxu0 0.0
        %v3065 = vand.u32 %v1555, 4294901760
        %v3066 = vsub.f32 %v1555, %v3065
        %3067 = vmatpush1.msra.mxu0 %v3066
        %3068 = vmatprep.subr.mxu0 0.0
        %3069 = vmatpush1.msra.mxu0 0.0
        %3070 = vmatprep.subr.mxu0 0.0
        %3071 = vmatpush1.msra.mxu0 0.0
        %3072 = vmatprep.subr.mxu0 0.0
        %3073 = vmatpush1.msra.mxu0 0.0
        %3074 = vmatprep.subr.mxu0 0.0
        %3075 = vmatpush1.msra.mxu0 0.0
        %3076 = vmatprep.subr.mxu0 0.0
        %3077 = vmatpush1.msra.mxu0 0.0
        %3078 = vmatprep.subr.mxu0 0.0
        %3079 = vmatpush1.msra.mxu0 0.0
        %3080 = vmatprep.subr.mxu0 0.0
        %3081 = vmatpush1.msra.mxu0 0.0
        %3082 = vmatprep.subr.mxu0 0.0
        %3083 = vmatpush1.msra.mxu0 0.0
        %3084 = vmatprep.subr.mxu0 0.0
        %3085 = vmatpush1.msra.mxu0 0.0
        %3086 = vmatprep.subr.mxu0 0.0
        %3087 = vmatpush1.msra.mxu0 0.0
        %3088 = vmatprep.subr.mxu0 0.0
        %3089 = vmatpush1.msra.mxu0 0.0
        %3090 = vmatprep.subr.mxu0 0.0
        %3091 = vmatpush1.msra.mxu0 0.0
        %3092 = vmatprep.subr.mxu0 0.0
        %3093 = vmatpush1.msra.mxu0 0.0
        %3094 = vmatprep.subr.mxu0 0.0
        %3095 = vmatpush1.msra.mxu0 0.0
        %3096 = vmatprep.subr.mxu0 0.0
        %3097 = vmatpush1.msra.mxu0 0.0
        %3098 = vmatprep.subr.mxu0 0.0
        %3099 = vmatpush1.msra.mxu0 0.0
        %3100 = vmatprep.subr.mxu0 0.0
        %3101 = vmatpush1.msra.mxu0 0.0
        %3102 = vmatprep.subr.mxu0 0.0
        %3103 = vmatpush1.msra.mxu0 0.0
        %3104 = vmatprep.subr.mxu0 0.0
        %3105 = vmatpush1.msra.mxu0 0.0
        %3106 = vmatprep.subr.mxu0 0.0
        %3107 = vmatpush1.msra.mxu0 0.0
        %3108 = vmatprep.subr.mxu0 0.0
        %3109 = vmatpush1.msra.mxu0 0.0
        %3110 = vmatprep.subr.mxu0 0.0
        %3111 = vmatpush1.msra.mxu0 0.0
        %3112 = vmatprep.subr.mxu0 0.0
        %3113 = vmatpush1.msra.mxu0 0.0
        %3114 = vmatprep.subr.mxu0 0.0
        %3115 = vmatpush1.msra.mxu0 0.0
        %3116 = vmatprep.subr.mxu0 0.0
        %3117 = vmatpush1.msra.mxu0 0.0
        %3118 = vmatprep.subr.mxu0 0.0
        %3119 = vmatpush1.msra.mxu0 0.0
        %3120 = vmatprep.subr.mxu0 0.0
        %3121 = vmatpush1.msra.mxu0 0.0
        %3122 = vmatprep.subr.mxu0 0.0
        %3123 = vmatpush1.msra.mxu0 0.0
        %3124 = vmatprep.subr.mxu0 0.0
        %3125 = vmatpush1.msra.mxu0 0.0
        %3126 = vmatprep.subr.mxu0 0.0
        %3127 = vmatpush1.msra.mxu0 0.0
        %3128 = vmatprep.subr.mxu0 0.0
        %3129 = vmatpush1.msra.mxu0 0.0
        %3130 = vmatprep.mubr.f32.mxu0 0.0
        %v3131 = vand.u32 %v2910, 4294901760
        %v3132 = vsub.f32 %v2910, %v3131
        %3133 = vmatmul.mubr.f32.gmra.mrb[0].mxu0 %v3132
        %v3134 = vpop.f32.mrb[0].mxu0
        %v3135 = vadd.f32 %v3061, %v3134
        %v3136 = vpop.f32.mrb[0].mxu0
        %3137 = vdwg.mxu0
        %3138 = vmatprep.subr.mxu0 0.0
        %v3139 = vand.u32 %v1555, 4294901760
        %3140 = vmatpush1.msra.mxu0 %v3139
        %3141 = vmatprep.subr.mxu0 0.0
        %3142 = vmatpush1.msra.mxu0 0.0
        %3143 = vmatprep.subr.mxu0 0.0
        %3144 = vmatpush1.msra.mxu0 0.0
        %3145 = vmatprep.subr.mxu0 0.0
        %3146 = vmatpush1.msra.mxu0 0.0
        %3147 = vmatprep.subr.mxu0 0.0
        %3148 = vmatpush1.msra.mxu0 0.0
        %3149 = vmatprep.subr.mxu0 0.0
        %3150 = vmatpush1.msra.mxu0 0.0
        %3151 = vmatprep.subr.mxu0 0.0
        %3152 = vmatpush1.msra.mxu0 0.0
        %3153 = vmatprep.subr.mxu0 0.0
        %3154 = vmatpush1.msra.mxu0 0.0
        %3155 = vmatprep.subr.mxu0 0.0
        %3156 = vmatpush1.msra.mxu0 0.0
        %3157 = vmatprep.subr.mxu0 0.0
        %3158 = vmatpush1.msra.mxu0 0.0
        %3159 = vmatprep.subr.mxu0 0.0
        %3160 = vmatpush1.msra.mxu0 0.0
        %3161 = vmatprep.subr.mxu0 0.0
        %3162 = vmatpush1.msra.mxu0 0.0
        %3163 = vmatprep.subr.mxu0 0.0
        %3164 = vmatpush1.msra.mxu0 0.0
        %3165 = vmatprep.subr.mxu0 0.0
        %3166 = vmatpush1.msra.mxu0 0.0
        %3167 = vmatprep.subr.mxu0 0.0
        %3168 = vmatpush1.msra.mxu0 0.0
        %3169 = vmatprep.subr.mxu0 0.0
        %3170 = vmatpush1.msra.mxu0 0.0
        %3171 = vmatprep.subr.mxu0 0.0
        %3172 = vmatpush1.msra.mxu0 0.0
        %3173 = vmatprep.subr.mxu0 0.0
        %3174 = vmatpush1.msra.mxu0 0.0
        %3175 = vmatprep.subr.mxu0 0.0
        %3176 = vmatpush1.msra.mxu0 0.0
        %3177 = vmatprep.subr.mxu0 0.0
        %3178 = vmatpush1.msra.mxu0 0.0
        %3179 = vmatprep.subr.mxu0 0.0
        %3180 = vmatpush1.msra.mxu0 0.0
        %3181 = vmatprep.subr.mxu0 0.0
        %3182 = vmatpush1.msra.mxu0 0.0
        %3183 = vmatprep.subr.mxu0 0.0
        %3184 = vmatpush1.msra.mxu0 0.0
        %3185 = vmatprep.subr.mxu0 0.0
        %3186 = vmatpush1.msra.mxu0 0.0
        %3187 = vmatprep.subr.mxu0 0.0
        %3188 = vmatpush1.msra.mxu0 0.0
        %3189 = vmatprep.subr.mxu0 0.0
        %3190 = vmatpush1.msra.mxu0 0.0
        %3191 = vmatprep.subr.mxu0 0.0
        %3192 = vmatpush1.msra.mxu0 0.0
        %3193 = vmatprep.subr.mxu0 0.0
        %3194 = vmatpush1.msra.mxu0 0.0
        %3195 = vmatprep.subr.mxu0 0.0
        %3196 = vmatpush1.msra.mxu0 0.0
        %3197 = vmatprep.subr.mxu0 0.0
        %3198 = vmatpush1.msra.mxu0 0.0
        %3199 = vmatprep.subr.mxu0 0.0
        %3200 = vmatpush1.msra.mxu0 0.0
        %3201 = vmatprep.subr.mxu0 0.0
        %3202 = vmatpush1.msra.mxu0 0.0
        %3203 = vmatprep.mubr.f32.mxu0 0.0
        %v3204 = vand.u32 %v2910, 4294901760
        %v3205 = vsub.f32 %v2910, %v3204
        %v3206 = vand.u32 %v3205, 4294901760
        %3207 = vmatmul.mubr.f32.gmra.mrb[0].mxu0 %v3206
        %v3208 = vpop.f32.mrb[0].mxu0
        %v3209 = vadd.f32 %v3135, %v3208
        %v3210 = vpop.f32.mrb[0].mxu0
        %3211 = vdwg.mxu0
        %3212 = vmatprep.subr.mxu0 0.0
        %v3213 = vand.u32 %v1555, 4294901760
        %v3214 = vsub.f32 %v1555, %v3213
        %v3215 = vand.u32 %v3214, 4294901760
        %3216 = vmatpush1.msra.mxu0 %v3215
        %3217 = vmatprep.subr.mxu0 0.0
        %3218 = vmatpush1.msra.mxu0 0.0
        %3219 = vmatprep.subr.mxu0 0.0
        %3220 = vmatpush1.msra.mxu0 0.0
        %3221 = vmatprep.subr.mxu0 0.0
        %3222 = vmatpush1.msra.mxu0 0.0
        %3223 = vmatprep.subr.mxu0 0.0
        %3224 = vmatpush1.msra.mxu0 0.0
        %3225 = vmatprep.subr.mxu0 0.0
        %3226 = vmatpush1.msra.mxu0 0.0
        %3227 = vmatprep.subr.mxu0 0.0
        %3228 = vmatpush1.msra.mxu0 0.0
        %3229 = vmatprep.subr.mxu0 0.0
        %3230 = vmatpush1.msra.mxu0 0.0
        %3231 = vmatprep.subr.mxu0 0.0
        %3232 = vmatpush1.msra.mxu0 0.0
        %3233 = vmatprep.subr.mxu0 0.0
        %3234 = vmatpush1.msra.mxu0 0.0
        %3235 = vmatprep.subr.mxu0 0.0
        %3236 = vmatpush1.msra.mxu0 0.0
        %3237 = vmatprep.subr.mxu0 0.0
        %3238 = vmatpush1.msra.mxu0 0.0
        %3239 = vmatprep.subr.mxu0 0.0
        %3240 = vmatpush1.msra.mxu0 0.0
        %3241 = vmatprep.subr.mxu0 0.0
        %3242 = vmatpush1.msra.mxu0 0.0
        %3243 = vmatprep.subr.mxu0 0.0
        %3244 = vmatpush1.msra.mxu0 0.0
        %3245 = vmatprep.subr.mxu0 0.0
        %3246 = vmatpush1.msra.mxu0 0.0
        %3247 = vmatprep.subr.mxu0 0.0
        %3248 = vmatpush1.msra.mxu0 0.0
        %3249 = vmatprep.subr.mxu0 0.0
        %3250 = vmatpush1.msra.mxu0 0.0
        %3251 = vmatprep.subr.mxu0 0.0
        %3252 = vmatpush1.msra.mxu0 0.0
        %3253 = vmatprep.subr.mxu0 0.0
        %3254 = vmatpush1.msra.mxu0 0.0
        %3255 = vmatprep.subr.mxu0 0.0
        %3256 = vmatpush1.msra.mxu0 0.0
        %3257 = vmatprep.subr.mxu0 0.0
        %3258 = vmatpush1.msra.mxu0 0.0
        %3259 = vmatprep.subr.mxu0 0.0
        %3260 = vmatpush1.msra.mxu0 0.0
        %3261 = vmatprep.subr.mxu0 0.0
        %3262 = vmatpush1.msra.mxu0 0.0
        %3263 = vmatprep.subr.mxu0 0.0
        %3264 = vmatpush1.msra.mxu0 0.0
        %3265 = vmatprep.subr.mxu0 0.0
        %3266 = vmatpush1.msra.mxu0 0.0
        %3267 = vmatprep.subr.mxu0 0.0
        %3268 = vmatpush1.msra.mxu0 0.0
        %3269 = vmatprep.subr.mxu0 0.0
        %3270 = vmatpush1.msra.mxu0 0.0
        %3271 = vmatprep.subr.mxu0 0.0
        %3272 = vmatpush1.msra.mxu0 0.0
        %3273 = vmatprep.subr.mxu0 0.0
        %3274 = vmatpush1.msra.mxu0 0.0
        %3275 = vmatprep.subr.mxu0 0.0
        %3276 = vmatpush1.msra.mxu0 0.0
        %3277 = vmatprep.subr.mxu0 0.0
        %3278 = vmatpush1.msra.mxu0 0.0
        %3279 = vmatprep.mubr.f32.mxu0 0.0
        %v3280 = vand.u32 %v2910, 4294901760
        %3281 = vmatmul.mubr.f32.gmra.mrb[0].mxu0 %v3280
        %v3282 = vpop.f32.mrb[0].mxu0
        %v3283 = vadd.f32 %v3209, %v3282
        %v3284 = vpop.f32.mrb[0].mxu0
        %3285 = vdwg.mxu0
        %3286 = vmatprep.subr.mxu0 0.0
        %v3287 = vand.u32 %v1555, 4294901760
        %3288 = vmatpush1.msra.mxu0 %v3287
        %3289 = vmatprep.subr.mxu0 0.0
        %3290 = vmatpush1.msra.mxu0 0.0
        %3291 = vmatprep.subr.mxu0 0.0
        %3292 = vmatpush1.msra.mxu0 0.0
        %3293 = vmatprep.subr.mxu0 0.0
        %3294 = vmatpush1.msra.mxu0 0.0
        %3295 = vmatprep.subr.mxu0 0.0
        %3296 = vmatpush1.msra.mxu0 0.0
        %3297 = vmatprep.subr.mxu0 0.0
        %3298 = vmatpush1.msra.mxu0 0.0
        %3299 = vmatprep.subr.mxu0 0.0
        %3300 = vmatpush1.msra.mxu0 0.0
        %3301 = vmatprep.subr.mxu0 0.0
        %3302 = vmatpush1.msra.mxu0 0.0
        %3303 = vmatprep.subr.mxu0 0.0
        %3304 = vmatpush1.msra.mxu0 0.0
        %3305 = vmatprep.subr.mxu0 0.0
        %3306 = vmatpush1.msra.mxu0 0.0
        %3307 = vmatprep.subr.mxu0 0.0
        %3308 = vmatpush1.msra.mxu0 0.0
        %3309 = vmatprep.subr.mxu0 0.0
        %3310 = vmatpush1.msra.mxu0 0.0
        %3311 = vmatprep.subr.mxu0 0.0
        %3312 = vmatpush1.msra.mxu0 0.0
        %3313 = vmatprep.subr.mxu0 0.0
        %3314 = vmatpush1.msra.mxu0 0.0
        %3315 = vmatprep.subr.mxu0 0.0
        %3316 = vmatpush1.msra.mxu0 0.0
        %3317 = vmatprep.subr.mxu0 0.0
        %3318 = vmatpush1.msra.mxu0 0.0
        %3319 = vmatprep.subr.mxu0 0.0
        %3320 = vmatpush1.msra.mxu0 0.0
        %3321 = vmatprep.subr.mxu0 0.0
        %3322 = vmatpush1.msra.mxu0 0.0
        %3323 = vmatprep.subr.mxu0 0.0
        %3324 = vmatpush1.msra.mxu0 0.0
        %3325 = vmatprep.subr.mxu0 0.0
        %3326 = vmatpush1.msra.mxu0 0.0
        %3327 = vmatprep.subr.mxu0 0.0
        %3328 = vmatpush1.msra.mxu0 0.0
        %3329 = vmatprep.subr.mxu0 0.0
        %3330 = vmatpush1.msra.mxu0 0.0
        %3331 = vmatprep.subr.mxu0 0.0
        %3332 = vmatpush1.msra.mxu0 0.0
        %3333 = vmatprep.subr.mxu0 0.0
        %3334 = vmatpush1.msra.mxu0 0.0
        %3335 = vmatprep.subr.mxu0 0.0
        %3336 = vmatpush1.msra.mxu0 0.0
        %3337 = vmatprep.subr.mxu0 0.0
        %3338 = vmatpush1.msra.mxu0 0.0
        %3339 = vmatprep.subr.mxu0 0.0
        %3340 = vmatpush1.msra.mxu0 0.0
        %3341 = vmatprep.subr.mxu0 0.0
        %3342 = vmatpush1.msra.mxu0 0.0
        %3343 = vmatprep.subr.mxu0 0.0
        %3344 = vmatpush1.msra.mxu0 0.0
        %3345 = vmatprep.subr.mxu0 0.0
        %3346 = vmatpush1.msra.mxu0 0.0
        %3347 = vmatprep.subr.mxu0 0.0
        %3348 = vmatpush1.msra.mxu0 0.0
        %3349 = vmatprep.subr.mxu0 0.0
        %3350 = vmatpush1.msra.mxu0 0.0
        %3351 = vmatprep.mubr.f32.mxu0 0.0
        %v3352 = vand.u32 %v2910, 4294901760
        %3353 = vmatmul.mubr.f32.gmra.mrb[0].mxu0 %v3352
        %v3354 = vpop.f32.mrb[0].mxu0
        %v3355 = vadd.f32 %v3283, %v3354
        %v3356 = vpop.f32.mrb[0].mxu0
        %3357 = vdwg.mxu0
        %v3359 = vsel %vm928, %v2907, 0
        %3361 = vmatprep.subr.mxu0 0.0
        %v3362 = vand.u32 %v2906, 4294901760
        %3363 = vmatpush1.msra.mxu0 %v3362
        %3364 = vmatprep.subr.mxu0 0.0
        %3365 = vmatpush1.msra.mxu0 0.0
        %3366 = vmatprep.subr.mxu0 0.0
        %3367 = vmatpush1.msra.mxu0 0.0
        %3368 = vmatprep.subr.mxu0 0.0
        %3369 = vmatpush1.msra.mxu0 0.0
        %3370 = vmatprep.subr.mxu0 0.0
        %3371 = vmatpush1.msra.mxu0 0.0
        %3372 = vmatprep.subr.mxu0 0.0
        %3373 = vmatpush1.msra.mxu0 0.0
        %3374 = vmatprep.subr.mxu0 0.0
        %3375 = vmatpush1.msra.mxu0 0.0
        %3376 = vmatprep.subr.mxu0 0.0
        %3377 = vmatpush1.msra.mxu0 0.0
        %3378 = vmatprep.subr.mxu0 0.0
        %3379 = vmatpush1.msra.mxu0 0.0
        %3380 = vmatprep.subr.mxu0 0.0
        %3381 = vmatpush1.msra.mxu0 0.0
        %3382 = vmatprep.subr.mxu0 0.0
        %3383 = vmatpush1.msra.mxu0 0.0
        %3384 = vmatprep.subr.mxu0 0.0
        %3385 = vmatpush1.msra.mxu0 0.0
        %3386 = vmatprep.subr.mxu0 0.0
        %3387 = vmatpush1.msra.mxu0 0.0
        %3388 = vmatprep.subr.mxu0 0.0
        %3389 = vmatpush1.msra.mxu0 0.0
        %3390 = vmatprep.subr.mxu0 0.0
        %3391 = vmatpush1.msra.mxu0 0.0
        %3392 = vmatprep.subr.mxu0 0.0
        %3393 = vmatpush1.msra.mxu0 0.0
        %3394 = vmatprep.subr.mxu0 0.0
        %3395 = vmatpush1.msra.mxu0 0.0
        %3396 = vmatprep.subr.mxu0 0.0
        %3397 = vmatpush1.msra.mxu0 0.0
        %3398 = vmatprep.subr.mxu0 0.0
        %3399 = vmatpush1.msra.mxu0 0.0
        %3400 = vmatprep.subr.mxu0 0.0
        %3401 = vmatpush1.msra.mxu0 0.0
        %3402 = vmatprep.subr.mxu0 0.0
        %3403 = vmatpush1.msra.mxu0 0.0
        %3404 = vmatprep.subr.mxu0 0.0
        %3405 = vmatpush1.msra.mxu0 0.0
        %3406 = vmatprep.subr.mxu0 0.0
        %3407 = vmatpush1.msra.mxu0 0.0
        %3408 = vmatprep.subr.mxu0 0.0
        %3409 = vmatpush1.msra.mxu0 0.0
        %3410 = vmatprep.subr.mxu0 0.0
        %3411 = vmatpush1.msra.mxu0 0.0
        %3412 = vmatprep.subr.mxu0 0.0
        %3413 = vmatpush1.msra.mxu0 0.0
        %3414 = vmatprep.subr.mxu0 0.0
        %3415 = vmatpush1.msra.mxu0 0.0
        %3416 = vmatprep.subr.mxu0 0.0
        %3417 = vmatpush1.msra.mxu0 0.0
        %3418 = vmatprep.subr.mxu0 0.0
        %3419 = vmatpush1.msra.mxu0 0.0
        %3420 = vmatprep.subr.mxu0 0.0
        %3421 = vmatpush1.msra.mxu0 0.0
        %3422 = vmatprep.subr.mxu0 0.0
        %3423 = vmatpush1.msra.mxu0 0.0
        %3424 = vmatprep.subr.mxu0 0.0
        %3425 = vmatpush1.msra.mxu0 0.0
        %3426 = vmatprep.mubr.f32.mxu0 0.0
        %v3427 = vand.u32 %v3359, 4294901760
        %v3428 = vsub.f32 %v3359, %v3427
        %v3429 = vand.u32 %v3428, 4294901760
        %v3430 = vsub.f32 %v3428, %v3429
        %v3431 = vand.u32 %v3430, 4294901760
        %3432 = vmatmul.mubr.f32.gmra.mrb[0].mxu0 %v3431
        %v3433 = vpop.f32.mrb[0].mxu0
        %v3434 = vadd.f32 %v3355, %v3433
        %v3435 = vpop.f32.mrb[0].mxu0
        %3436 = vdwg.mxu0
        %3437 = vmatprep.subr.mxu0 0.0
        %v3438 = vand.u32 %v2906, 4294901760
        %v3439 = vsub.f32 %v2906, %v3438
        %v3440 = vand.u32 %v3439, 4294901760
        %v3441 = vsub.f32 %v3439, %v3440
        %v3442 = vand.u32 %v3441, 4294901760
        %3443 = vmatpush1.msra.mxu0 %v3442
        %3444 = vmatprep.subr.mxu0 0.0
        %3445 = vmatpush1.msra.mxu0 0.0
        %3446 = vmatprep.subr.mxu0 0.0
        %3447 = vmatpush1.msra.mxu0 0.0
        %3448 = vmatprep.subr.mxu0 0.0
        %3449 = vmatpush1.msra.mxu0 0.0
        %3450 = vmatprep.subr.mxu0 0.0
        %3451 = vmatpush1.msra.mxu0 0.0
        %3452 = vmatprep.subr.mxu0 0.0
        %3453 = vmatpush1.msra.mxu0 0.0
        %3454 = vmatprep.subr.mxu0 0.0
        %3455 = vmatpush1.msra.mxu0 0.0
        %3456 = vmatprep.subr.mxu0 0.0
        %3457 = vmatpush1.msra.mxu0 0.0
        %3458 = vmatprep.subr.mxu0 0.0
        %3459 = vmatpush1.msra.mxu0 0.0
        %3460 = vmatprep.subr.mxu0 0.0
        %3461 = vmatpush1.msra.mxu0 0.0
        %3462 = vmatprep.subr.mxu0 0.0
        %3463 = vmatpush1.msra.mxu0 0.0
        %3464 = vmatprep.subr.mxu0 0.0
        %3465 = vmatpush1.msra.mxu0 0.0
        %3466 = vmatprep.subr.mxu0 0.0
        %3467 = vmatpush1.msra.mxu0 0.0
        %3468 = vmatprep.subr.mxu0 0.0
        %3469 = vmatpush1.msra.mxu0 0.0
        %3470 = vmatprep.subr.mxu0 0.0
        %3471 = vmatpush1.msra.mxu0 0.0
        %3472 = vmatprep.subr.mxu0 0.0
        %3473 = vmatpush1.msra.mxu0 0.0
        %3474 = vmatprep.subr.mxu0 0.0
        %3475 = vmatpush1.msra.mxu0 0.0
        %3476 = vmatprep.subr.mxu0 0.0
        %3477 = vmatpush1.msra.mxu0 0.0
        %3478 = vmatprep.subr.mxu0 0.0
        %3479 = vmatpush1.msra.mxu0 0.0
        %3480 = vmatprep.subr.mxu0 0.0
        %3481 = vmatpush1.msra.mxu0 0.0
        %3482 = vmatprep.subr.mxu0 0.0
        %3483 = vmatpush1.msra.mxu0 0.0
        %3484 = vmatprep.subr.mxu0 0.0
        %3485 = vmatpush1.msra.mxu0 0.0
        %3486 = vmatprep.subr.mxu0 0.0
        %3487 = vmatpush1.msra.mxu0 0.0
        %3488 = vmatprep.subr.mxu0 0.0
        %3489 = vmatpush1.msra.mxu0 0.0
        %3490 = vmatprep.subr.mxu0 0.0
        %3491 = vmatpush1.msra.mxu0 0.0
        %3492 = vmatprep.subr.mxu0 0.0
        %3493 = vmatpush1.msra.mxu0 0.0
        %3494 = vmatprep.subr.mxu0 0.0
        %3495 = vmatpush1.msra.mxu0 0.0
        %3496 = vmatprep.subr.mxu0 0.0
        %3497 = vmatpush1.msra.mxu0 0.0
        %3498 = vmatprep.subr.mxu0 0.0
        %3499 = vmatpush1.msra.mxu0 0.0
        %3500 = vmatprep.subr.mxu0 0.0
        %3501 = vmatpush1.msra.mxu0 0.0
        %3502 = vmatprep.subr.mxu0 0.0
        %3503 = vmatpush1.msra.mxu0 0.0
        %3504 = vmatprep.subr.mxu0 0.0
        %3505 = vmatpush1.msra.mxu0 0.0
        %3506 = vmatprep.mubr.f32.mxu0 0.0
        %v3507 = vand.u32 %v3359, 4294901760
        %3508 = vmatmul.mubr.f32.gmra.mrb[0].mxu0 %v3507
        %v3509 = vpop.f32.mrb[0].mxu0
        %v3510 = vadd.f32 %v3434, %v3509
        %v3511 = vpop.f32.mrb[0].mxu0
        %3512 = vdwg.mxu0
        %3513 = vmatprep.subr.mxu0 0.0
        %v3514 = vand.u32 %v2906, 4294901760
        %v3515 = vsub.f32 %v2906, %v3514
        %3516 = vmatpush1.msra.mxu0 %v3515
        %3517 = vmatprep.subr.mxu0 0.0
        %3518 = vmatpush1.msra.mxu0 0.0
        %3519 = vmatprep.subr.mxu0 0.0
        %3520 = vmatpush1.msra.mxu0 0.0
        %3521 = vmatprep.subr.mxu0 0.0
        %3522 = vmatpush1.msra.mxu0 0.0
        %3523 = vmatprep.subr.mxu0 0.0
        %3524 = vmatpush1.msra.mxu0 0.0
        %3525 = vmatprep.subr.mxu0 0.0
        %3526 = vmatpush1.msra.mxu0 0.0
        %3527 = vmatprep.subr.mxu0 0.0
        %3528 = vmatpush1.msra.mxu0 0.0
        %3529 = vmatprep.subr.mxu0 0.0
        %3530 = vmatpush1.msra.mxu0 0.0
        %3531 = vmatprep.subr.mxu0 0.0
        %3532 = vmatpush1.msra.mxu0 0.0
        %3533 = vmatprep.subr.mxu0 0.0
        %3534 = vmatpush1.msra.mxu0 0.0
        %3535 = vmatprep.subr.mxu0 0.0
        %3536 = vmatpush1.msra.mxu0 0.0
        %3537 = vmatprep.subr.mxu0 0.0
        %3538 = vmatpush1.msra.mxu0 0.0
        %3539 = vmatprep.subr.mxu0 0.0
        %3540 = vmatpush1.msra.mxu0 0.0
        %3541 = vmatprep.subr.mxu0 0.0
        %3542 = vmatpush1.msra.mxu0 0.0
        %3543 = vmatprep.subr.mxu0 0.0
        %3544 = vmatpush1.msra.mxu0 0.0
        %3545 = vmatprep.subr.mxu0 0.0
        %3546 = vmatpush1.msra.mxu0 0.0
        %3547 = vmatprep.subr.mxu0 0.0
        %3548 = vmatpush1.msra.mxu0 0.0
        %3549 = vmatprep.subr.mxu0 0.0
        %3550 = vmatpush1.msra.mxu0 0.0
        %3551 = vmatprep.subr.mxu0 0.0
        %3552 = vmatpush1.msra.mxu0 0.0
        %3553 = vmatprep.subr.mxu0 0.0
        %3554 = vmatpush1.msra.mxu0 0.0
        %3555 = vmatprep.subr.mxu0 0.0
        %3556 = vmatpush1.msra.mxu0 0.0
        %3557 = vmatprep.subr.mxu0 0.0
        %3558 = vmatpush1.msra.mxu0 0.0
        %3559 = vmatprep.subr.mxu0 0.0
        %3560 = vmatpush1.msra.mxu0 0.0
        %3561 = vmatprep.subr.mxu0 0.0
        %3562 = vmatpush1.msra.mxu0 0.0
        %3563 = vmatprep.subr.mxu0 0.0
        %3564 = vmatpush1.msra.mxu0 0.0
        %3565 = vmatprep.subr.mxu0 0.0
        %3566 = vmatpush1.msra.mxu0 0.0
        %3567 = vmatprep.subr.mxu0 0.0
        %3568 = vmatpush1.msra.mxu0 0.0
        %3569 = vmatprep.subr.mxu0 0.0
        %3570 = vmatpush1.msra.mxu0 0.0
        %3571 = vmatprep.subr.mxu0 0.0
        %3572 = vmatpush1.msra.mxu0 0.0
        %3573 = vmatprep.subr.mxu0 0.0
        %3574 = vmatpush1.msra.mxu0 0.0
        %3575 = vmatprep.subr.mxu0 0.0
        %3576 = vmatpush1.msra.mxu0 0.0
        %3577 = vmatprep.subr.mxu0 0.0
        %3578 = vmatpush1.msra.mxu0 0.0
        %3579 = vmatprep.mubr.f32.mxu0 0.0
        %v3580 = vand.u32 %v3359, 4294901760
        %v3581 = vsub.f32 %v3359, %v3580
        %3582 = vmatmul.mubr.f32.gmra.mrb[0].mxu0 %v3581
        %v3583 = vpop.f32.mrb[0].mxu0
        %v3584 = vadd.f32 %v3510, %v3583
        %v3585 = vpop.f32.mrb[0].mxu0
        %3586 = vdwg.mxu0
        %3587 = vmatprep.subr.mxu0 0.0
        %v3588 = vand.u32 %v2906, 4294901760
        %3589 = vmatpush1.msra.mxu0 %v3588
        %3590 = vmatprep.subr.mxu0 0.0
        %3591 = vmatpush1.msra.mxu0 0.0
        %3592 = vmatprep.subr.mxu0 0.0
        %3593 = vmatpush1.msra.mxu0 0.0
        %3594 = vmatprep.subr.mxu0 0.0
        %3595 = vmatpush1.msra.mxu0 0.0
        %3596 = vmatprep.subr.mxu0 0.0
        %3597 = vmatpush1.msra.mxu0 0.0
        %3598 = vmatprep.subr.mxu0 0.0
        %3599 = vmatpush1.msra.mxu0 0.0
        %3600 = vmatprep.subr.mxu0 0.0
        %3601 = vmatpush1.msra.mxu0 0.0
        %3602 = vmatprep.subr.mxu0 0.0
        %3603 = vmatpush1.msra.mxu0 0.0
        %3604 = vmatprep.subr.mxu0 0.0
        %3605 = vmatpush1.msra.mxu0 0.0
        %3606 = vmatprep.subr.mxu0 0.0
        %3607 = vmatpush1.msra.mxu0 0.0
        %3608 = vmatprep.subr.mxu0 0.0
        %3609 = vmatpush1.msra.mxu0 0.0
        %3610 = vmatprep.subr.mxu0 0.0
        %3611 = vmatpush1.msra.mxu0 0.0
        %3612 = vmatprep.subr.mxu0 0.0
        %3613 = vmatpush1.msra.mxu0 0.0
        %3614 = vmatprep.subr.mxu0 0.0
        %3615 = vmatpush1.msra.mxu0 0.0
        %3616 = vmatprep.subr.mxu0 0.0
        %3617 = vmatpush1.msra.mxu0 0.0
        %3618 = vmatprep.subr.mxu0 0.0
        %3619 = vmatpush1.msra.mxu0 0.0
        %3620 = vmatprep.subr.mxu0 0.0
        %3621 = vmatpush1.msra.mxu0 0.0
        %3622 = vmatprep.subr.mxu0 0.0
        %3623 = vmatpush1.msra.mxu0 0.0
        %3624 = vmatprep.subr.mxu0 0.0
        %3625 = vmatpush1.msra.mxu0 0.0
        %3626 = vmatprep.subr.mxu0 0.0
        %3627 = vmatpush1.msra.mxu0 0.0
        %3628 = vmatprep.subr.mxu0 0.0
        %3629 = vmatpush1.msra.mxu0 0.0
        %3630 = vmatprep.subr.mxu0 0.0
        %3631 = vmatpush1.msra.mxu0 0.0
        %3632 = vmatprep.subr.mxu0 0.0
        %3633 = vmatpush1.msra.mxu0 0.0
        %3634 = vmatprep.subr.mxu0 0.0
        %3635 = vmatpush1.msra.mxu0 0.0
        %3636 = vmatprep.subr.mxu0 0.0
        %3637 = vmatpush1.msra.mxu0 0.0
        %3638 = vmatprep.subr.mxu0 0.0
        %3639 = vmatpush1.msra.mxu0 0.0
        %3640 = vmatprep.subr.mxu0 0.0
        %3641 = vmatpush1.msra.mxu0 0.0
        %3642 = vmatprep.subr.mxu0 0.0
        %3643 = vmatpush1.msra.mxu0 0.0
        %3644 = vmatprep.subr.mxu0 0.0
        %3645 = vmatpush1.msra.mxu0 0.0
        %3646 = vmatprep.subr.mxu0 0.0
        %3647 = vmatpush1.msra.mxu0 0.0
        %3648 = vmatprep.subr.mxu0 0.0
        %3649 = vmatpush1.msra.mxu0 0.0
        %3650 = vmatprep.subr.mxu0 0.0
        %3651 = vmatpush1.msra.mxu0 0.0
        %3652 = vmatprep.mubr.f32.mxu0 0.0
        %v3653 = vand.u32 %v3359, 4294901760
        %v3654 = vsub.f32 %v3359, %v3653
        %v3655 = vand.u32 %v3654, 4294901760
        %3656 = vmatmul.mubr.f32.gmra.mrb[0].mxu0 %v3655
        %v3657 = vpop.f32.mrb[0].mxu0
        %v3658 = vadd.f32 %v3584, %v3657
        %v3659 = vpop.f32.mrb[0].mxu0
        %3660 = vdwg.mxu0
        %3661 = vmatprep.subr.mxu0 0.0
        %v3662 = vand.u32 %v2906, 4294901760
        %v3663 = vsub.f32 %v2906, %v3662
        %v3664 = vand.u32 %v3663, 4294901760
        %3665 = vmatpush1.msra.mxu0 %v3664
        %3666 = vmatprep.subr.mxu0 0.0
        %3667 = vmatpush1.msra.mxu0 0.0
        %3668 = vmatprep.subr.mxu0 0.0
        %3669 = vmatpush1.msra.mxu0 0.0
        %3670 = vmatprep.subr.mxu0 0.0
        %3671 = vmatpush1.msra.mxu0 0.0
        %3672 = vmatprep.subr.mxu0 0.0
        %3673 = vmatpush1.msra.mxu0 0.0
        %3674 = vmatprep.subr.mxu0 0.0
        %3675 = vmatpush1.msra.mxu0 0.0
        %3676 = vmatprep.subr.mxu0 0.0
        %3677 = vmatpush1.msra.mxu0 0.0
        %3678 = vmatprep.subr.mxu0 0.0
        %3679 = vmatpush1.msra.mxu0 0.0
        %3680 = vmatprep.subr.mxu0 0.0
        %3681 = vmatpush1.msra.mxu0 0.0
        %3682 = vmatprep.subr.mxu0 0.0
        %3683 = vmatpush1.msra.mxu0 0.0
        %3684 = vmatprep.subr.mxu0 0.0
        %3685 = vmatpush1.msra.mxu0 0.0
        %3686 = vmatprep.subr.mxu0 0.0
        %3687 = vmatpush1.msra.mxu0 0.0
        %3688 = vmatprep.subr.mxu0 0.0
        %3689 = vmatpush1.msra.mxu0 0.0
        %3690 = vmatprep.subr.mxu0 0.0
        %3691 = vmatpush1.msra.mxu0 0.0
        %3692 = vmatprep.subr.mxu0 0.0
        %3693 = vmatpush1.msra.mxu0 0.0
        %3694 = vmatprep.subr.mxu0 0.0
        %3695 = vmatpush1.msra.mxu0 0.0
        %3696 = vmatprep.subr.mxu0 0.0
        %3697 = vmatpush1.msra.mxu0 0.0
        %3698 = vmatprep.subr.mxu0 0.0
        %3699 = vmatpush1.msra.mxu0 0.0
        %3700 = vmatprep.subr.mxu0 0.0
        %3701 = vmatpush1.msra.mxu0 0.0
        %3702 = vmatprep.subr.mxu0 0.0
        %3703 = vmatpush1.msra.mxu0 0.0
        %3704 = vmatprep.subr.mxu0 0.0
        %3705 = vmatpush1.msra.mxu0 0.0
        %3706 = vmatprep.subr.mxu0 0.0
        %3707 = vmatpush1.msra.mxu0 0.0
        %3708 = vmatprep.subr.mxu0 0.0
        %3709 = vmatpush1.msra.mxu0 0.0
        %3710 = vmatprep.subr.mxu0 0.0
        %3711 = vmatpush1.msra.mxu0 0.0
        %3712 = vmatprep.subr.mxu0 0.0
        %3713 = vmatpush1.msra.mxu0 0.0
        %3714 = vmatprep.subr.mxu0 0.0
        %3715 = vmatpush1.msra.mxu0 0.0
        %3716 = vmatprep.subr.mxu0 0.0
        %3717 = vmatpush1.msra.mxu0 0.0
        %3718 = vmatprep.subr.mxu0 0.0
        %3719 = vmatpush1.msra.mxu0 0.0
        %3720 = vmatprep.subr.mxu0 0.0
        %3721 = vmatpush1.msra.mxu0 0.0
        %3722 = vmatprep.subr.mxu0 0.0
        %3723 = vmatpush1.msra.mxu0 0.0
        %3724 = vmatprep.subr.mxu0 0.0
        %3725 = vmatpush1.msra.mxu0 0.0
        %3726 = vmatprep.subr.mxu0 0.0
        %3727 = vmatpush1.msra.mxu0 0.0
        %3728 = vmatprep.mubr.f32.mxu0 0.0
        %v3729 = vand.u32 %v3359, 4294901760
        %3730 = vmatmul.mubr.f32.gmra.mrb[0].mxu0 %v3729
        %v3731 = vpop.f32.mrb[0].mxu0
        %v3732 = vadd.f32 %v3658, %v3731
        %v3733 = vpop.f32.mrb[0].mxu0
        %3734 = vdwg.mxu0
        %3735 = vmatprep.subr.mxu0 0.0
        %v3736 = vand.u32 %v2906, 4294901760
        %3737 = vmatpush1.msra.mxu0 %v3736
        %3738 = vmatprep.subr.mxu0 0.0
        %3739 = vmatpush1.msra.mxu0 0.0
        %3740 = vmatprep.subr.mxu0 0.0
        %3741 = vmatpush1.msra.mxu0 0.0
        %3742 = vmatprep.subr.mxu0 0.0
        %3743 = vmatpush1.msra.mxu0 0.0
        %3744 = vmatprep.subr.mxu0 0.0
        %3745 = vmatpush1.msra.mxu0 0.0
        %3746 = vmatprep.subr.mxu0 0.0
        %3747 = vmatpush1.msra.mxu0 0.0
        %3748 = vmatprep.subr.mxu0 0.0
        %3749 = vmatpush1.msra.mxu0 0.0
        %3750 = vmatprep.subr.mxu0 0.0
        %3751 = vmatpush1.msra.mxu0 0.0
        %3752 = vmatprep.subr.mxu0 0.0
        %3753 = vmatpush1.msra.mxu0 0.0
        %3754 = vmatprep.subr.mxu0 0.0
        %3755 = vmatpush1.msra.mxu0 0.0
        %3756 = vmatprep.subr.mxu0 0.0
        %3757 = vmatpush1.msra.mxu0 0.0
        %3758 = vmatprep.subr.mxu0 0.0
        %3759 = vmatpush1.msra.mxu0 0.0
        %3760 = vmatprep.subr.mxu0 0.0
        %3761 = vmatpush1.msra.mxu0 0.0
        %3762 = vmatprep.subr.mxu0 0.0
        %3763 = vmatpush1.msra.mxu0 0.0
        %3764 = vmatprep.subr.mxu0 0.0
        %3765 = vmatpush1.msra.mxu0 0.0
        %3766 = vmatprep.subr.mxu0 0.0
        %3767 = vmatpush1.msra.mxu0 0.0
        %3768 = vmatprep.subr.mxu0 0.0
        %3769 = vmatpush1.msra.mxu0 0.0
        %3770 = vmatprep.subr.mxu0 0.0
        %3771 = vmatpush1.msra.mxu0 0.0
        %3772 = vmatprep.subr.mxu0 0.0
        %3773 = vmatpush1.msra.mxu0 0.0
        %3774 = vmatprep.subr.mxu0 0.0
        %3775 = vmatpush1.msra.mxu0 0.0
        %3776 = vmatprep.subr.mxu0 0.0
        %3777 = vmatpush1.msra.mxu0 0.0
        %3778 = vmatprep.subr.mxu0 0.0
        %3779 = vmatpush1.msra.mxu0 0.0
        %3780 = vmatprep.subr.mxu0 0.0
        %3781 = vmatpush1.msra.mxu0 0.0
        %3782 = vmatprep.subr.mxu0 0.0
        %3783 = vmatpush1.msra.mxu0 0.0
        %3784 = vmatprep.subr.mxu0 0.0
        %3785 = vmatpush1.msra.mxu0 0.0
        %3786 = vmatprep.subr.mxu0 0.0
        %3787 = vmatpush1.msra.mxu0 0.0
        %3788 = vmatprep.subr.mxu0 0.0
        %3789 = vmatpush1.msra.mxu0 0.0
        %3790 = vmatprep.subr.mxu0 0.0
        %3791 = vmatpush1.msra.mxu0 0.0
        %3792 = vmatprep.subr.mxu0 0.0
        %3793 = vmatpush1.msra.mxu0 0.0
        %3794 = vmatprep.subr.mxu0 0.0
        %3795 = vmatpush1.msra.mxu0 0.0
        %3796 = vmatprep.subr.mxu0 0.0
        %3797 = vmatpush1.msra.mxu0 0.0
        %3798 = vmatprep.subr.mxu0 0.0
        %3799 = vmatpush1.msra.mxu0 0.0
        %3800 = vmatprep.mubr.f32.mxu0 0.0
        %v3801 = vand.u32 %v3359, 4294901760
        %3802 = vmatmul.mubr.f32.gmra.mrb[0].mxu0 %v3801
        %v3803 = vpop.f32.mrb[0].mxu0
        %v3804 = vadd.f32 %v3732, %v3803
        %v3805 = vpop.f32.mrb[0].mxu0
        %3806 = vdwg.mxu0
        %v3807 = vld [vmem:[%s10] sm:$0x3f]
        %v3809 = vsel %vm428, %v3807, 0
        %3811 = vmatprep.subr.mxu0 0.0
        %v3812 = vand.u32 %v437, 4294901760
        %3813 = vmatpush1.msra.mxu0 %v3812
        %3814 = vmatprep.subr.mxu0 0.0
        %3815 = vmatpush1.msra.mxu0 0.0
        %3816 = vmatprep.subr.mxu0 0.0
        %3817 = vmatpush1.msra.mxu0 0.0
        %3818 = vmatprep.subr.mxu0 0.0
        %3819 = vmatpush1.msra.mxu0 0.0
        %3820 = vmatprep.subr.mxu0 0.0
        %3821 = vmatpush1.msra.mxu0 0.0
        %3822 = vmatprep.subr.mxu0 0.0
        %3823 = vmatpush1.msra.mxu0 0.0
        %3824 = vmatprep.subr.mxu0 0.0
        %3825 = vmatpush1.msra.mxu0 0.0
        %3826 = vmatprep.subr.mxu0 0.0
        %3827 = vmatpush1.msra.mxu0 0.0
        %3828 = vmatprep.subr.mxu0 0.0
        %3829 = vmatpush1.msra.mxu0 0.0
        %3830 = vmatprep.subr.mxu0 0.0
        %3831 = vmatpush1.msra.mxu0 0.0
        %3832 = vmatprep.subr.mxu0 0.0
        %3833 = vmatpush1.msra.mxu0 0.0
        %3834 = vmatprep.subr.mxu0 0.0
        %3835 = vmatpush1.msra.mxu0 0.0
        %3836 = vmatprep.subr.mxu0 0.0
        %3837 = vmatpush1.msra.mxu0 0.0
        %3838 = vmatprep.subr.mxu0 0.0
        %3839 = vmatpush1.msra.mxu0 0.0
        %3840 = vmatprep.subr.mxu0 0.0
        %3841 = vmatpush1.msra.mxu0 0.0
        %3842 = vmatprep.subr.mxu0 0.0
        %3843 = vmatpush1.msra.mxu0 0.0
        %3844 = vmatprep.subr.mxu0 0.0
        %3845 = vmatpush1.msra.mxu0 0.0
        %3846 = vmatprep.subr.mxu0 0.0
        %3847 = vmatpush1.msra.mxu0 0.0
        %3848 = vmatprep.subr.mxu0 0.0
        %3849 = vmatpush1.msra.mxu0 0.0
        %3850 = vmatprep.subr.mxu0 0.0
        %3851 = vmatpush1.msra.mxu0 0.0
        %3852 = vmatprep.subr.mxu0 0.0
        %3853 = vmatpush1.msra.mxu0 0.0
        %3854 = vmatprep.subr.mxu0 0.0
        %3855 = vmatpush1.msra.mxu0 0.0
        %3856 = vmatprep.subr.mxu0 0.0
        %3857 = vmatpush1.msra.mxu0 0.0
        %3858 = vmatprep.subr.mxu0 0.0
        %3859 = vmatpush1.msra.mxu0 0.0
        %3860 = vmatprep.subr.mxu0 0.0
        %3861 = vmatpush1.msra.mxu0 0.0
        %3862 = vmatprep.subr.mxu0 0.0
        %3863 = vmatpush1.msra.mxu0 0.0
        %3864 = vmatprep.subr.mxu0 0.0
        %3865 = vmatpush1.msra.mxu0 0.0
        %3866 = vmatprep.subr.mxu0 0.0
        %3867 = vmatpush1.msra.mxu0 0.0
        %3868 = vmatprep.subr.mxu0 0.0
        %3869 = vmatpush1.msra.mxu0 0.0
        %3870 = vmatprep.subr.mxu0 0.0
        %3871 = vmatpush1.msra.mxu0 0.0
        %3872 = vmatprep.subr.mxu0 0.0
        %3873 = vmatpush1.msra.mxu0 0.0
        %3874 = vmatprep.subr.mxu0 0.0
        %3875 = vmatpush1.msra.mxu0 0.0
        %3876 = vmatprep.mubr.f32.mxu0 0.0
        %v3877 = vand.u32 %v3809, 4294901760
        %v3878 = vsub.f32 %v3809, %v3877
        %v3879 = vand.u32 %v3878, 4294901760
        %v3880 = vsub.f32 %v3878, %v3879
        %v3881 = vand.u32 %v3880, 4294901760
        %3882 = vmatmul.mubr.f32.gmra.mrb[0].mxu0 %v3881
        %v3883 = vpop.f32.mrb[0].mxu0
        %v3884 = vadd.f32 0.0, %v3883
        %v3885 = vpop.f32.mrb[0].mxu0
        %3886 = vdwg.mxu0
        %3887 = vmatprep.subr.mxu0 0.0
        %v3888 = vand.u32 %v437, 4294901760
        %v3889 = vsub.f32 %v437, %v3888
        %v3890 = vand.u32 %v3889, 4294901760
        %v3891 = vsub.f32 %v3889, %v3890
        %v3892 = vand.u32 %v3891, 4294901760
        %3893 = vmatpush1.msra.mxu0 %v3892
        %3894 = vmatprep.subr.mxu0 0.0
        %3895 = vmatpush1.msra.mxu0 0.0
        %3896 = vmatprep.subr.mxu0 0.0
        %3897 = vmatpush1.msra.mxu0 0.0
        %3898 = vmatprep.subr.mxu0 0.0
        %3899 = vmatpush1.msra.mxu0 0.0
        %3900 = vmatprep.subr.mxu0 0.0
        %3901 = vmatpush1.msra.mxu0 0.0
        %3902 = vmatprep.subr.mxu0 0.0
        %3903 = vmatpush1.msra.mxu0 0.0
        %3904 = vmatprep.subr.mxu0 0.0
        %3905 = vmatpush1.msra.mxu0 0.0
        %3906 = vmatprep.subr.mxu0 0.0
        %3907 = vmatpush1.msra.mxu0 0.0
        %3908 = vmatprep.subr.mxu0 0.0
        %3909 = vmatpush1.msra.mxu0 0.0
        %3910 = vmatprep.subr.mxu0 0.0
        %3911 = vmatpush1.msra.mxu0 0.0
        %3912 = vmatprep.subr.mxu0 0.0
        %3913 = vmatpush1.msra.mxu0 0.0
        %3914 = vmatprep.subr.mxu0 0.0
        %3915 = vmatpush1.msra.mxu0 0.0
        %3916 = vmatprep.subr.mxu0 0.0
        %3917 = vmatpush1.msra.mxu0 0.0
        %3918 = vmatprep.subr.mxu0 0.0
        %3919 = vmatpush1.msra.mxu0 0.0
        %3920 = vmatprep.subr.mxu0 0.0
        %3921 = vmatpush1.msra.mxu0 0.0
        %3922 = vmatprep.subr.mxu0 0.0
        %3923 = vmatpush1.msra.mxu0 0.0
        %3924 = vmatprep.subr.mxu0 0.0
        %3925 = vmatpush1.msra.mxu0 0.0
        %3926 = vmatprep.subr.mxu0 0.0
        %3927 = vmatpush1.msra.mxu0 0.0
        %3928 = vmatprep.subr.mxu0 0.0
        %3929 = vmatpush1.msra.mxu0 0.0
        %3930 = vmatprep.subr.mxu0 0.0
        %3931 = vmatpush1.msra.mxu0 0.0
        %3932 = vmatprep.subr.mxu0 0.0
        %3933 = vmatpush1.msra.mxu0 0.0
        %3934 = vmatprep.subr.mxu0 0.0
        %3935 = vmatpush1.msra.mxu0 0.0
        %3936 = vmatprep.subr.mxu0 0.0
        %3937 = vmatpush1.msra.mxu0 0.0
        %3938 = vmatprep.subr.mxu0 0.0
        %3939 = vmatpush1.msra.mxu0 0.0
        %3940 = vmatprep.subr.mxu0 0.0
        %3941 = vmatpush1.msra.mxu0 0.0
        %3942 = vmatprep.subr.mxu0 0.0
        %3943 = vmatpush1.msra.mxu0 0.0
        %3944 = vmatprep.subr.mxu0 0.0
        %3945 = vmatpush1.msra.mxu0 0.0
        %3946 = vmatprep.subr.mxu0 0.0
        %3947 = vmatpush1.msra.mxu0 0.0
        %3948 = vmatprep.subr.mxu0 0.0
        %3949 = vmatpush1.msra.mxu0 0.0
        %3950 = vmatprep.subr.mxu0 0.0
        %3951 = vmatpush1.msra.mxu0 0.0
        %3952 = vmatprep.subr.mxu0 0.0
        %3953 = vmatpush1.msra.mxu0 0.0
        %3954 = vmatprep.subr.mxu0 0.0
        %3955 = vmatpush1.msra.mxu0 0.0
        %3956 = vmatprep.mubr.f32.mxu0 0.0
        %v3957 = vand.u32 %v3809, 4294901760
        %3958 = vmatmul.mubr.f32.gmra.mrb[0].mxu0 %v3957
        %v3959 = vpop.f32.mrb[0].mxu0
        %v3960 = vadd.f32 %v3884, %v3959
        %v3961 = vpop.f32.mrb[0].mxu0
        %3962 = vdwg.mxu0
        %3963 = vmatprep.subr.mxu0 0.0
        %v3964 = vand.u32 %v437, 4294901760
        %v3965 = vsub.f32 %v437, %v3964
        %3966 = vmatpush1.msra.mxu0 %v3965
        %3967 = vmatprep.subr.mxu0 0.0
        %3968 = vmatpush1.msra.mxu0 0.0
        %3969 = vmatprep.subr.mxu0 0.0
        %3970 = vmatpush1.msra.mxu0 0.0
        %3971 = vmatprep.subr.mxu0 0.0
        %3972 = vmatpush1.msra.mxu0 0.0
        %3973 = vmatprep.subr.mxu0 0.0
        %3974 = vmatpush1.msra.mxu0 0.0
        %3975 = vmatprep.subr.mxu0 0.0
        %3976 = vmatpush1.msra.mxu0 0.0
        %3977 = vmatprep.subr.mxu0 0.0
        %3978 = vmatpush1.msra.mxu0 0.0
        %3979 = vmatprep.subr.mxu0 0.0
        %3980 = vmatpush1.msra.mxu0 0.0
        %3981 = vmatprep.subr.mxu0 0.0
        %3982 = vmatpush1.msra.mxu0 0.0
        %3983 = vmatprep.subr.mxu0 0.0
        %3984 = vmatpush1.msra.mxu0 0.0
        %3985 = vmatprep.subr.mxu0 0.0
        %3986 = vmatpush1.msra.mxu0 0.0
        %3987 = vmatprep.subr.mxu0 0.0
        %3988 = vmatpush1.msra.mxu0 0.0
        %3989 = vmatprep.subr.mxu0 0.0
        %3990 = vmatpush1.msra.mxu0 0.0
        %3991 = vmatprep.subr.mxu0 0.0
        %3992 = vmatpush1.msra.mxu0 0.0
        %3993 = vmatprep.subr.mxu0 0.0
        %3994 = vmatpush1.msra.mxu0 0.0
        %3995 = vmatprep.subr.mxu0 0.0
        %3996 = vmatpush1.msra.mxu0 0.0
        %3997 = vmatprep.subr.mxu0 0.0
        %3998 = vmatpush1.msra.mxu0 0.0
        %3999 = vmatprep.subr.mxu0 0.0
        %4000 = vmatpush1.msra.mxu0 0.0
        %4001 = vmatprep.subr.mxu0 0.0
        %4002 = vmatpush1.msra.mxu0 0.0
        %4003 = vmatprep.subr.mxu0 0.0
        %4004 = vmatpush1.msra.mxu0 0.0
        %4005 = vmatprep.subr.mxu0 0.0
        %4006 = vmatpush1.msra.mxu0 0.0
        %4007 = vmatprep.subr.mxu0 0.0
        %4008 = vmatpush1.msra.mxu0 0.0
        %4009 = vmatprep.subr.mxu0 0.0
        %4010 = vmatpush1.msra.mxu0 0.0
        %4011 = vmatprep.subr.mxu0 0.0
        %4012 = vmatpush1.msra.mxu0 0.0
        %4013 = vmatprep.subr.mxu0 0.0
        %4014 = vmatpush1.msra.mxu0 0.0
        %4015 = vmatprep.subr.mxu0 0.0
        %4016 = vmatpush1.msra.mxu0 0.0
        %4017 = vmatprep.subr.mxu0 0.0
        %4018 = vmatpush1.msra.mxu0 0.0
        %4019 = vmatprep.subr.mxu0 0.0
        %4020 = vmatpush1.msra.mxu0 0.0
        %4021 = vmatprep.subr.mxu0 0.0
        %4022 = vmatpush1.msra.mxu0 0.0
        %4023 = vmatprep.subr.mxu0 0.0
        %4024 = vmatpush1.msra.mxu0 0.0
        %4025 = vmatprep.subr.mxu0 0.0
        %4026 = vmatpush1.msra.mxu0 0.0
        %4027 = vmatprep.subr.mxu0 0.0
        %4028 = vmatpush1.msra.mxu0 0.0
        %4029 = vmatprep.mubr.f32.mxu0 0.0
        %v4030 = vand.u32 %v3809, 4294901760
        %v4031 = vsub.f32 %v3809, %v4030
        %4032 = vmatmul.mubr.f32.gmra.mrb[0].mxu0 %v4031
        %v4033 = vpop.f32.mrb[0].mxu0
        %v4034 = vadd.f32 %v3960, %v4033
        %v4035 = vpop.f32.mrb[0].mxu0
        %4036 = vdwg.mxu0
        %4037 = vmatprep.subr.mxu0 0.0
        %v4038 = vand.u32 %v437, 4294901760
        %4039 = vmatpush1.msra.mxu0 %v4038
        %4040 = vmatprep.subr.mxu0 0.0
        %4041 = vmatpush1.msra.mxu0 0.0
        %4042 = vmatprep.subr.mxu0 0.0
        %4043 = vmatpush1.msra.mxu0 0.0
        %4044 = vmatprep.subr.mxu0 0.0
        %4045 = vmatpush1.msra.mxu0 0.0
        %4046 = vmatprep.subr.mxu0 0.0
        %4047 = vmatpush1.msra.mxu0 0.0
        %4048 = vmatprep.subr.mxu0 0.0
        %4049 = vmatpush1.msra.mxu0 0.0
        %4050 = vmatprep.subr.mxu0 0.0
        %4051 = vmatpush1.msra.mxu0 0.0
        %4052 = vmatprep.subr.mxu0 0.0
        %4053 = vmatpush1.msra.mxu0 0.0
        %4054 = vmatprep.subr.mxu0 0.0
        %4055 = vmatpush1.msra.mxu0 0.0
        %4056 = vmatprep.subr.mxu0 0.0
        %4057 = vmatpush1.msra.mxu0 0.0
        %4058 = vmatprep.subr.mxu0 0.0
        %4059 = vmatpush1.msra.mxu0 0.0
        %4060 = vmatprep.subr.mxu0 0.0
        %4061 = vmatpush1.msra.mxu0 0.0
        %4062 = vmatprep.subr.mxu0 0.0
        %4063 = vmatpush1.msra.mxu0 0.0
        %4064 = vmatprep.subr.mxu0 0.0
        %4065 = vmatpush1.msra.mxu0 0.0
        %4066 = vmatprep.subr.mxu0 0.0
        %4067 = vmatpush1.msra.mxu0 0.0
        %4068 = vmatprep.subr.mxu0 0.0
        %4069 = vmatpush1.msra.mxu0 0.0
        %4070 = vmatprep.subr.mxu0 0.0
        %4071 = vmatpush1.msra.mxu0 0.0
        %4072 = vmatprep.subr.mxu0 0.0
        %4073 = vmatpush1.msra.mxu0 0.0
        %4074 = vmatprep.subr.mxu0 0.0
        %4075 = vmatpush1.msra.mxu0 0.0
        %4076 = vmatprep.subr.mxu0 0.0
        %4077 = vmatpush1.msra.mxu0 0.0
        %4078 = vmatprep.subr.mxu0 0.0
        %4079 = vmatpush1.msra.mxu0 0.0
        %4080 = vmatprep.subr.mxu0 0.0
        %4081 = vmatpush1.msra.mxu0 0.0
        %4082 = vmatprep.subr.mxu0 0.0
        %4083 = vmatpush1.msra.mxu0 0.0
        %4084 = vmatprep.subr.mxu0 0.0
        %4085 = vmatpush1.msra.mxu0 0.0
        %4086 = vmatprep.subr.mxu0 0.0
        %4087 = vmatpush1.msra.mxu0 0.0
        %4088 = vmatprep.subr.mxu0 0.0
        %4089 = vmatpush1.msra.mxu0 0.0
        %4090 = vmatprep.subr.mxu0 0.0
        %4091 = vmatpush1.msra.mxu0 0.0
        %4092 = vmatprep.subr.mxu0 0.0
        %4093 = vmatpush1.msra.mxu0 0.0
        %4094 = vmatprep.subr.mxu0 0.0
        %4095 = vmatpush1.msra.mxu0 0.0
        %4096 = vmatprep.subr.mxu0 0.0
        %4097 = vmatpush1.msra.mxu0 0.0
        %4098 = vmatprep.subr.mxu0 0.0
        %4099 = vmatpush1.msra.mxu0 0.0
        %4100 = vmatprep.subr.mxu0 0.0
        %4101 = vmatpush1.msra.mxu0 0.0
        %4102 = vmatprep.mubr.f32.mxu0 0.0
        %v4103 = vand.u32 %v3809, 4294901760
        %v4104 = vsub.f32 %v3809, %v4103
        %v4105 = vand.u32 %v4104, 4294901760
        %4106 = vmatmul.mubr.f32.gmra.mrb[0].mxu0 %v4105
        %v4107 = vpop.f32.mrb[0].mxu0
        %v4108 = vadd.f32 %v4034, %v4107
        %v4109 = vpop.f32.mrb[0].mxu0
        %4110 = vdwg.mxu0
        %4111 = vmatprep.subr.mxu0 0.0
        %v4112 = vand.u32 %v437, 4294901760
        %v4113 = vsub.f32 %v437, %v4112
        %v4114 = vand.u32 %v4113, 4294901760
        %4115 = vmatpush1.msra.mxu0 %v4114
        %4116 = vmatprep.subr.mxu0 0.0
        %4117 = vmatpush1.msra.mxu0 0.0
        %4118 = vmatprep.subr.mxu0 0.0
        %4119 = vmatpush1.msra.mxu0 0.0
        %4120 = vmatprep.subr.mxu0 0.0
        %4121 = vmatpush1.msra.mxu0 0.0
        %4122 = vmatprep.subr.mxu0 0.0
        %4123 = vmatpush1.msra.mxu0 0.0
        %4124 = vmatprep.subr.mxu0 0.0
        %4125 = vmatpush1.msra.mxu0 0.0
        %4126 = vmatprep.subr.mxu0 0.0
        %4127 = vmatpush1.msra.mxu0 0.0
        %4128 = vmatprep.subr.mxu0 0.0
        %4129 = vmatpush1.msra.mxu0 0.0
        %4130 = vmatprep.subr.mxu0 0.0
        %4131 = vmatpush1.msra.mxu0 0.0
        %4132 = vmatprep.subr.mxu0 0.0
        %4133 = vmatpush1.msra.mxu0 0.0
        %4134 = vmatprep.subr.mxu0 0.0
        %4135 = vmatpush1.msra.mxu0 0.0
        %4136 = vmatprep.subr.mxu0 0.0
        %4137 = vmatpush1.msra.mxu0 0.0
        %4138 = vmatprep.subr.mxu0 0.0
        %4139 = vmatpush1.msra.mxu0 0.0
        %4140 = vmatprep.subr.mxu0 0.0
        %4141 = vmatpush1.msra.mxu0 0.0
        %4142 = vmatprep.subr.mxu0 0.0
        %4143 = vmatpush1.msra.mxu0 0.0
        %4144 = vmatprep.subr.mxu0 0.0
        %4145 = vmatpush1.msra.mxu0 0.0
        %4146 = vmatprep.subr.mxu0 0.0
        %4147 = vmatpush1.msra.mxu0 0.0
        %4148 = vmatprep.subr.mxu0 0.0
        %4149 = vmatpush1.msra.mxu0 0.0
        %4150 = vmatprep.subr.mxu0 0.0
        %4151 = vmatpush1.msra.mxu0 0.0
        %4152 = vmatprep.subr.mxu0 0.0
        %4153 = vmatpush1.msra.mxu0 0.0
        %4154 = vmatprep.subr.mxu0 0.0
        %4155 = vmatpush1.msra.mxu0 0.0
        %4156 = vmatprep.subr.mxu0 0.0
        %4157 = vmatpush1.msra.mxu0 0.0
        %4158 = vmatprep.subr.mxu0 0.0
        %4159 = vmatpush1.msra.mxu0 0.0
        %4160 = vmatprep.subr.mxu0 0.0
        %4161 = vmatpush1.msra.mxu0 0.0
        %4162 = vmatprep.subr.mxu0 0.0
        %4163 = vmatpush1.msra.mxu0 0.0
        %4164 = vmatprep.subr.mxu0 0.0
        %4165 = vmatpush1.msra.mxu0 0.0
        %4166 = vmatprep.subr.mxu0 0.0
        %4167 = vmatpush1.msra.mxu0 0.0
        %4168 = vmatprep.subr.mxu0 0.0
        %4169 = vmatpush1.msra.mxu0 0.0
        %4170 = vmatprep.subr.mxu0 0.0
        %4171 = vmatpush1.msra.mxu0 0.0
        %4172 = vmatprep.subr.mxu0 0.0
        %4173 = vmatpush1.msra.mxu0 0.0
        %4174 = vmatprep.subr.mxu0 0.0
        %4175 = vmatpush1.msra.mxu0 0.0
        %4176 = vmatprep.subr.mxu0 0.0
        %4177 = vmatpush1.msra.mxu0 0.0
        %4178 = vmatprep.mubr.f32.mxu0 0.0
        %v4179 = vand.u32 %v3809, 4294901760
        %4180 = vmatmul.mubr.f32.gmra.mrb[0].mxu0 %v4179
        %v4181 = vpop.f32.mrb[0].mxu0
        %v4182 = vadd.f32 %v4108, %v4181
        %v4183 = vpop.f32.mrb[0].mxu0
        %4184 = vdwg.mxu0
        %4185 = vmatprep.subr.mxu0 0.0
        %v4186 = vand.u32 %v437, 4294901760
        %4187 = vmatpush1.msra.mxu0 %v4186
        %4188 = vmatprep.subr.mxu0 0.0
        %4189 = vmatpush1.msra.mxu0 0.0
        %4190 = vmatprep.subr.mxu0 0.0
        %4191 = vmatpush1.msra.mxu0 0.0
        %4192 = vmatprep.subr.mxu0 0.0
        %4193 = vmatpush1.msra.mxu0 0.0
        %4194 = vmatprep.subr.mxu0 0.0
        %4195 = vmatpush1.msra.mxu0 0.0
        %4196 = vmatprep.subr.mxu0 0.0
        %4197 = vmatpush1.msra.mxu0 0.0
        %4198 = vmatprep.subr.mxu0 0.0
        %4199 = vmatpush1.msra.mxu0 0.0
        %4200 = vmatprep.subr.mxu0 0.0
        %4201 = vmatpush1.msra.mxu0 0.0
        %4202 = vmatprep.subr.mxu0 0.0
        %4203 = vmatpush1.msra.mxu0 0.0
        %4204 = vmatprep.subr.mxu0 0.0
        %4205 = vmatpush1.msra.mxu0 0.0
        %4206 = vmatprep.subr.mxu0 0.0
        %4207 = vmatpush1.msra.mxu0 0.0
        %4208 = vmatprep.subr.mxu0 0.0
        %4209 = vmatpush1.msra.mxu0 0.0
        %4210 = vmatprep.subr.mxu0 0.0
        %4211 = vmatpush1.msra.mxu0 0.0
        %4212 = vmatprep.subr.mxu0 0.0
        %4213 = vmatpush1.msra.mxu0 0.0
        %4214 = vmatprep.subr.mxu0 0.0
        %4215 = vmatpush1.msra.mxu0 0.0
        %4216 = vmatprep.subr.mxu0 0.0
        %4217 = vmatpush1.msra.mxu0 0.0
        %4218 = vmatprep.subr.mxu0 0.0
        %4219 = vmatpush1.msra.mxu0 0.0
        %4220 = vmatprep.subr.mxu0 0.0
        %4221 = vmatpush1.msra.mxu0 0.0
        %4222 = vmatprep.subr.mxu0 0.0
        %4223 = vmatpush1.msra.mxu0 0.0
        %4224 = vmatprep.subr.mxu0 0.0
        %4225 = vmatpush1.msra.mxu0 0.0
        %4226 = vmatprep.subr.mxu0 0.0
        %4227 = vmatpush1.msra.mxu0 0.0
        %4228 = vmatprep.subr.mxu0 0.0
        %4229 = vmatpush1.msra.mxu0 0.0
        %4230 = vmatprep.subr.mxu0 0.0
        %4231 = vmatpush1.msra.mxu0 0.0
        %4232 = vmatprep.subr.mxu0 0.0
        %4233 = vmatpush1.msra.mxu0 0.0
        %4234 = vmatprep.subr.mxu0 0.0
        %4235 = vmatpush1.msra.mxu0 0.0
        %4236 = vmatprep.subr.mxu0 0.0
        %4237 = vmatpush1.msra.mxu0 0.0
        %4238 = vmatprep.subr.mxu0 0.0
        %4239 = vmatpush1.msra.mxu0 0.0
        %4240 = vmatprep.subr.mxu0 0.0
        %4241 = vmatpush1.msra.mxu0 0.0
        %4242 = vmatprep.subr.mxu0 0.0
        %4243 = vmatpush1.msra.mxu0 0.0
        %4244 = vmatprep.subr.mxu0 0.0
        %4245 = vmatpush1.msra.mxu0 0.0
        %4246 = vmatprep.subr.mxu0 0.0
        %4247 = vmatpush1.msra.mxu0 0.0
        %4248 = vmatprep.subr.mxu0 0.0
        %4249 = vmatpush1.msra.mxu0 0.0
        %4250 = vmatprep.mubr.f32.mxu0 0.0
        %v4251 = vand.u32 %v3809, 4294901760
        %4252 = vmatmul.mubr.f32.gmra.mrb[0].mxu0 %v4251
        %v4253 = vpop.f32.mrb[0].mxu0
        %v4254 = vadd.f32 %v4182, %v4253
        %v4255 = vpop.f32.mrb[0].mxu0
        %4256 = vdwg.mxu0
        %v4257 = vadd.f32 %v3804, %v4254
        %4258 = vst [vmem:[%s408] sm:$0x3f] %v4257
        %4259 = vst [vmem:[%s415] sm:$0xff] %v2906
        %s4260 = sand.u32 %s274, 1
        %s4261 = scalar_lea.sflag [#allocation3], %s4260
        %s4262 = sand.u32 %s274, 1
        %s4263 = smul.addr %s4262, 8
        %s4264 = scalar_lea.vmem [#allocation2], %s4263
        %s4265 = sand.u32 %s300, 1
        %s4266 = scalar_lea.sflag [#allocation5], %s4265
        %s4267 = sand.u32 %s300, 1
        %s4268 = smul.addr %s4267, 8
        %s4269 = scalar_lea.vmem [#allocation4], %s4268
        // Predicated region
        $region65: #{tpu_custom_call.1} parent=63 // pred_check
          %p4270 = pneg %p284
        $region66: #{tpu_custom_call.1} parent=63 // pred_check_branch
          %4272 = sbr.rel (%p4270) target = $region68
        $region67: #{tpu_custom_call.1} parent=63 // pred_region
          %s4274 = ssub.s32 128, 128
          %4275 = vsyncadd %s4261, %s4274
          %s4276 = smul.addr %s30, 128
          %s4277 = scalar_lea.hbm %s11, %s4276
          %s4279 = sshll.u32 %s4264, 4
          %s4280 = int_to_ptr.vmem [resolvable:$true] %s4279
          %4282 = dma.vmem_to_hbm [thread:$0]  %s4280, 128, %s4277, %s4261
        $region68: #{tpu_custom_call.1} parent=63 // pred_fallthru
          _
        // Predicated region
        $region69: #{tpu_custom_call.1} parent=63 // pred_check
          %p4283 = pneg %p310
        $region70: #{tpu_custom_call.1} parent=63 // pred_check_branch
          %4285 = sbr.rel (%p4283) target = $region72
        $region71: #{tpu_custom_call.1} parent=63 // pred_region
          %s4287 = ssub.s32 128, 128
          %4288 = vsyncadd %s4266, %s4287
          %s4289 = smul.addr %s30, 128
          %s4290 = scalar_lea.hbm %s12, %s4289
          %s4292 = sshll.u32 %s4269, 4
          %s4293 = int_to_ptr.vmem [resolvable:$true] %s4292
          %4295 = dma.vmem_to_hbm [thread:$0]  %s4293, 128, %s4290, %s4266
        $region72: #{tpu_custom_call.1} parent=63 // pred_fallthru
          _
      $region64: #{tpu_custom_call.1} parent=5 // pred_fallthru
        _
      %p4296 = scmp.le.s32.totalorder 2, %s25
      // Predicated region
      $region73: #{tpu_custom_call.1} parent=5 // pred_check
        %p4297 = pneg %p4296
      $region74: #{tpu_custom_call.1} parent=5 // pred_check_branch
        %4299 = sbr.rel (%p4297) target = $region76
      $region75: #{tpu_custom_call.1} parent=5 // pred_region
        %s4300 = ssub.s32 %s25, 2
        // Predicated region
        $region77: #{tpu_custom_call.1} parent=75 // pred_check
          %p4301 = pneg %p290
        $region78: #{tpu_custom_call.1} parent=75 // pred_check_branch
          %4303 = sbr.rel (%p4301) target = $region80
        $region79: #{tpu_custom_call.1} parent=75 // pred_region
          %s4304 = sand.u32 %s275, 1
          %s4305 = scalar_lea.sflag [#allocation3], %s4304
          %s4306 = sand.u32 %s275, 1
          %s4307 = smul.addr %s4306, 8
          %s4308 = scalar_lea.vmem [#allocation2], %s4307
          %4309 = dma.done %s4305, 128
        $region80: #{tpu_custom_call.1} parent=75 // pred_fallthru
          _
        // Predicated region
        $region81: #{tpu_custom_call.1} parent=75 // pred_check
          %p4310 = pneg %p316
        $region82: #{tpu_custom_call.1} parent=75 // pred_check_branch
          %4312 = sbr.rel (%p4310) target = $region84
        $region83: #{tpu_custom_call.1} parent=75 // pred_region
          %s4313 = sand.u32 %s301, 1
          %s4314 = scalar_lea.sflag [#allocation5], %s4313
          %s4315 = sand.u32 %s301, 1
          %s4316 = smul.addr %s4315, 8
          %s4317 = scalar_lea.vmem [#allocation4], %s4316
          %4318 = dma.done %s4314, 128
        $region84: #{tpu_custom_call.1} parent=75 // pred_fallthru
          _
      $region76: #{tpu_custom_call.1} parent=5 // pred_fallthru
        _
    $region6: #{tpu_custom_call.1} parent=1 // loop_footer
      %s29 = sadd.s32 1, %s25
    $region7: #{tpu_custom_call.1} parent=1 // loop_footer_branch
      %24 = sbr.rel target = $region3
    $region8: #{tpu_custom_call.1} parent=1 // loop_exit
      _
    %4319 = vsyncpa [#allocation3], 1
    %s4320 = scalar_lea.sflag [#allocation3], 1
    %4321 = vsyncpa %s4320, 1
    %4322 = vsyncpa [#allocation5], 1
    %s4323 = scalar_lea.sflag [#allocation5], 1
    %4324 = vsyncpa %s4323, 1

</llo_original>
